<compile_context>
chip_gen: v5e
topology: v5e:2x2
jax: 0.10.0
libtpu: 0.0.40
codegen_flags: <defaults>
</compile_context>

<pallas_src>
import math
from functools import partial

import numpy as np
import jax
import jax.numpy as jnp
from jax.experimental import pallas as pl
from jax.experimental.pallas import tpu as pltpu


# ----------------------------------------------------------------------------
# Kaiser-sinc anti-aliasing filter (same math as the PyTorch reference)
# ----------------------------------------------------------------------------
def kaiser_sinc_filter1d(cutoff, half_width, kernel_size):
    even = kernel_size % 2 == 0
    half_size = kernel_size // 2
    delta_f = 4 * half_width
    A = 2.285 * (half_size - 1) * math.pi * delta_f + 7.95
    if A > 50.0:
        beta = 0.1102 * (A - 8.7)
    elif A >= 21.0:
        beta = 0.5842 * (A - 21.0) ** 0.4 + 0.07886 * (A - 21.0)
    else:
        beta = 0.0
    window = np.kaiser(kernel_size, beta)        # == torch.kaiser_window(periodic=False)
    if even:
        time = np.arange(-half_size, half_size) + 0.5
    else:
        time = np.arange(kernel_size) - half_size
    if cutoff == 0:
        f = np.zeros_like(time, dtype=np.float64)
    else:
        f = 2 * cutoff * window * np.sinc(2 * cutoff * time)
        f = f / f.sum()
    return f


_RATIO = 2     # up_ratio == down_ratio == 2   (Activation1d defaults)
_K = 12        # up_kernel_size == down_kernel_size == 12
assert _K % 2 == 0 and _K % _RATIO == 0
_FILT = kaiser_sinc_filter1d(0.5 / _RATIO, 0.6 / _RATIO, _K)   # shared by up & down

# Polyphase decomposition (validated against the literal torch ops):
#   up[2j]   = sum_m HE[m] * x[j - m]          HE[m] = 2*FILT[2m+1]
#   up[2j+1] = sum_m HO[m] * x[j + 1 - m]      HO[m] = 2*FILT[2m]
#   y[t] = sum_m GO[m]*act_even[t+m-5] + sum_m GE[m]*act_odd[t+m-6]
#          GO[m] = FILT[2m+1],  GE[m] = FILT[2m]
# where x is zero-extended and act_even/odd are the activated phase streams.
_HE = tuple(float(2.0 * _FILT[2 * m + 1]) for m in range(_K // 2))
_HO = tuple(float(2.0 * _FILT[2 * m]) for m in range(_K // 2))
_GO = tuple(float(_FILT[2 * m + 1]) for m in range(_K // 2))
_GE = tuple(float(_FILT[2 * m]) for m in range(_K // 2))

# A tile producing outputs [t0, t0+tt) only needs x[t0-10 .. t0+tt-1]:
# a 10-sample LEFT halo (fetched as the last lanes of one 128-wide block)
# and no right halo at all.


# ----------------------------------------------------------------------------
# Fused kernel: polyphase 2x upsample -> Snake/SnakeBeta -> stride-2 downsample
# ----------------------------------------------------------------------------
def _act1d_fused_kernel(xa_ref, xh_ref, a_ref, b_ref, o_ref, xw_ref, *, tt):
    # xa_ref : (1, Cb, tt)   x samples [i*tt, (i+1)*tt)   (last tile may be ragged)
    # xh_ref : (1, Cb, 128)  the 128 x samples ending at i*tt (clamped to block 0 on tile 0)
    # a_ref  : (Cb, 1)       Snake alpha (already exp()ed if logscale)
    # b_ref  : (Cb, 1)       Snake beta
    # o_ref  : (1, Cb, tt)   output tile (same sample rate as x)
    # xw_ref : (Cb, tt+128)  VMEM scratch window: xw[:, p] == x[i*tt - 128 + p]
    i = pl.program_id(2)
    cb = o_ref.shape[1]
    ns = tt + 5        # even stream: act_even[t0-5+q], odd stream: act_odd[t0-6+q]

    # ---- assemble the haloed window (x[t < 0] must read as zero) -----------
    @pl.when(i == 0)
    def _():
        xw_ref[:, :128] = jnp.zeros((cb, 128), jnp.float32)

    @pl.when(i > 0)
    def _():
        xw_ref[:, :128] = xh_ref[0]

    xw_ref[:, 128:] = xa_ref[0]

    alpha = a_ref[...]                           # (Cb, 1) broadcast over lanes
    inv_beta = 1.0 / (b_ref[...] + 1e-9)

    def snake(u):
        s = jnp.sin(u * alpha)
        return u + inv_beta * (s * s)

    # ---- polyphase 2x upsample: both phases share the same 6 input slices --
    ph_e = jnp.zeros((cb, ns), jnp.float32)
    ph_o = jnp.zeros((cb, ns), jnp.float32)
    for m in range(_K // 2):
        xs = xw_ref[:, 123 - m:123 - m + ns]     # x[t0 - 5 + q - m]
        ph_e = ph_e + _HE[m] * xs
        ph_o = ph_o + _HO[m] * xs

    # ---- Snake + stride-2 low-pass, ONE phase at a time (bounds live VMEM) --
    act = snake(ph_e)                            # act_even[t0 - 5 + q]
    acc = jnp.zeros((cb, tt), jnp.float32)
    for m in range(_K // 2):
        acc = acc + _GO[m] * act[:, m:m + tt]

    act = snake(ph_o)                            # act_odd[t0 - 6 + q]
    for m in range(_K // 2):
        acc = acc + _GE[m] * act[:, m:m + tt]

    o_ref[0] = acc

    # ---- tile-0 fix-up (replaces the old per-tile iota/where mask) ----------
    # The reference zero-pads the ACTIVATED signal on the left, so act_odd[-1]
    # must be exactly 0; computing from zero-extended x instead yields
    # Snake(HO[0]*x[0]).  That single wrong sample feeds y[0..5] with
    # coefficients GE[5-t]; subtract its contribution (first length tile only).
    @pl.when(i == 0)
    def _():
        v = snake(_HO[0] * xw_ref[:, 128:129])   # (Cb, 1) == Snake(HO[0]*x[0])
        for t in range(6):
            o_ref[0, :, t:t + 1] = o_ref[0, :, t:t + 1] - _GE[5 - t] * v


# ----------------------------------------------------------------------------
# Tile sizing (generation-aware VMEM budget)
# ----------------------------------------------------------------------------
def _vmem_limit_bytes():
    """~55% of physical per-core VMEM, capped at 64 MiB (v5e/v6e: 64 MiB, v7x: ~35 MiB)."""
    cap = 64 * 1024 * 1024
    try:
        cap = int(pltpu.get_tpu_info().vmem_capacity_bytes)
    except Exception:
        pass
    return int(max(32 * 1024 * 1024, min(int(cap * 0.55), 64 * 1024 * 1024)))


def _choose_tile_len(cb, T, budget):
    """Largest 128-multiple length tile whose per-step footprint fits the budget."""
    # ~10 live f32 (cb,) columns per length unit: 2x2 double-buffered in/out
    # blocks, the scratch window, and ~3-4 full-width temporaries.
    per_col = max(cb, 8) * 4 * 10
    cap = (budget // per_col) // 128 * 128
    cap = int(max(128, min(cap, 8192)))
    need = max(128, (T // 128) * 128)            # keep every block start in-bounds
    return min(cap, need)


# ----------------------------------------------------------------------------
# Wrapper (single jit; no full-tensor pad/slice of x or y)
# ----------------------------------------------------------------------------
@partial(jax.jit, static_argnames=("alpha_logscale",))
def activation1d(x, alpha, beta, alpha_logscale=False):
    """BigVGAN Activation1d: 2x AA upsample -> Snake/SnakeBeta -> 2x AA downsample."""
    B, C, T = x.shape
    x = x.astype(jnp.float32)
    if alpha_logscale:
        alpha = jnp.exp(alpha)
        beta = jnp.exp(beta)
    a_col = alpha.reshape(C, 1).astype(jnp.float32)
    b_col = beta.reshape(C, 1).astype(jnp.float32)

    # Tiny-length fallback only: pad to a single full 128-lane block.
    Tp = T
    if T < 128:
        Tp = 128
        x = jnp.pad(x, ((0, 0), (0, 0), (0, Tp - T)))

    # Channel blocking for large-C layers (keeps tt big inside v7x's 64 MiB
    # VMEM and feeds both TensorCores / megacore when B*nt is small).
    cb = 128 if (C >= 256 and C % 128 == 0) else C
    nc = C // cb

    vmem_limit = _vmem_limit_bytes()
    tt = _choose_tile_len(cb, Tp, vmem_limit)
    nt = pl.cdiv(Tp, tt)
    halo_blocks_per_tile = tt // 128

    kern = partial(_act1d_fused_kernel, tt=tt)
    y = pl.pallas_call(
        kern,
        out_shape=jax.ShapeDtypeStruct((B, C, Tp), jnp.float32),
        grid=(B, nc, nt),
        in_specs=[
            # main tile of x
            pl.BlockSpec((1, cb, tt), lambda b, c, i: (b, c, i)),
            # left-halo 128-block (clamped to block 0 on the first tile; the
            # kernel zeroes that region instead of using it)
            pl.BlockSpec((1, cb, 128),
                         lambda b, c, i: (b, c,
                                          jnp.maximum(i * halo_blocks_per_tile - 1, 0))),
            pl.BlockSpec((cb, 1), lambda b, c, i: (c, 0)),
            pl.BlockSpec((cb, 1), lambda b, c, i: (c, 0)),
        ],
        out_specs=pl.BlockSpec((1, cb, tt), lambda b, c, i: (b, c, i)),
        scratch_shapes=[pltpu.VMEM((cb, tt + 128), jnp.float32)],
        compiler_params=pltpu.CompilerParams(
            dimension_semantics=("parallel", "parallel", "parallel"),
            vmem_limit_bytes=vmem_limit,
        ),
    )(x, x, a_col, b_col)

    return y if Tp == T else y[:, :, :T]


# ----------------------------------------------------------------------------
# Pure-JAX reference (mirrors the torch ops literally) for verification
# ----------------------------------------------------------------------------
def activation1d_reference(x, alpha, beta, alpha_logscale=False):
    B, C, T = x.shape
    if alpha_logscale:
        alpha = jnp.exp(alpha)
        beta = jnp.exp(beta)
    a = alpha.reshape(1, C, 1).astype(jnp.float32)
    b = beta.reshape(1, C, 1).astype(jnp.float32)
    x = x.astype(jnp.float32)

    # UpSample1d (causal): pad, depthwise conv_transpose(stride=2), *ratio, slice
    pad = _K // _RATIO - 1
    pad_left = pad * _RATIO + (_K - _RATIO) // 2
    xp = jnp.pad(x, ((0, 0), (0, 0), (pad, pad)))
    Ld = (xp.shape[-1] - 1) * _RATIO + 1
    dil = jnp.zeros((B, C, Ld), jnp.float32).at[:, :, ::_RATIO].set(xp)
    dil = jnp.pad(dil, ((0, 0), (0, 0), (_K - 1, _K - 1)))
    Lup = _RATIO * T
    start = pad_left - 2 * _RATIO
    up = jnp.zeros((B, C, Lup), jnp.float32)
    for k in range(_K):                                   # correlate with flipped filter
        up = up + float(_FILT[_K - 1 - k]) * dil[:, :, start + k:start + k + Lup]
    up = _RATIO * up

    act = up + (1.0 / (b + 1e-9)) * jnp.sin(up * a) ** 2  # Snake / SnakeBeta

    # DownSample1d / LowPassFilter1d (causal): left zero pad, depthwise conv stride 2
    total = (_K // 2 - 1) + _K // 2
    ap = jnp.pad(act, ((0, 0), (0, 0), (total, 0)))
    Lout = (ap.shape[-1] - _K) // _RATIO + 1
    y = jnp.zeros((B, C, Lout), jnp.float32)
    for k in range(_K):
        y = y + float(_FILT[k]) * ap[:, :, k:k + _RATIO * (Lout - 1) + 1:_RATIO]
    return y


# ----------------------------------------------------------------------------
# main
# ----------------------------------------------------------------------------
if __name__ == "__main__":
    key = jax.random.PRNGKey(0)
    kx, ka, kb = jax.random.split(key, 3)

    # Small but representative: multi-tile (tt=256 -> 2 length tiles), ragged
    # last tile (300 % 256 != 0), tile-0 left-edge fix-up, and a real left halo.
    B, C, T = 2, 16, 300
    x = jax.random.normal(kx, (B, C, T), dtype=jnp.float32)
    alpha = 0.5 + jax.random.uniform(ka, (C,), dtype=jnp.float32)   # SnakeBeta params
    beta = 0.5 + jax.random.uniform(kb, (C,), dtype=jnp.float32)

    y = activation1d(x, alpha, beta, alpha_logscale=False)
    y = jax.block_until_ready(y)

    assert y.shape == (B, C, T), y.shape
    assert bool(jnp.all(jnp.isfinite(y)))

    y_ref = activation1d_reference(x, alpha, beta, alpha_logscale=False)
    err = float(jnp.max(jnp.abs(y - y_ref)))
    assert err < 1e-4, f"max abs err vs reference = {err}"

    print("KERNEL_OK")
</pallas_src>

<mosaic_0001>
module attributes {stable_mosaic.version = 11 : i64} {
  func.func @_act1d_fused_kernel(%arg0: i32, %arg1: i32, %arg2: i32, %arg3: memref<1x16x256xf32, #tpu.memory_space<vmem>>, %arg4: memref<1x16x128xf32, #tpu.memory_space<vmem>>, %arg5: memref<16x1xf32, #tpu.memory_space<vmem>>, %arg6: memref<16x1xf32, #tpu.memory_space<vmem>>, %arg7: memref<1x16x256xf32, #tpu.memory_space<vmem>>, %arg8: memref<16x384xf32, #tpu.memory_space<vmem>>) attributes {dimension_semantics = [#tpu.dimension_semantics<parallel>, #tpu.dimension_semantics<parallel>, #tpu.dimension_semantics<parallel>], iteration_bounds = array<i64: 2, 1, 2>, scalar_prefetch = 0 : i64, scratch_operands = 1 : i64, tpu.core_type = #tpu.core_type<tc>, window_params = [{transform_indices = @transform_0, window_bounds = array<i64: 1, 16, 256>}, {transform_indices = @transform_1, window_bounds = array<i64: 1, 16, 128>}, {transform_indices = @transform_2, window_bounds = array<i64: 16, 1>}, {transform_indices = @transform_3, window_bounds = array<i64: 16, 1>}, {transform_indices = @transform_4, window_bounds = array<i64: 1, 16, 256>}]} {
    %c0_i32 = arith.constant 0 : i32
    %0 = arith.cmpi eq, %arg2, %c0_i32 : i32
    %1 = arith.extui %0 : i1 to i32
    %c0_i32_0 = arith.constant 0 : i32
    %2 = arith.cmpi ne, %1, %c0_i32_0 : i32
    scf.if %2 {
      %cst_49 = arith.constant 0.000000e+00 : f32
      %128 = vector.broadcast %cst_49 : f32 to vector<16x128xf32>
      %c0_50 = arith.constant 0 : index
      %c0_51 = arith.constant 0 : index
      %129 = vector.load %arg8[%c0_50, %c0_51] : memref<16x384xf32, #tpu.memory_space<vmem>>, vector<16x128xf32>
      tpu.vector_store %arg8[%c0_50, %c0_51], %128 {strides = array<i32>} : memref<16x384xf32, #tpu.memory_space<vmem>>, vector<16x128xf32>,
    } else {
    }
    %c0_i32_1 = arith.constant 0 : i32
    %3 = arith.cmpi sgt, %arg2, %c0_i32_1 : i32
    %4 = arith.extui %3 : i1 to i32
    %c0_i32_2 = arith.constant 0 : i32
    %5 = arith.cmpi ne, %4, %c0_i32_2 : i32
    scf.if %5 {
      %c0_49 = arith.constant 0 : index
      %c0_50 = arith.constant 0 : index
      %c0_51 = arith.constant 0 : index
      %128 = vector.load %arg4[%c0_49, %c0_50, %c0_51] : memref<1x16x128xf32, #tpu.memory_space<vmem>>, vector<1x16x128xf32>
      %129 = vector.shape_cast %128 : vector<1x16x128xf32> to vector<16x128xf32>
      %c0_52 = arith.constant 0 : index
      %c0_53 = arith.constant 0 : index
      %130 = vector.load %arg8[%c0_52, %c0_53] : memref<16x384xf32, #tpu.memory_space<vmem>>, vector<16x128xf32>
      tpu.vector_store %arg8[%c0_52, %c0_53], %129 {strides = array<i32>} : memref<16x384xf32, #tpu.memory_space<vmem>>, vector<16x128xf32>,
    } else {
    }
    %c0 = arith.constant 0 : index
    %c0_3 = arith.constant 0 : index
    %c0_4 = arith.constant 0 : index
    %6 = vector.load %arg3[%c0, %c0_3, %c0_4] : memref<1x16x256xf32, #tpu.memory_space<vmem>>, vector<1x16x256xf32>
    %7 = vector.shape_cast %6 : vector<1x16x256xf32> to vector<16x256xf32>
    %c0_5 = arith.constant 0 : index
    %c128 = arith.constant 128 : index
    %8 = vector.load %arg8[%c0_5, %c128] : memref<16x384xf32, #tpu.memory_space<vmem>>, vector<16x256xf32>
    tpu.vector_store %arg8[%c0_5, %c128], %7 {strides = array<i32>} : memref<16x384xf32, #tpu.memory_space<vmem>>, vector<16x256xf32>,
    %c0_6 = arith.constant 0 : index
    %c0_7 = arith.constant 0 : index
    %9 = vector.load %arg5[%c0_6, %c0_7] : memref<16x1xf32, #tpu.memory_space<vmem>>, vector<16x1xf32>
    %c0_8 = arith.constant 0 : index
    %c0_9 = arith.constant 0 : index
    %10 = vector.load %arg6[%c0_8, %c0_9] : memref<16x1xf32, #tpu.memory_space<vmem>>, vector<16x1xf32>
    %cst = arith.constant 9.99999971E-10 : f32
    %11 = vector.broadcast %cst : f32 to vector<16x1xf32>
    %12 = arith.addf %10, %11 : vector<16x1xf32>
    %cst_10 = arith.constant 1.000000e+00 : f32
    %13 = vector.broadcast %cst_10 : f32 to vector<16x1xf32>
    %14 = arith.divf %13, %12 : vector<16x1xf32>
    %cst_11 = arith.constant 0.000000e+00 : f32
    %15 = vector.broadcast %cst_11 : f32 to vector<16x261xf32>
    %cst_12 = arith.constant 0.000000e+00 : f32
    %16 = vector.broadcast %cst_12 : f32 to vector<16x261xf32>
    %c0_13 = arith.constant 0 : index
    %c123 = arith.constant 123 : index
    %17 = vector.load %arg8[%c0_13, %c123] : memref<16x384xf32, #tpu.memory_space<vmem>>, vector<16x261xf32>
    %cst_14 = arith.constant 0.0187789276 : f32
    %18 = vector.broadcast %cst_14 : f32 to vector<16x261xf32>
    %19 = arith.mulf %18, %17 : vector<16x261xf32>
    %20 = arith.addf %15, %19 : vector<16x261xf32>
    %cst_15 = arith.constant 0.00405793311 : f32
    %21 = vector.broadcast %cst_15 : f32 to vector<16x261xf32>
    %22 = arith.mulf %21, %17 : vector<16x261xf32>
    %23 = arith.addf %16, %22 : vector<16x261xf32>
    %c0_16 = arith.constant 0 : index
    %c122 = arith.constant 122 : index
    %24 = vector.load %arg8[%c0_16, %c122] : memref<16x384xf32, #tpu.memory_space<vmem>>, vector<16x261xf32>
    %cst_17 = arith.constant -0.115314752 : f32
    %25 = vector.broadcast %cst_17 : f32 to vector<16x261xf32>
    %26 = arith.mulf %25, %24 : vector<16x261xf32>
    %27 = arith.addf %20, %26 : vector<16x261xf32>
    %cst_18 = arith.constant -0.0510869287 : f32
    %28 = vector.broadcast %cst_18 : f32 to vector<16x261xf32>
    %29 = arith.mulf %28, %24 : vector<16x261xf32>
    %30 = arith.addf %23, %29 : vector<16x261xf32>
    %c0_19 = arith.constant 0 : index
    %c121 = arith.constant 121 : index
    %31 = vector.load %arg8[%c0_19, %c121] : memref<16x384xf32, #tpu.memory_space<vmem>>, vector<16x261xf32>
    %cst_20 = arith.constant 0.886419594 : f32
    %32 = vector.broadcast %cst_20 : f32 to vector<16x261xf32>
    %33 = arith.mulf %32, %31 : vector<16x261xf32>
    %34 = arith.addf %27, %33 : vector<16x261xf32>
    %cst_21 = arith.constant 0.257145226 : f32
    %35 = vector.broadcast %cst_21 : f32 to vector<16x261xf32>
    %36 = arith.mulf %35, %31 : vector<16x261xf32>
    %37 = arith.addf %30, %36 : vector<16x261xf32>
    %c0_22 = arith.constant 0 : index
    %c120 = arith.constant 120 : index
    %38 = vector.load %arg8[%c0_22, %c120] : memref<16x384xf32, #tpu.memory_space<vmem>>, vector<16x261xf32>
    %cst_23 = arith.constant 0.257145226 : f32
    %39 = vector.broadcast %cst_23 : f32 to vector<16x261xf32>
    %40 = arith.mulf %39, %38 : vector<16x261xf32>
    %41 = arith.addf %34, %40 : vector<16x261xf32>
    %cst_24 = arith.constant 0.886419594 : f32
    %42 = vector.broadcast %cst_24 : f32 to vector<16x261xf32>
    %43 = arith.mulf %42, %38 : vector<16x261xf32>
    %44 = arith.addf %37, %43 : vector<16x261xf32>
    %c0_25 = arith.constant 0 : index
    %c119 = arith.constant 119 : index
    %45 = vector.load %arg8[%c0_25, %c119] : memref<16x384xf32, #tpu.memory_space<vmem>>, vector<16x261xf32>
    %cst_26 = arith.constant -0.0510869287 : f32
    %46 = vector.broadcast %cst_26 : f32 to vector<16x261xf32>
    %47 = arith.mulf %46, %45 : vector<16x261xf32>
    %48 = arith.addf %41, %47 : vector<16x261xf32>
    %cst_27 = arith.constant -0.115314752 : f32
    %49 = vector.broadcast %cst_27 : f32 to vector<16x261xf32>
    %50 = arith.mulf %49, %45 : vector<16x261xf32>
    %51 = arith.addf %44, %50 : vector<16x261xf32>
    %c0_28 = arith.constant 0 : index
    %c118 = arith.constant 118 : index
    %52 = vector.load %arg8[%c0_28, %c118] : memref<16x384xf32, #tpu.memory_space<vmem>>, vector<16x261xf32>
    %cst_29 = arith.constant 0.00405793311 : f32
    %53 = vector.broadcast %cst_29 : f32 to vector<16x261xf32>
    %54 = arith.mulf %53, %52 : vector<16x261xf32>
    %55 = arith.addf %48, %54 : vector<16x261xf32>
    %cst_30 = arith.constant 0.0187789276 : f32
    %56 = vector.broadcast %cst_30 : f32 to vector<16x261xf32>
    %57 = arith.mulf %56, %52 : vector<16x261xf32>
    %58 = arith.addf %51, %57 : vector<16x261xf32>
    %59 = vector.broadcast %9 : vector<16x1xf32> to vector<16x261xf32>
    %60 = arith.mulf %55, %59 : vector<16x261xf32>
    %61 = math.sin %60 : vector<16x261xf32>
    %62 = arith.mulf %61, %61 : vector<16x261xf32>
    %63 = vector.broadcast %14 : vector<16x1xf32> to vector<16x261xf32>
    %64 = arith.mulf %63, %62 : vector<16x261xf32>
    %65 = arith.addf %55, %64 : vector<16x261xf32>
    %cst_31 = arith.constant 0.000000e+00 : f32
    %66 = vector.broadcast %cst_31 : f32 to vector<16x256xf32>
    %67 = vector.extract_strided_slice %65 {offsets = [0, 0], sizes = [16, 256], strides = [1, 1]} : vector<16x261xf32> to vector<16x256xf32>
    %cst_32 = arith.constant 0.00938946381 : f32
    %68 = vector.broadcast %cst_32 : f32 to vector<16x256xf32>
    %69 = arith.mulf %68, %67 : vector<16x256xf32>
    %70 = arith.addf %66, %69 : vector<16x256xf32>
    %71 = vector.extract_strided_slice %65 {offsets = [0, 1], sizes = [16, 256], strides = [1, 1]} : vector<16x261xf32> to vector<16x256xf32>
    %cst_33 = arith.constant -0.0576573759 : f32
    %72 = vector.broadcast %cst_33 : f32 to vector<16x256xf32>
    %73 = arith.mulf %72, %71 : vector<16x256xf32>
    %74 = arith.addf %70, %73 : vector<16x256xf32>
    %75 = vector.extract_strided_slice %65 {offsets = [0, 2], sizes = [16, 256], strides = [1, 1]} : vector<16x261xf32> to vector<16x256xf32>
    %cst_34 = arith.constant 0.443209797 : f32
    %76 = vector.broadcast %cst_34 : f32 to vector<16x256xf32>
    %77 = arith.mulf %76, %75 : vector<16x256xf32>
    %78 = arith.addf %74, %77 : vector<16x256xf32>
    %79 = vector.extract_strided_slice %65 {offsets = [0, 3], sizes = [16, 256], strides = [1, 1]} : vector<16x261xf32> to vector<16x256xf32>
    %cst_35 = arith.constant 0.128572613 : f32
    %80 = vector.broadcast %cst_35 : f32 to vector<16x256xf32>
    %81 = arith.mulf %80, %79 : vector<16x256xf32>
    %82 = arith.addf %78, %81 : vector<16x256xf32>
    %83 = vector.extract_strided_slice %65 {offsets = [0, 4], sizes = [16, 256], strides = [1, 1]} : vector<16x261xf32> to vector<16x256xf32>
    %cst_36 = arith.constant -0.0255434643 : f32
    %84 = vector.broadcast %cst_36 : f32 to vector<16x256xf32>
    %85 = arith.mulf %84, %83 : vector<16x256xf32>
    %86 = arith.addf %82, %85 : vector<16x256xf32>
    %87 = vector.extract_strided_slice %65 {offsets = [0, 5], sizes = [16, 256], strides = [1, 1]} : vector<16x261xf32> to vector<16x256xf32>
    %cst_37 = arith.constant 0.00202896656 : f32
    %88 = vector.broadcast %cst_37 : f32 to vector<16x256xf32>
    %89 = arith.mulf %88, %87 : vector<16x256xf32>
    %90 = arith.addf %86, %89 : vector<16x256xf32>
    %91 = vector.broadcast %9 : vector<16x1xf32> to vector<16x261xf32>
    %92 = arith.mulf %58, %91 : vector<16x261xf32>
    %93 = math.sin %92 : vector<16x261xf32>
    %94 = arith.mulf %93, %93 : vector<16x261xf32>
    %95 = vector.broadcast %14 : vector<16x1xf32> to vector<16x261xf32>
    %96 = arith.mulf %95, %94 : vector<16x261xf32>
    %97 = arith.addf %58, %96 : vector<16x261xf32>
    %98 = vector.extract_strided_slice %97 {offsets = [0, 0], sizes = [16, 256], strides = [1, 1]} : vector<16x261xf32> to vector<16x256xf32>
    %cst_38 = arith.constant 0.00202896656 : f32
    %99 = vector.broadcast %cst_38 : f32 to vector<16x256xf32>
    %100 = arith.mulf %99, %98 : vector<16x256xf32>
    %101 = arith.addf %90, %100 : vector<16x256xf32>
    %102 = vector.extract_strided_slice %97 {offsets = [0, 1], sizes = [16, 256], strides = [1, 1]} : vector<16x261xf32> to vector<16x256xf32>
    %cst_39 = arith.constant -0.0255434643 : f32
    %103 = vector.broadcast %cst_39 : f32 to vector<16x256xf32>
    %104 = arith.mulf %103, %102 : vector<16x256xf32>
    %105 = arith.addf %101, %104 : vector<16x256xf32>
    %106 = vector.extract_strided_slice %97 {offsets = [0, 2], sizes = [16, 256], strides = [1, 1]} : vector<16x261xf32> to vector<16x256xf32>
    %cst_40 = arith.constant 0.128572613 : f32
    %107 = vector.broadcast %cst_40 : f32 to vector<16x256xf32>
    %108 = arith.mulf %107, %106 : vector<16x256xf32>
    %109 = arith.addf %105, %108 : vector<16x256xf32>
    %110 = vector.extract_strided_slice %97 {offsets = [0, 3], sizes = [16, 256], strides = [1, 1]} : vector<16x261xf32> to vector<16x256xf32>
    %cst_41 = arith.constant 0.443209797 : f32
    %111 = vector.broadcast %cst_41 : f32 to vector<16x256xf32>
    %112 = arith.mulf %111, %110 : vector<16x256xf32>
    %113 = arith.addf %109, %112 : vector<16x256xf32>
    %114 = vector.extract_strided_slice %97 {offsets = [0, 4], sizes = [16, 256], strides = [1, 1]} : vector<16x261xf32> to vector<16x256xf32>
    %cst_42 = arith.constant -0.0576573759 : f32
    %115 = vector.broadcast %cst_42 : f32 to vector<16x256xf32>
    %116 = arith.mulf %115, %114 : vector<16x256xf32>
    %117 = arith.addf %113, %116 : vector<16x256xf32>
    %118 = vector.extract_strided_slice %97 {offsets = [0, 5], sizes = [16, 256], strides = [1, 1]} : vector<16x261xf32> to vector<16x256xf32>
    %cst_43 = arith.constant 0.00938946381 : f32
    %119 = vector.broadcast %cst_43 : f32 to vector<16x256xf32>
    %120 = arith.mulf %119, %118 : vector<16x256xf32>
    %121 = arith.addf %117, %120 : vector<16x256xf32>
    %c0_44 = arith.constant 0 : index
    %c0_45 = arith.constant 0 : index
    %c0_46 = arith.constant 0 : index
    %122 = vector.load %arg7[%c0_44, %c0_45, %c0_46] : memref<1x16x256xf32, #tpu.memory_space<vmem>>, vector<1x16x256xf32>
    %123 = vector.shape_cast %122 : vector<1x16x256xf32> to vector<16x256xf32>
    %124 = vector.shape_cast %121 : vector<16x256xf32> to vector<1x16x256xf32>
    tpu.vector_store %arg7[%c0_44, %c0_45, %c0_46], %124 {strides = array<i32>} : memref<1x16x256xf32, #tpu.memory_space<vmem>>, vector<1x16x256xf32>,
    %c0_i32_47 = arith.constant 0 : i32
    %125 = arith.cmpi eq, %arg2, %c0_i32_47 : i32
    %126 = arith.extui %125 : i1 to i32
    %c0_i32_48 = arith.constant 0 : i32
    %127 = arith.cmpi ne, %126, %c0_i32_48 : i32
    scf.if %127 {
      %c0_49 = arith.constant 0 : index
      %c128_50 = arith.constant 128 : index
      %128 = vector.load %arg8[%c0_49, %c128_50] : memref<16x384xf32, #tpu.memory_space<vmem>>, vector<16x1xf32>
      %cst_51 = arith.constant 0.00405793311 : f32
      %129 = vector.broadcast %cst_51 : f32 to vector<16x1xf32>
      %130 = arith.mulf %129, %128 : vector<16x1xf32>
      %131 = arith.mulf %130, %9 : vector<16x1xf32>
      %132 = math.sin %131 : vector<16x1xf32>
      %133 = arith.mulf %132, %132 : vector<16x1xf32>
      %134 = arith.mulf %14, %133 : vector<16x1xf32>
      %135 = arith.addf %130, %134 : vector<16x1xf32>
      %c0_52 = arith.constant 0 : index
      %c0_53 = arith.constant 0 : index
      %c0_54 = arith.constant 0 : index
      %136 = vector.load %arg7[%c0_52, %c0_53, %c0_54] : memref<1x16x256xf32, #tpu.memory_space<vmem>>, vector<1x16x1xf32>
      %137 = vector.shape_cast %136 : vector<1x16x1xf32> to vector<16x1xf32>
      %cst_55 = arith.constant 0.00938946381 : f32
      %138 = vector.broadcast %cst_55 : f32 to vector<16x1xf32>
      %139 = arith.mulf %138, %135 : vector<16x1xf32>
      %140 = arith.subf %137, %139 : vector<16x1xf32>
      %c0_56 = arith.constant 0 : index
      %c0_57 = arith.constant 0 : index
      %c0_58 = arith.constant 0 : index
      %141 = vector.load %arg7[%c0_56, %c0_57, %c0_58] : memref<1x16x256xf32, #tpu.memory_space<vmem>>, vector<1x16x1xf32>
      %142 = vector.shape_cast %141 : vector<1x16x1xf32> to vector<16x1xf32>
      %143 = vector.shape_cast %140 : vector<16x1xf32> to vector<1x16x1xf32>
      tpu.vector_store %arg7[%c0_56, %c0_57, %c0_58], %143 {strides = array<i32>} : memref<1x16x256xf32, #tpu.memory_space<vmem>>, vector<1x16x1xf32>,
      %c0_59 = arith.constant 0 : index
      %c0_60 = arith.constant 0 : index
      %c1 = arith.constant 1 : index
      %144 = vector.load %arg7[%c0_59, %c0_60, %c1] : memref<1x16x256xf32, #tpu.memory_space<vmem>>, vector<1x16x1xf32>
      %145 = vector.shape_cast %144 : vector<1x16x1xf32> to vector<16x1xf32>
      %cst_61 = arith.constant -0.0576573759 : f32
      %146 = vector.broadcast %cst_61 : f32 to vector<16x1xf32>
      %147 = arith.mulf %146, %135 : vector<16x1xf32>
      %148 = arith.subf %145, %147 : vector<16x1xf32>
      %c0_62 = arith.constant 0 : index
      %c0_63 = arith.constant 0 : index
      %c1_64 = arith.constant 1 : index
      %149 = vector.load %arg7[%c0_62, %c0_63, %c1_64] : memref<1x16x256xf32, #tpu.memory_space<vmem>>, vector<1x16x1xf32>
      %150 = vector.shape_cast %149 : vector<1x16x1xf32> to vector<16x1xf32>
      %151 = vector.shape_cast %148 : vector<16x1xf32> to vector<1x16x1xf32>
      tpu.vector_store %arg7[%c0_62, %c0_63, %c1_64], %151 {strides = array<i32>} : memref<1x16x256xf32, #tpu.memory_space<vmem>>, vector<1x16x1xf32>,
      %c0_65 = arith.constant 0 : index
      %c0_66 = arith.constant 0 : index
      %c2 = arith.constant 2 : index
      %152 = vector.load %arg7[%c0_65, %c0_66, %c2] : memref<1x16x256xf32, #tpu.memory_space<vmem>>, vector<1x16x1xf32>
      %153 = vector.shape_cast %152 : vector<1x16x1xf32> to vector<16x1xf32>
      %cst_67 = arith.constant 0.443209797 : f32
      %154 = vector.broadcast %cst_67 : f32 to vector<16x1xf32>
      %155 = arith.mulf %154, %135 : vector<16x1xf32>
      %156 = arith.subf %153, %155 : vector<16x1xf32>
      %c0_68 = arith.constant 0 : index
      %c0_69 = arith.constant 0 : index
      %c2_70 = arith.constant 2 : index
      %157 = vector.load %arg7[%c0_68, %c0_69, %c2_70] : memref<1x16x256xf32, #tpu.memory_space<vmem>>, vector<1x16x1xf32>
      %158 = vector.shape_cast %157 : vector<1x16x1xf32> to vector<16x1xf32>
      %159 = vector.shape_cast %156 : vector<16x1xf32> to vector<1x16x1xf32>
      tpu.vector_store %arg7[%c0_68, %c0_69, %c2_70], %159 {strides = array<i32>} : memref<1x16x256xf32, #tpu.memory_space<vmem>>, vector<1x16x1xf32>,
      %c0_71 = arith.constant 0 : index
      %c0_72 = arith.constant 0 : index
      %c3 = arith.constant 3 : index
      %160 = vector.load %arg7[%c0_71, %c0_72, %c3] : memref<1x16x256xf32, #tpu.memory_space<vmem>>, vector<1x16x1xf32>
      %161 = vector.shape_cast %160 : vector<1x16x1xf32> to vector<16x1xf32>
      %cst_73 = arith.constant 0.128572613 : f32
      %162 = vector.broadcast %cst_73 : f32 to vector<16x1xf32>
      %163 = arith.mulf %162, %135 : vector<16x1xf32>
      %164 = arith.subf %161, %163 : vector<16x1xf32>
      %c0_74 = arith.constant 0 : index
      %c0_75 = arith.constant 0 : index
      %c3_76 = arith.constant 3 : index
      %165 = vector.load %arg7[%c0_74, %c0_75, %c3_76] : memref<1x16x256xf32, #tpu.memory_space<vmem>>, vector<1x16x1xf32>
      %166 = vector.shape_cast %165 : vector<1x16x1xf32> to vector<16x1xf32>
      %167 = vector.shape_cast %164 : vector<16x1xf32> to vector<1x16x1xf32>
      tpu.vector_store %arg7[%c0_74, %c0_75, %c3_76], %167 {strides = array<i32>} : memref<1x16x256xf32, #tpu.memory_space<vmem>>, vector<1x16x1xf32>,
      %c0_77 = arith.constant 0 : index
      %c0_78 = arith.constant 0 : index
      %c4 = arith.constant 4 : index
      %168 = vector.load %arg7[%c0_77, %c0_78, %c4] : memref<1x16x256xf32, #tpu.memory_space<vmem>>, vector<1x16x1xf32>
      %169 = vector.shape_cast %168 : vector<1x16x1xf32> to vector<16x1xf32>
      %cst_79 = arith.constant -0.0255434643 : f32
      %170 = vector.broadcast %cst_79 : f32 to vector<16x1xf32>
      %171 = arith.mulf %170, %135 : vector<16x1xf32>
      %172 = arith.subf %169, %171 : vector<16x1xf32>
      %c0_80 = arith.constant 0 : index
      %c0_81 = arith.constant 0 : index
      %c4_82 = arith.constant 4 : index
      %173 = vector.load %arg7[%c0_80, %c0_81, %c4_82] : memref<1x16x256xf32, #tpu.memory_space<vmem>>, vector<1x16x1xf32>
      %174 = vector.shape_cast %173 : vector<1x16x1xf32> to vector<16x1xf32>
      %175 = vector.shape_cast %172 : vector<16x1xf32> to vector<1x16x1xf32>
      tpu.vector_store %arg7[%c0_80, %c0_81, %c4_82], %175 {strides = array<i32>} : memref<1x16x256xf32, #tpu.memory_space<vmem>>, vector<1x16x1xf32>,
      %c0_83 = arith.constant 0 : index
      %c0_84 = arith.constant 0 : index
      %c5 = arith.constant 5 : index
      %176 = vector.load %arg7[%c0_83, %c0_84, %c5] : memref<1x16x256xf32, #tpu.memory_space<vmem>>, vector<1x16x1xf32>
      %177 = vector.shape_cast %176 : vector<1x16x1xf32> to vector<16x1xf32>
      %cst_85 = arith.constant 0.00202896656 : f32
      %178 = vector.broadcast %cst_85 : f32 to vector<16x1xf32>
      %179 = arith.mulf %178, %135 : vector<16x1xf32>
      %180 = arith.subf %177, %179 : vector<16x1xf32>
      %c0_86 = arith.constant 0 : index
      %c0_87 = arith.constant 0 : index
      %c5_88 = arith.constant 5 : index
      %181 = vector.load %arg7[%c0_86, %c0_87, %c5_88] : memref<1x16x256xf32, #tpu.memory_space<vmem>>, vector<1x16x1xf32>
      %182 = vector.shape_cast %181 : vector<1x16x1xf32> to vector<16x1xf32>
      %183 = vector.shape_cast %180 : vector<16x1xf32> to vector<1x16x1xf32>
      tpu.vector_store %arg7[%c0_86, %c0_87, %c5_88], %183 {strides = array<i32>} : memref<1x16x256xf32, #tpu.memory_space<vmem>>, vector<1x16x1xf32>,
    } else {
    }
    return
  }
  func.func @transform_0(%arg0: i32, %arg1: i32, %arg2: i32) -> (i32, i32, i32) {
    %c0_i32 = arith.constant 0 : i32
    return %arg0, %arg1, %arg2 : i32, i32, i32
  }
  func.func @transform_1(%arg0: i32, %arg1: i32, %arg2: i32) -> (i32, i32, i32) {
    %c2_i32 = arith.constant 2 : i32
    %0 = arith.muli %arg2, %c2_i32 : i32
    %c1_i32 = arith.constant 1 : i32
    %1 = arith.subi %0, %c1_i32 : i32
    %c0_i32 = arith.constant 0 : i32
    %2 = arith.maxsi %1, %c0_i32 : i32
    %c0_i32_0 = arith.constant 0 : i32
    return %arg0, %arg1, %2 : i32, i32, i32
  }
  func.func @transform_2(%arg0: i32, %arg1: i32, %arg2: i32) -> (i32, i32) {
    %c0_i32 = arith.constant 0 : i32
    %c0_i32_0 = arith.constant 0 : i32
    return %arg1, %c0_i32 : i32, i32
  }
  func.func @transform_3(%arg0: i32, %arg1: i32, %arg2: i32) -> (i32, i32) {
    %c0_i32 = arith.constant 0 : i32
    %c0_i32_0 = arith.constant 0 : i32
    return %arg1, %c0_i32 : i32, i32
  }
  func.func @transform_4(%arg0: i32, %arg1: i32, %arg2: i32) -> (i32, i32, i32) {
    %c0_i32 = arith.constant 0 : i32
    return %arg0, %arg1, %arg2 : i32, i32, i32
  }
}

</mosaic_0001>

<llo_original>
// kernel: activation1d.1
$region0: #{activation1d.1}
  #allocation0 [shape = 'u32[]', space=smem, size = 0x4, offset = 0x4, fixed_abs, tag = 'smem constant byte address 0x4 - core index']
  #allocation1 [shape = 'u32[72,128]{1,0:T(1,128)}', space=vmem, size = 0x9000, scoped, tag = 'internal scratch']
  #allocation2 [shape = 'f32[16,384]{1,0:T(8,128)}', space=vmem, size = 0x6000, scoped, tag = 'scratch operand']
  %s0 = inlined_call_operand.hbm [shape: f32[2,16,300], index: 0, kind: input, shape index: {}, may-alias: {0,1}]
  %s1 = inlined_call_operand.hbm [shape: f32[2,16,300], index: 1, kind: input, shape index: {}, may-alias: {0,1}]
  %s2 = inlined_call_operand.vmem [shape: f32[16,1], index: 2, kind: input, shape index: {}]
  %s3 = inlined_call_operand.vmem [shape: f32[16,1], index: 3, kind: input, shape index: {}]
  %s4 = inlined_call_operand.hbm [shape: f32[2,16,300], index: 4, kind: output, shape index: {}]
  %s5 = sld [smem:[#allocation0]]
  $region69: #{activation1d.1} parent=0
    _
  %s7 = ssub.s32 1, %s5
  %s8 = scalar_select 0, %s7, %s5
  $region1: #{activation1d.1} parent=0
    #allocation3 [shape = 'u8[32768]{0}', space=vmem, size = 0x8000, scoped, tag = 'input window, operand 0']
    #allocation4 [shape = 's32[2]{0}', space=sflag, size = 0x8, scoped, tag = 'scoped memory for activation1d.1']
    #allocation5 [shape = 's32[2]{0}', space=sflag, size = 0x8, scoped, tag = 'scoped memory for activation1d.1']
    #allocation6 [shape = 'u8[16384]{0}', space=vmem, size = 0x4000, scoped, tag = 'input window, operand 1']
    #allocation7 [shape = 's32[2]{0}', space=sflag, size = 0x8, scoped, tag = 'scoped memory for activation1d.1']
    #allocation8 [shape = 'u8[32768]{0}', space=vmem, size = 0x8000, scoped, tag = 'output window, operand 0']
    %9 = vsyncpa [#allocation4], 0
    %s10 = scalar_lea.sflag [#allocation4], 1
    %11 = vsyncpa %s10, 0
    %12 = vsyncpa [#allocation7], 0
    %s13 = scalar_lea.sflag [#allocation7], 1
    %14 = vsyncpa %s13, 0
    %15 = vsyncpa [#allocation5], 0
    %s16 = scalar_lea.sflag [#allocation5], 1
    %17 = vsyncpa %s16, 0
    loop: start=0, step=1, limit=6
    $region2: #{activation1d.1} parent=1 // loop_pre_header
      _
    $region3: #{activation1d.1} parent=1 // loop_header
      %s19 = sphi 0, %s23
      %p20 = scmp.ge.s32.totalorder %s19, 6
      %s26 = sphi 0, %s45
      %s27 = sphi 0, %s41
      %s28 = sphi 0, %s37
      %s29 = sphi 0, %s26
      %s30 = sphi 0, %s27
      %s31 = sphi 0, %s28
      %s32 = sphi 0, %s29
      %s33 = sphi 0, %s30
      %s34 = sphi 0, %s31
      %s52 = sphi 0, %s54
      %s55 = sphi 0, %s52
      %s56 = sphi 0, %s55
      %s72 = sphi 0, %s56
      %s90 = sphi 0, %s92
      %s93 = sphi 0, %s90
      %s94 = sphi 0, %s93
      %s110 = sphi 0, %s94
      %s116 = sphi 0, %s118
      %s119 = sphi 0, %s116
      %s120 = sphi 0, %s119
      %s136 = sphi 0, %s120
      %s142 = sphi 0, %s144
      %s145 = sphi 0, %s142
      %s146 = sphi 0, %s145
      %s162 = sphi 0, %s146
      %s172 = sphi 0, %s174
      %s175 = sphi 0, %s172
      %s176 = sphi 0, %s175
      %s192 = sphi 0, %s176
    $region4: #{activation1d.1} parent=1 // loop_header_branch
      %22 = sbr.rel (%p20) target = $region8
    $region5: #{activation1d.1} parent=1 // loop_body
      %s24 = ssub.s32 %s19, 1
      %s25 = ssub.s32 %s19, 2
      %s35 = sadd.s32 1, %s28
      %p36 = scmp.ge.s32.totalorder %s35, 2
      %s37 = scalar_select %p36, 0, %s35
      %s38 = sadd.s32 1, %s27
      %s39 = scalar_select %p36, %s38, %s27
      %p40 = scmp.ge.s32.totalorder %s39, 1
      %s41 = scalar_select %p40, 0, %s39
      %s42 = sadd.s32 1, %s26
      %s43 = scalar_select %p40, %s42, %s26
      %p44 = scmp.ge.s32.totalorder %s43, 2
      %s45 = scalar_select %p44, 0, %s43
      %s46 = ssub.s32 %s26, %s45
      %s47 = ssub.s32 %s27, %s41
      %s48 = sor.u32 %s46, %s47
      %s49 = ssub.s32 %s28, %s37
      %s50 = sor.u32 %s48, %s49
      %p51 = scmp.eq.s32.totalorder %s50, 0
      %s53 = sadd.s32 %s52, 1
      %s54 = scalar_select %p51, %s52, %s53
      %p57 = pneg %p51
      %p58 = scmp.eq.s32.totalorder %s19, 3
      %p59 = por %p57, %p58
      %p60 = scmp.ne.s32.totalorder %s52, %s55
      %p61 = scmp.eq.s32.totalorder %s19, 0
      %p62 = por %p60, %p61
      %p63 = scmp.ne.s32.totalorder %s52, %s55
      %p64 = scmp.eq.s32.totalorder %s24, 3
      %p65 = por %p63, %p64
      %p66 = scmp.ne.s32.totalorder %s55, %s56
      %p67 = scmp.eq.s32.totalorder %s24, 0
      %p68 = por %p66, %p67
      %p69 = scmp.ne.s32.totalorder %s55, %s56
      %p70 = scmp.eq.s32.totalorder %s25, 3
      %p71 = por %p69, %p70
      %p73 = scmp.ne.s32.totalorder %s56, %s72
      %p74 = scmp.eq.s32.totalorder %s25, 0
      %p75 = por %p73, %p74
      %s76 = smul.u32 %s28, 2
      %s77 = ssub.s32 %s76, 1
      %p78 = scmp.gt.s32.totalorder %s77, 0
      %s79 = scalar_select %p78, %s77, 0
      %s80 = smul.u32 %s37, 2
      %s81 = ssub.s32 %s80, 1
      %p82 = scmp.gt.s32.totalorder %s81, 0
      %s83 = scalar_select %p82, %s81, 0
      %s84 = ssub.s32 %s26, %s45
      %s85 = ssub.s32 %s27, %s41
      %s86 = sor.u32 %s84, %s85
      %s87 = ssub.s32 %s79, %s83
      %s88 = sor.u32 %s86, %s87
      %p89 = scmp.eq.s32.totalorder %s88, 0
      %s91 = sadd.s32 %s90, 1
      %s92 = scalar_select %p89, %s90, %s91
      %p95 = pneg %p89
      %p96 = scmp.eq.s32.totalorder %s19, 3
      %p97 = por %p95, %p96
      %p98 = scmp.ne.s32.totalorder %s90, %s93
      %p99 = scmp.eq.s32.totalorder %s19, 0
      %p100 = por %p98, %p99
      %p101 = scmp.ne.s32.totalorder %s90, %s93
      %p102 = scmp.eq.s32.totalorder %s24, 3
      %p103 = por %p101, %p102
      %p104 = scmp.ne.s32.totalorder %s93, %s94
      %p105 = scmp.eq.s32.totalorder %s24, 0
      %p106 = por %p104, %p105
      %p107 = scmp.ne.s32.totalorder %s93, %s94
      %p108 = scmp.eq.s32.totalorder %s25, 3
      %p109 = por %p107, %p108
      %p111 = scmp.ne.s32.totalorder %s94, %s110
      %p112 = scmp.eq.s32.totalorder %s25, 0
      %p113 = por %p111, %p112
      %s114 = ssub.s32 %s27, %s41
      %p115 = scmp.eq.s32.totalorder %s114, 0
      %s117 = sadd.s32 %s116, 1
      %s118 = scalar_select %p115, %s116, %s117
      %p121 = pneg %p115
      %p122 = scmp.eq.s32.totalorder %s19, 3
      %p123 = por %p121, %p122
      %p124 = scmp.ne.s32.totalorder %s116, %s119
      %p125 = scmp.eq.s32.totalorder %s19, 0
      %p126 = por %p124, %p125
      %p127 = scmp.ne.s32.totalorder %s116, %s119
      %p128 = scmp.eq.s32.totalorder %s24, 3
      %p129 = por %p127, %p128
      %p130 = scmp.ne.s32.totalorder %s119, %s120
      %p131 = scmp.eq.s32.totalorder %s24, 0
      %p132 = por %p130, %p131
      %p133 = scmp.ne.s32.totalorder %s119, %s120
      %p134 = scmp.eq.s32.totalorder %s25, 3
      %p135 = por %p133, %p134
      %p137 = scmp.ne.s32.totalorder %s120, %s136
      %p138 = scmp.eq.s32.totalorder %s25, 0
      %p139 = por %p137, %p138
      %s140 = ssub.s32 %s27, %s41
      %p141 = scmp.eq.s32.totalorder %s140, 0
      %s143 = sadd.s32 %s142, 1
      %s144 = scalar_select %p141, %s142, %s143
      %p147 = pneg %p141
      %p148 = scmp.eq.s32.totalorder %s19, 3
      %p149 = por %p147, %p148
      %p150 = scmp.ne.s32.totalorder %s142, %s145
      %p151 = scmp.eq.s32.totalorder %s19, 0
      %p152 = por %p150, %p151
      %p153 = scmp.ne.s32.totalorder %s142, %s145
      %p154 = scmp.eq.s32.totalorder %s24, 3
      %p155 = por %p153, %p154
      %p156 = scmp.ne.s32.totalorder %s145, %s146
      %p157 = scmp.eq.s32.totalorder %s24, 0
      %p158 = por %p156, %p157
      %p159 = scmp.ne.s32.totalorder %s145, %s146
      %p160 = scmp.eq.s32.totalorder %s25, 3
      %p161 = por %p159, %p160
      %p163 = scmp.ne.s32.totalorder %s146, %s162
      %p164 = scmp.eq.s32.totalorder %s25, 0
      %p165 = por %p163, %p164
      %s166 = ssub.s32 %s26, %s45
      %s167 = ssub.s32 %s27, %s41
      %s168 = sor.u32 %s166, %s167
      %s169 = ssub.s32 %s28, %s37
      %s170 = sor.u32 %s168, %s169
      %p171 = scmp.eq.s32.totalorder %s170, 0
      %s173 = sadd.s32 %s172, 1
      %s174 = scalar_select %p171, %s172, %s173
      %p177 = pneg %p171
      %p178 = scmp.eq.s32.totalorder %s19, 3
      %p179 = por %p177, %p178
      %p180 = scmp.ne.s32.totalorder %s172, %s175
      %p181 = scmp.eq.s32.totalorder %s19, 0
      %p182 = por %p180, %p181
      %p183 = scmp.ne.s32.totalorder %s172, %s175
      %p184 = scmp.eq.s32.totalorder %s24, 3
      %p185 = por %p183, %p184
      %p186 = scmp.ne.s32.totalorder %s175, %s176
      %p187 = scmp.eq.s32.totalorder %s24, 0
      %p188 = por %p186, %p187
      %p189 = scmp.ne.s32.totalorder %s175, %s176
      %p190 = scmp.eq.s32.totalorder %s25, 3
      %p191 = por %p189, %p190
      %p193 = scmp.ne.s32.totalorder %s176, %s192
      %p194 = scmp.eq.s32.totalorder %s25, 0
      %p195 = por %p193, %p194
      %p196 = scmp.le.s32.totalorder 1, %s19
      %p197 = scmp.lt.s32.totalorder %s19, 5
      %p198 = pnand %p196, %p197
      %p199 = pneg %p198
      // Predicated region
      $region9: #{activation1d.1} parent=5 // pred_check
        _
      $region10: #{activation1d.1} parent=5 // pred_check_branch
        %201 = sbr.rel (%p198) target = $region12
      $region11: #{activation1d.1} parent=5 // pred_region
        %s202 = ssub.s32 %s19, 1
        // Predicated region
        $region13: #{activation1d.1} parent=11 // pred_check
          %p203 = pneg %p132
        $region14: #{activation1d.1} parent=11 // pred_check_branch
          %205 = sbr.rel (%p203) target = $region16
        $region15: #{activation1d.1} parent=11 // pred_region
          %s206 = smul.u32 2, %s30
          %p207 = scmp.lt.s32.totalorder %s206, 1
          %s208 = scalar_select %p207, %s206, 1
          %s209 = smul.addr %s208, 8
          %s210 = scalar_lea.vmem %s2, %s209
          %s211 = smul.u32 2, %s30
        $region16: #{activation1d.1} parent=11 // pred_fallthru
          _
        // Predicated region
        $region17: #{activation1d.1} parent=11 // pred_check
          %p212 = pneg %p158
        $region18: #{activation1d.1} parent=11 // pred_check_branch
          %214 = sbr.rel (%p212) target = $region20
        $region19: #{activation1d.1} parent=11 // pred_region
          %s215 = smul.u32 2, %s30
          %p216 = scmp.lt.s32.totalorder %s215, 1
          %s217 = scalar_select %p216, %s215, 1
          %s218 = smul.addr %s217, 8
          %s219 = scalar_lea.vmem %s3, %s218
          %s220 = smul.u32 2, %s30
        $region20: #{activation1d.1} parent=11 // pred_fallthru
          _
      $region12: #{activation1d.1} parent=5 // pred_fallthru
        _
      %p221 = scmp.lt.s32.totalorder %s19, 4
      // Predicated region
      $region21: #{activation1d.1} parent=5 // pred_check
        %p222 = pneg %p221
      $region22: #{activation1d.1} parent=5 // pred_check_branch
        %224 = sbr.rel (%p222) target = $region24
      $region23: #{activation1d.1} parent=5 // pred_region
        // Predicated region
        $region25: #{activation1d.1} parent=23 // pred_check
          %p225 = pneg %p62
        $region26: #{activation1d.1} parent=23 // pred_check_branch
          %227 = sbr.rel (%p225) target = $region28
        $region27: #{activation1d.1} parent=23 // pred_region
          %s228 = sand.u32 %s52, 1
          %s229 = scalar_lea.sflag [#allocation4], %s228
          %s230 = sand.u32 %s52, 1
          %s231 = smul.addr %s230, 32
          %s232 = scalar_lea.vmem [#allocation3], %s231
          %s233 = smul.u32 2, %s27
          %s234 = smul.u32 2, %s28
          %s235 = ssub.s32 3, %s234
          %p236 = scmp.lt.s32.totalorder %s235, 2
          %s237 = scalar_select %p236, %s235, 2
          %s238 = smul.u32 16, %s237
          %s239 = ssub.s32 32, %s238
          %s240 = sshll.u32 %s239, 4
          %241 = vsyncadd %s229, %s240
          %p242 = scmp.ne.s32.totalorder 0, %s238
          %s243 = smul.addr %s233, 3
          %s244 = sadd.s32 %s234, %s243
          %s245 = smul.addr %s26, 6
          %s246 = sadd.s32 %s244, %s245
          %s247 = smul.addr %s246, 8
          %s248 = scalar_lea.hbm %s0, %s247
          %s249 = smul.u32 %s237, 8
          %s250 = smul.u32 %s249, 2
          %s251 = sshll.u32 %s248, 4
          %s252 = int_to_ptr.hbm [resolvable:$true] %s251
          %s253 = sshll.u32 %s232, 4
          %s254 = int_to_ptr.vmem [resolvable:$true] %s253
          %s255 = sshll.u32 %s250, 4
          %259 = dma.hbm_to_vmem [thread:$0]  (%p242), %s252, %s255, %s254, %s229, 384, 256, %s249
        $region28: #{activation1d.1} parent=23 // pred_fallthru
          _
        // Predicated region
        $region29: #{activation1d.1} parent=23 // pred_check
          %p260 = pneg %p100
        $region30: #{activation1d.1} parent=23 // pred_check_branch
          %262 = sbr.rel (%p260) target = $region32
        $region31: #{activation1d.1} parent=23 // pred_region
          %s263 = sand.u32 %s90, 1
          %s264 = scalar_lea.sflag [#allocation7], %s263
          %s265 = sand.u32 %s90, 1
          %s266 = smul.addr %s265, 16
          %s267 = scalar_lea.vmem [#allocation6], %s266
          %s268 = smul.u32 %s28, 2
          %s269 = ssub.s32 %s268, 1
          %p270 = scmp.gt.s32.totalorder %s269, 0
          %s271 = scalar_select %p270, %s269, 0
          %s272 = smul.u32 2, %s27
          %274 = vsyncadd %s264, 0
          %s275 = smul.addr %s272, 3
          %s276 = sadd.s32 %s271, %s275
          %s277 = smul.addr %s26, 6
          %s278 = sadd.s32 %s276, %s277
          %s279 = smul.addr %s278, 8
          %s280 = scalar_lea.hbm %s1, %s279
          %s281 = sshll.u32 %s280, 4
          %s282 = int_to_ptr.hbm [resolvable:$true] %s281
          %s283 = sshll.u32 %s267, 4
          %s284 = int_to_ptr.vmem [resolvable:$true] %s283
          %289 = dma.hbm_to_vmem [thread:$0]  %s282, 256, %s284, %s264, 384, 128, 8
        $region32: #{activation1d.1} parent=23 // pred_fallthru
          _
      $region24: #{activation1d.1} parent=5 // pred_fallthru
        _
      %p290 = scmp.le.s32.totalorder 1, %s19
      %p291 = scmp.lt.s32.totalorder %s19, 5
      %p292 = pnand %p290, %p291
      %p293 = pneg %p292
      // Predicated region
      $region33: #{activation1d.1} parent=5 // pred_check
        _
      $region34: #{activation1d.1} parent=5 // pred_check_branch
        %295 = sbr.rel (%p292) target = $region36
      $region35: #{activation1d.1} parent=5 // pred_region
        %s296 = ssub.s32 %s19, 1
        %s297 = sand.u32 %s55, 1
        %s298 = scalar_lea.sflag [#allocation4], %s297
        %s299 = sand.u32 %s55, 1
        %s300 = smul.addr %s299, 32
        %s301 = scalar_lea.vmem [#allocation3], %s300
        // Predicated region
        $region37: #{activation1d.1} parent=35 // pred_check
          %p302 = pneg %p68
        $region38: #{activation1d.1} parent=35 // pred_check_branch
          %304 = sbr.rel (%p302) target = $region40
        $region39: #{activation1d.1} parent=35 // pred_region
          %306 = dma.done %s298, 512
        $region40: #{activation1d.1} parent=35 // pred_fallthru
          _
        %s307 = sand.u32 %s93, 1
        %s308 = scalar_lea.sflag [#allocation7], %s307
        %s309 = sand.u32 %s93, 1
        %s310 = smul.addr %s309, 16
        %s311 = scalar_lea.vmem [#allocation6], %s310
        // Predicated region
        $region41: #{activation1d.1} parent=35 // pred_check
          %p312 = pneg %p106
        $region42: #{activation1d.1} parent=35 // pred_check_branch
          %314 = sbr.rel (%p312) target = $region44
        $region43: #{activation1d.1} parent=35 // pred_region
          %316 = dma.done %s308, 256
        $region44: #{activation1d.1} parent=35 // pred_fallthru
          _
        %s317 = sand.u32 %s55, 1
        %s318 = scalar_lea.sflag [#allocation4], %s317
        %s319 = sand.u32 %s55, 1
        %s320 = smul.addr %s319, 32
        %s321 = scalar_lea.vmem [#allocation3], %s320
        %p322 = pneg %p68
        %p323 = pneg %p65
        %s324 = sand.u32 %s93, 1
        %s325 = scalar_lea.sflag [#allocation7], %s324
        %s326 = sand.u32 %s93, 1
        %s327 = smul.addr %s326, 16
        %s328 = scalar_lea.vmem [#allocation6], %s327
        %p329 = pneg %p106
        %p330 = pneg %p103
        %s331 = smul.u32 2, %s30
        %p332 = scmp.lt.s32.totalorder %s331, 1
        %s333 = scalar_select %p332, %s331, 1
        %s334 = smul.addr %s333, 8
        %s335 = scalar_lea.vmem %s2, %s334
        %p336 = pneg %p132
        %p337 = pneg %p129
        %s338 = smul.u32 2, %s30
        %p339 = scmp.lt.s32.totalorder %s338, 1
        %s340 = scalar_select %p339, %s338, 1
        %s341 = smul.addr %s340, 8
        %s342 = scalar_lea.vmem %s3, %s341
        %p343 = pneg %p158
        %p344 = pneg %p155
        %p345 = pneg %p188
        %p346 = pneg %p185
        %s347 = sand.u32 %s175, 1
        %s348 = scalar_lea.sflag [#allocation5], %s347
        %s349 = sand.u32 %s175, 1
        %s350 = smul.addr %s349, 32
        %s351 = scalar_lea.vmem [#allocation8], %s350
        %s352 = smul.u32 2, %s30
        %s353 = smul.u32 2, %s31
        %s354 = ssub.s32 3, %s353
        %p355 = scmp.lt.s32.totalorder %s354, 2
        %s356 = scalar_select %p355, %s354, 2
        %s357 = smul.u32 16, %s356
        %s358 = smul.u32 %s31, 2
        %s359 = ssub.s32 %s358, 1
        %p360 = scmp.gt.s32.totalorder %s359, 0
        %s361 = scalar_select %p360, %s359, 0
        %s362 = smul.u32 2, %s30
        %s363 = smul.u32 2, %s30
        %p364 = scmp.lt.s32.totalorder %s363, 1
        %s365 = scalar_select %p364, %s363, 1
        %s366 = smul.addr %s365, 8
        %s367 = scalar_lea.vmem %s2, %s366
        %s368 = smul.u32 2, %s30
        %s369 = smul.u32 2, %s30
        %p370 = scmp.lt.s32.totalorder %s369, 1
        %s371 = scalar_select %p370, %s369, 1
        %s372 = smul.addr %s371, 8
        %s373 = scalar_lea.vmem %s3, %s372
        %s374 = smul.u32 2, %s30
        %s375 = smul.u32 2, %s30
        %s376 = smul.u32 2, %s31
        %s377 = ssub.s32 3, %s376
        %p378 = scmp.lt.s32.totalorder %s377, 2
        %s379 = scalar_select %p378, %s377, 2
        %s380 = smul.u32 16, %s379
        %p381 = scmp.eq.s32.totalorder %s31, 0
        // Predicated region
        $region45: #{activation1d.1} parent=35 // pred_check
          %p382 = pneg %p381
        $region46: #{activation1d.1} parent=35 // pred_check_branch
          %384 = sbr.rel (%p382) target = $region48
        $region47: #{activation1d.1} parent=35 // pred_region
          %385 = vst [vmem:[#allocation2] sm:$0xff] 0.0
          %386 = vst [vmem:[#allocation2 + $0x18] sm:$0xff] 0.0
        $region48: #{activation1d.1} parent=35 // pred_fallthru
          _
        %p387 = scmp.gt.s32.totalorder %s31, 0
        // Predicated region
        $region49: #{activation1d.1} parent=35 // pred_check
          %p388 = pneg %p387
        $region50: #{activation1d.1} parent=35 // pred_check_branch
          %390 = sbr.rel (%p388) target = $region52
        $region51: #{activation1d.1} parent=35 // pred_region
          %v391 = vld [vmem:[%s311] sm:$0xff]
          %v392 = vld [vmem:[%s311 + $0x8] sm:$0xff]
          %393 = vst [vmem:[#allocation2] sm:$0xff] %v391
          %394 = vst [vmem:[#allocation2 + $0x18] sm:$0xff] %v392
        $region52: #{activation1d.1} parent=35 // pred_fallthru
          _
        %v395 = vld [vmem:[%s301] sm:$0xff]
        %v396 = vld [vmem:[%s301 + $0x8] sm:$0xff]
        %v397 = vld [vmem:[%s301 + $0x10] sm:$0xff]
        %v398 = vld [vmem:[%s301 + $0x18] sm:$0xff]
        %399 = vst [vmem:[#allocation2 + $0x8] sm:$0xff] %v395
        %400 = vst [vmem:[#allocation2 + $0x10] sm:$0xff] %v396
        %401 = vst [vmem:[#allocation2 + $0x20] sm:$0xff] %v397
        %402 = vst [vmem:[#allocation2 + $0x28] sm:$0xff] %v398
        %v403 = vld [vmem:[%s367] sm:$0xff]
        %v404 = vld [vmem:[%s367 + $0x8] sm:$0xff]
        %v405 = vld [vmem:[%s373] sm:$0xff]
        %v406 = vld [vmem:[%s373 + $0x8] sm:$0xff]
        %v407 = vadd.f32 %v405, 1e-09
        %v408 = vadd.f32 %v406, 1e-09
        %v409 = vrcp.pop %v407
        %v410 = vmul.f32 %v407, %v409
        %v411 = vsub.f32 1.0, %v410
        %v412 = vmul.f32 %v409, %v411
        %v413 = vadd.f32 %v409, %v412
        %vm414 = vweird.f32 %v407
        %vm415 = vweird.f32 %v409
        %vm416 = vmor %vm414, %vm415
        %v417 = vsel %vm416, %v409, %v413
        %v418 = vand.u32 2147483647, %v407
        %vm419 = vcmp.eq.f32.partialorder %v418, 8.507059e+37
        %v420 = vand.u32 %v407, 2147483648
        %v421 = vor.u32 1.1754944e-38, %v420
        %v422 = vsel %vm419, %v421, %v417
        %v423 = vmul.f32 1.0, %v422
        %v424 = vrcp.pop %v408
        %v425 = vmul.f32 %v408, %v424
        %v426 = vsub.f32 1.0, %v425
        %v427 = vmul.f32 %v424, %v426
        %v428 = vadd.f32 %v424, %v427
        %vm429 = vweird.f32 %v408
        %vm430 = vweird.f32 %v424
        %vm431 = vmor %vm429, %vm430
        %v432 = vsel %vm431, %v424, %v428
        %v433 = vand.u32 2147483647, %v408
        %vm434 = vcmp.eq.f32.partialorder %v433, 8.507059e+37
        %v435 = vand.u32 %v408, 2147483648
        %v436 = vor.u32 1.1754944e-38, %v435
        %v437 = vsel %vm434, %v436, %v432
        %v438 = vmul.f32 1.0, %v437
        %v439 = vld [vmem:[#allocation2] sm:$0xff]
        %v440 = vld [vmem:[#allocation2 + $0x8] sm:$0xff]
        %v441 = vld [vmem:[#allocation2 + $0x10] sm:$0xff]
        %v442 = vld [vmem:[#allocation2 + $0x18] sm:$0xff]
        %v443 = vld [vmem:[#allocation2 + $0x20] sm:$0xff]
        %v444 = vld [vmem:[#allocation2 + $0x28] sm:$0xff]
        %v445 = vmul.f32 %v439, 0.018778928
        %v446 = vmul.f32 %v440, 0.018778928
        %v447 = vmul.f32 %v441, 0.018778928
        %v448 = vmul.f32 %v442, 0.018778928
        %v449 = vmul.f32 %v443, 0.018778928
        %v450 = vmul.f32 %v444, 0.018778928
        %v451 = vadd.f32 %v445, 0.0
        %v452 = vadd.f32 %v446, 0.0
        %v453 = vadd.f32 %v447, 0.0
        %v454 = vadd.f32 %v448, 0.0
        %v455 = vadd.f32 %v449, 0.0
        %v456 = vadd.f32 %v450, 0.0
        %v457 = vmul.f32 %v439, 0.004057933
        %v458 = vmul.f32 %v440, 0.004057933
        %v459 = vmul.f32 %v441, 0.004057933
        %v460 = vmul.f32 %v442, 0.004057933
        %v461 = vmul.f32 %v443, 0.004057933
        %v462 = vmul.f32 %v444, 0.004057933
        %v463 = vadd.f32 %v457, 0.0
        %v464 = vadd.f32 %v458, 0.0
        %v465 = vadd.f32 %v459, 0.0
        %v466 = vadd.f32 %v460, 0.0
        %v467 = vadd.f32 %v461, 0.0
        %v468 = vadd.f32 %v462, 0.0
        %v469 = vmul.f32 %v439, -0.11531475
        %v470 = vmul.f32 %v440, -0.11531475
        %v471 = vmul.f32 %v441, -0.11531475
        %v472 = vmul.f32 %v442, -0.11531475
        %v473 = vmul.f32 %v443, -0.11531475
        %v474 = vmul.f32 %v444, -0.11531475
        %481 = vrot.lane.b32.xlu0 %v469, 1
        %v482 = vpop.permute.xlu0 %481
        %483 = vrot.lane.b32.xlu0 %v470, 1
        %v484 = vpop.permute.xlu0 %483
        %485 = vrot.lane.b32.xlu0 %v471, 1
        %v486 = vpop.permute.xlu0 %485
        %487 = vrot.lane.b32.xlu0 %v472, 1
        %v488 = vpop.permute.xlu0 %487
        %489 = vrot.lane.b32.xlu0 %v473, 1
        %v490 = vpop.permute.xlu0 %489
        %491 = vrot.lane.b32.xlu0 %v474, 1
        %v492 = vpop.permute.xlu0 %491
        %vm493 = vcmask 7168
        %v494 = vsel %vm493, %v482, %v484
        %v495 = vsel %vm493, %v484, %v486
        %v496 = vsel %vm493, %v488, %v490
        %v497 = vsel %vm493, %v490, %v492
        %v504 = vadd.f32 %v451, %v482
        %v505 = vadd.f32 %v452, %v494
        %v506 = vadd.f32 %v453, %v495
        %v507 = vadd.f32 %v454, %v488
        %v508 = vadd.f32 %v455, %v496
        %v509 = vadd.f32 %v456, %v497
        %v510 = vmul.f32 %v439, -0.05108693
        %v511 = vmul.f32 %v440, -0.05108693
        %v512 = vmul.f32 %v441, -0.05108693
        %v513 = vmul.f32 %v442, -0.05108693
        %v514 = vmul.f32 %v443, -0.05108693
        %v515 = vmul.f32 %v444, -0.05108693
        %522 = vrot.lane.b32.xlu0 %v510, 1
        %v523 = vpop.permute.xlu0 %522
        %524 = vrot.lane.b32.xlu0 %v511, 1
        %v525 = vpop.permute.xlu0 %524
        %526 = vrot.lane.b32.xlu0 %v512, 1
        %v527 = vpop.permute.xlu0 %526
        %528 = vrot.lane.b32.xlu0 %v513, 1
        %v529 = vpop.permute.xlu0 %528
        %530 = vrot.lane.b32.xlu0 %v514, 1
        %v531 = vpop.permute.xlu0 %530
        %532 = vrot.lane.b32.xlu0 %v515, 1
        %v533 = vpop.permute.xlu0 %532
        %v534 = vsel %vm493, %v523, %v525
        %v535 = vsel %vm493, %v525, %v527
        %v536 = vsel %vm493, %v529, %v531
        %v537 = vsel %vm493, %v531, %v533
        %v544 = vadd.f32 %v463, %v523
        %v545 = vadd.f32 %v464, %v534
        %v546 = vadd.f32 %v465, %v535
        %v547 = vadd.f32 %v466, %v529
        %v548 = vadd.f32 %v467, %v536
        %v549 = vadd.f32 %v468, %v537
        %v550 = vmul.f32 %v439, 0.8864196
        %v551 = vmul.f32 %v440, 0.8864196
        %v552 = vmul.f32 %v441, 0.8864196
        %v553 = vmul.f32 %v442, 0.8864196
        %v554 = vmul.f32 %v443, 0.8864196
        %v555 = vmul.f32 %v444, 0.8864196
        %562 = vrot.lane.b32.xlu0 %v550, 2
        %v563 = vpop.permute.xlu0 %562
        %564 = vrot.lane.b32.xlu0 %v551, 2
        %v565 = vpop.permute.xlu0 %564
        %566 = vrot.lane.b32.xlu0 %v552, 2
        %v567 = vpop.permute.xlu0 %566
        %568 = vrot.lane.b32.xlu0 %v553, 2
        %v569 = vpop.permute.xlu0 %568
        %570 = vrot.lane.b32.xlu0 %v554, 2
        %v571 = vpop.permute.xlu0 %570
        %572 = vrot.lane.b32.xlu0 %v555, 2
        %v573 = vpop.permute.xlu0 %572
        %vm574 = vcmask 15360
        %v575 = vsel %vm574, %v563, %v565
        %v576 = vsel %vm574, %v565, %v567
        %v577 = vsel %vm574, %v569, %v571
        %v578 = vsel %vm574, %v571, %v573
        %v585 = vadd.f32 %v504, %v563
        %v586 = vadd.f32 %v505, %v575
        %v587 = vadd.f32 %v506, %v576
        %v588 = vadd.f32 %v507, %v569
        %v589 = vadd.f32 %v508, %v577
        %v590 = vadd.f32 %v509, %v578
        %v591 = vmul.f32 %v439, 0.25714523
        %v592 = vmul.f32 %v440, 0.25714523
        %v593 = vmul.f32 %v441, 0.25714523
        %v594 = vmul.f32 %v442, 0.25714523
        %v595 = vmul.f32 %v443, 0.25714523
        %v596 = vmul.f32 %v444, 0.25714523
        %603 = vrot.lane.b32.xlu0 %v591, 2
        %v604 = vpop.permute.xlu0 %603
        %605 = vrot.lane.b32.xlu0 %v592, 2
        %v606 = vpop.permute.xlu0 %605
        %607 = vrot.lane.b32.xlu0 %v593, 2
        %v608 = vpop.permute.xlu0 %607
        %609 = vrot.lane.b32.xlu0 %v594, 2
        %v610 = vpop.permute.xlu0 %609
        %611 = vrot.lane.b32.xlu0 %v595, 2
        %v612 = vpop.permute.xlu0 %611
        %613 = vrot.lane.b32.xlu0 %v596, 2
        %v614 = vpop.permute.xlu0 %613
        %v615 = vsel %vm574, %v604, %v606
        %v616 = vsel %vm574, %v606, %v608
        %v617 = vsel %vm574, %v610, %v612
        %v618 = vsel %vm574, %v612, %v614
        %v625 = vadd.f32 %v544, %v604
        %v626 = vadd.f32 %v545, %v615
        %v627 = vadd.f32 %v546, %v616
        %v628 = vadd.f32 %v547, %v610
        %v629 = vadd.f32 %v548, %v617
        %v630 = vadd.f32 %v549, %v618
        %631 = vrot.lane.b32.xlu0 %v591, 3
        %v632 = vpop.permute.xlu0 %631
        %633 = vrot.lane.b32.xlu0 %v592, 3
        %v634 = vpop.permute.xlu0 %633
        %635 = vrot.lane.b32.xlu0 %v593, 3
        %v636 = vpop.permute.xlu0 %635
        %637 = vrot.lane.b32.xlu0 %v594, 3
        %v638 = vpop.permute.xlu0 %637
        %639 = vrot.lane.b32.xlu0 %v595, 3
        %v640 = vpop.permute.xlu0 %639
        %641 = vrot.lane.b32.xlu0 %v596, 3
        %v642 = vpop.permute.xlu0 %641
        %vm643 = vcmask 23552
        %v644 = vsel %vm643, %v632, %v634
        %v645 = vsel %vm643, %v634, %v636
        %v646 = vsel %vm643, %v638, %v640
        %v647 = vsel %vm643, %v640, %v642
        %v654 = vadd.f32 %v585, %v632
        %v655 = vadd.f32 %v586, %v644
        %v656 = vadd.f32 %v587, %v645
        %v657 = vadd.f32 %v588, %v638
        %v658 = vadd.f32 %v589, %v646
        %v659 = vadd.f32 %v590, %v647
        %660 = vrot.lane.b32.xlu0 %v550, 3
        %v661 = vpop.permute.xlu0 %660
        %662 = vrot.lane.b32.xlu0 %v551, 3
        %v663 = vpop.permute.xlu0 %662
        %664 = vrot.lane.b32.xlu0 %v552, 3
        %v665 = vpop.permute.xlu0 %664
        %666 = vrot.lane.b32.xlu0 %v553, 3
        %v667 = vpop.permute.xlu0 %666
        %668 = vrot.lane.b32.xlu0 %v554, 3
        %v669 = vpop.permute.xlu0 %668
        %670 = vrot.lane.b32.xlu0 %v555, 3
        %v671 = vpop.permute.xlu0 %670
        %v672 = vsel %vm643, %v661, %v663
        %v673 = vsel %vm643, %v663, %v665
        %v674 = vsel %vm643, %v667, %v669
        %v675 = vsel %vm643, %v669, %v671
        %v682 = vadd.f32 %v625, %v661
        %v683 = vadd.f32 %v626, %v672
        %v684 = vadd.f32 %v627, %v673
        %v685 = vadd.f32 %v628, %v667
        %v686 = vadd.f32 %v629, %v674
        %v687 = vadd.f32 %v630, %v675
        %688 = vrot.lane.b32.xlu0 %v510, 4
        %v689 = vpop.permute.xlu0 %688
        %690 = vrot.lane.b32.xlu0 %v511, 4
        %v691 = vpop.permute.xlu0 %690
        %692 = vrot.lane.b32.xlu0 %v512, 4
        %v693 = vpop.permute.xlu0 %692
        %694 = vrot.lane.b32.xlu0 %v513, 4
        %v695 = vpop.permute.xlu0 %694
        %696 = vrot.lane.b32.xlu0 %v514, 4
        %v697 = vpop.permute.xlu0 %696
        %698 = vrot.lane.b32.xlu0 %v515, 4
        %v699 = vpop.permute.xlu0 %698
        %vm700 = vcmask 31744
        %v701 = vsel %vm700, %v689, %v691
        %v702 = vsel %vm700, %v691, %v693
        %v703 = vsel %vm700, %v695, %v697
        %v704 = vsel %vm700, %v697, %v699
        %v711 = vadd.f32 %v654, %v689
        %v712 = vadd.f32 %v655, %v701
        %v713 = vadd.f32 %v656, %v702
        %v714 = vadd.f32 %v657, %v695
        %v715 = vadd.f32 %v658, %v703
        %v716 = vadd.f32 %v659, %v704
        %717 = vrot.lane.b32.xlu0 %v469, 4
        %v718 = vpop.permute.xlu0 %717
        %719 = vrot.lane.b32.xlu0 %v470, 4
        %v720 = vpop.permute.xlu0 %719
        %721 = vrot.lane.b32.xlu0 %v471, 4
        %v722 = vpop.permute.xlu0 %721
        %723 = vrot.lane.b32.xlu0 %v472, 4
        %v724 = vpop.permute.xlu0 %723
        %725 = vrot.lane.b32.xlu0 %v473, 4
        %v726 = vpop.permute.xlu0 %725
        %727 = vrot.lane.b32.xlu0 %v474, 4
        %v728 = vpop.permute.xlu0 %727
        %v729 = vsel %vm700, %v718, %v720
        %v730 = vsel %vm700, %v720, %v722
        %v731 = vsel %vm700, %v724, %v726
        %v732 = vsel %vm700, %v726, %v728
        %v739 = vadd.f32 %v682, %v718
        %v740 = vadd.f32 %v683, %v729
        %v741 = vadd.f32 %v684, %v730
        %v742 = vadd.f32 %v685, %v724
        %v743 = vadd.f32 %v686, %v731
        %v744 = vadd.f32 %v687, %v732
        %751 = vrot.lane.b32.xlu0 %v457, 5
        %v752 = vpop.permute.xlu0 %751
        %753 = vrot.lane.b32.xlu0 %v458, 5
        %v754 = vpop.permute.xlu0 %753
        %755 = vrot.lane.b32.xlu0 %v459, 5
        %v756 = vpop.permute.xlu0 %755
        %757 = vrot.lane.b32.xlu0 %v460, 5
        %v758 = vpop.permute.xlu0 %757
        %759 = vrot.lane.b32.xlu0 %v461, 5
        %v760 = vpop.permute.xlu0 %759
        %761 = vrot.lane.b32.xlu0 %v462, 5
        %v762 = vpop.permute.xlu0 %761
        %vm763 = vcmask 39936
        %v764 = vsel %vm763, %v752, %v754
        %v765 = vsel %vm763, %v754, %v756
        %v766 = vsel %vm763, %v758, %v760
        %v767 = vsel %vm763, %v760, %v762
        %v774 = vadd.f32 %v711, %v752
        %v775 = vadd.f32 %v712, %v764
        %v776 = vadd.f32 %v713, %v765
        %v777 = vadd.f32 %v714, %v758
        %v778 = vadd.f32 %v715, %v766
        %v779 = vadd.f32 %v716, %v767
        %786 = vrot.lane.b32.xlu0 %v445, 5
        %v787 = vpop.permute.xlu0 %786
        %788 = vrot.lane.b32.xlu0 %v446, 5
        %v789 = vpop.permute.xlu0 %788
        %790 = vrot.lane.b32.xlu0 %v447, 5
        %v791 = vpop.permute.xlu0 %790
        %792 = vrot.lane.b32.xlu0 %v448, 5
        %v793 = vpop.permute.xlu0 %792
        %794 = vrot.lane.b32.xlu0 %v449, 5
        %v795 = vpop.permute.xlu0 %794
        %796 = vrot.lane.b32.xlu0 %v450, 5
        %v797 = vpop.permute.xlu0 %796
        %v798 = vsel %vm763, %v787, %v789
        %v799 = vsel %vm763, %v789, %v791
        %v800 = vsel %vm763, %v793, %v795
        %v801 = vsel %vm763, %v795, %v797
        %v808 = vadd.f32 %v739, %v787
        %v809 = vadd.f32 %v740, %v798
        %v810 = vadd.f32 %v741, %v799
        %v811 = vadd.f32 %v742, %v793
        %v812 = vadd.f32 %v743, %v800
        %v813 = vadd.f32 %v744, %v801
        %815 = vset.pattern.permute.xlu0 0
        %816 = vperm.xlu0 %815, %v403
        %v817 = vpop.permute.xlu0 %816
        %820 = vset.pattern.permute.xlu0 0
        %821 = vperm.xlu0 %820, %v404
        %v822 = vpop.permute.xlu0 %821
        %v824 = vmul.f32 %v774, %v817
        %v825 = vmul.f32 %v775, %v817
        %v826 = vmul.f32 %v776, %v817
        %v827 = vmul.f32 %v777, %v822
        %v828 = vmul.f32 %v778, %v822
        %v829 = vmul.f32 %v779, %v822
        %v830 = vand.u32 2147483647, %v824
        %vm831 = vcmp.le.f32.partialorder %v830, 0.7853982
        %vm832 = vcmp.lt.s32.totalorder %v824, 0
        %v833 = vand.u32 %v824, 2139095040
        %v834 = vshrl.u32 %v833, 23
        %v835 = vsub.s32 %v834, 127
        %v836 = vand.u32 2147483647, %v824
        %v837 = vand.u32 %v836, 8388607
        %v838 = vor.u32 %v837, 8388608
        %v839 = vsub.s32 0, %v838
        %v840 = vadd.s32 %v835, 1
        %vm841 = vcmp.gt.s32.totalorder %v840, 0
        %v842 = vsel %vm841, %v840, 0
        %v843 = vshrl.u32 %v842, 5
        %v844 = vand.u32 %v842, 31
        %v845 = vsub.s32 32, %v844
        %v846 = vshrl.u32 683565275, %v845
        %v847 = vshll.u32 683565275, %v844
        %v848 = vshrl.u32 2475754826, %v845
        %v849 = vor.u32 %v847, %v848
        %v850 = vshll.u32 2475754826, %v844
        %v851 = vshrl.u32 2131351028, %v845
        %v852 = vor.u32 %v850, %v851
        %v853 = vshll.u32 2131351028, %v844
        %v854 = vshrl.u32 2102212464, %v845
        %v855 = vor.u32 %v853, %v854
        %v856 = vshll.u32 2102212464, %v844
        %v857 = vshrl.u32 920167782, %v845
        %v858 = vor.u32 %v856, %v857
        %v859 = vshll.u32 920167782, %v844
        %v860 = vshrl.u32 1326507024, %v845
        %v861 = vor.u32 %v859, %v860
        %vm862 = vcmp.lt.s32.totalorder %v843, 1
        %vm863 = vcmp.lt.s32.totalorder %v843, 2
        %vm864 = vcmp.lt.s32.totalorder %v843, 3
        %vm865 = vcmp.lt.s32.totalorder %v843, 4
        %v866 = vsel %vm862, %v846, %v849
        %v867 = vsel %vm865, %v855, 2102212464
        %v868 = vsel %vm864, %v852, %v867
        %v869 = vsel %vm863, %v866, %v868
        %v870 = vsel %vm862, %v849, %v852
        %v871 = vsel %vm865, %v858, 920167782
        %v872 = vsel %vm864, %v855, %v871
        %v873 = vsel %vm863, %v870, %v872
        %v874 = vsel %vm862, %v852, %v855
        %v875 = vsel %vm865, %v861, 1326507024
        %v876 = vsel %vm864, %v858, %v875
        %v877 = vsel %vm863, %v874, %v876
        %v878 = vshll.u32 %v838, 8
        %v879 = vand.u32 %v878, 65535
        %v880 = vshrl.u32 %v878, 16
        %v881 = vand.u32 %v877, 65535
        %v882 = vshrl.u32 %v877, 16
        %v883 = vmul.u32 %v879, %v881
        %v884 = vmul.u32 %v879, %v882
        %v885 = vmul.u32 %v880, %v881
        %v886 = vmul.u32 %v880, %v882
        %v887 = vshll.u32 %v884, 16
        %v888 = vshrl.u32 %v884, 16
        %v889 = vshll.u32 %v885, 16
        %v890 = vshrl.u32 %v885, 16
        %vm891 = vc.u32 %v883, %v887
        %v892 = vsel %vm891, 1, 0
        %v893 = vadd.s32 %v883, %v887
        %v894 = vadd.s32 %v886, %v892
        %vm895 = vc.u32 %v893, %v889
        %v896 = vsel %vm895, 1, 0
        %v897 = vadd.s32 %v893, %v889
        %v898 = vadd.s32 %v894, %v896
        %v899 = vadd.s32 %v898, %v888
        %v900 = vadd.s32 %v899, %v890
        %v901 = vand.u32 %v878, 65535
        %v902 = vshrl.u32 %v878, 16
        %v903 = vand.u32 %v873, 65535
        %v904 = vshrl.u32 %v873, 16
        %v905 = vmul.u32 %v901, %v903
        %v906 = vmul.u32 %v901, %v904
        %v907 = vmul.u32 %v902, %v903
        %v908 = vmul.u32 %v902, %v904
        %v909 = vshll.u32 %v906, 16
        %v910 = vshrl.u32 %v906, 16
        %v911 = vshll.u32 %v907, 16
        %v912 = vshrl.u32 %v907, 16
        %vm913 = vc.u32 %v905, %v909
        %v914 = vsel %vm913, 1, 0
        %v915 = vadd.s32 %v905, %v909
        %v916 = vadd.s32 %v908, %v914
        %vm917 = vc.u32 %v915, %v911
        %v918 = vsel %vm917, 1, 0
        %v919 = vadd.s32 %v915, %v911
        %v920 = vadd.s32 %v916, %v918
        %v921 = vadd.s32 %v920, %v910
        %v922 = vadd.s32 %v921, %v912
        %v923 = vmul.u32 %v878, %v869
        %v924 = vadd.s32 %v900, %v919
        %vm925 = vc.u32 %v900, %v919
        %v926 = vadd.s32 %v922, 1
        %v927 = vsel %vm925, %v926, %v922
        %v928 = vadd.s32 %v923, %v927
        %v929 = vadd.s32 %v928, 536870912
        %v930 = vshrl.u32 %v929, 30
        %v931 = vshll.u32 %v930, 30
        %v932 = vsub.s32 %v928, %v931
        %vm933 = vcmp.lt.s32.totalorder %v932, 0
        %v934 = vsub.s32 0, %v932
        %v935 = vsel %vm933, %v934, %v932
        %v936 = vclz %v935
        %v937 = vsub.s32 %v936, 2
        %vm938 = vcmp.gt.s32.totalorder 0, %v937
        %v939 = vsel %vm938, 0, %v937
        %v940 = vsub.s32 32, %v939
        %v941 = vshll.u32 %v932, %v939
        %v942 = vshrl.u32 %v924, %v940
        %v943 = vor.u32 %v941, %v942
        %v944 = vsub.s32 4294967266, %v939
        %v945 = vadd.s32 %v944, 127
        %v946 = vshll.u32 %v945, 23
        %v947 = vor.u32 4788187, %v946
        %v948 = vand.u32 2147483647, %v947
        %v950 = vcvt.s32.f32 %v943
        %v951 = vmul.f32 %v950, %v948
        %v952 = vxor.u32 %v951, 2147483648
        %v953 = vsel %vm832, %v952, %v951
        %v954 = vsub.s32 4, %v930
        %v955 = vsel %vm832, %v954, %v930
        %v956 = vsel %vm831, %v824, %v953
        %v957 = vsel %vm831, 0, %v955
        %v958 = vmul.f32 %v956, %v956
        %v959 = vmul.f32 %v958, -0.001358992
        %v960 = vadd.f32 %v959, 0.041655596
        %v961 = vmul.f32 %v958, %v960
        %v962 = vadd.f32 %v961, -0.4999988
        %v963 = vmul.f32 %v958, %v962
        %v964 = vadd.f32 1.0, %v963
        %v965 = vmul.f32 %v956, %v956
        %v966 = vmul.f32 %v965, -0.00019511016
        %v967 = vadd.f32 %v966, 0.008332121
        %v968 = vmul.f32 %v965, %v967
        %v969 = vadd.f32 %v968, -0.16666654
        %v970 = vmul.f32 %v965, %v969
        %v971 = vadd.f32 %v970, 1.0
        %v972 = vmul.f32 %v971, %v956
        %vm973 = vweird.f32 %v824
        %v974 = vadd.s32 %v957, 3
        %v975 = vand.u32 %v974, 3
        %vm976 = vcmp.lt.s32.totalorder %v975, 2
        %vm977 = vcmp.eq.s32.totalorder %v975, 0
        %v978 = vxor.u32 %v972, 2147483648
        %v979 = vsel %vm977, %v964, %v978
        %vm980 = vcmp.eq.s32.totalorder %v975, 2
        %v981 = vxor.u32 %v964, 2147483648
        %v982 = vsel %vm980, %v981, %v972
        %v983 = vsel %vm976, %v979, %v982
        %v984 = vsel %vm973, nan, %v983
        %v985 = vand.u32 2147483647, %v825
        %vm986 = vcmp.le.f32.partialorder %v985, 0.7853982
        %vm987 = vcmp.lt.s32.totalorder %v825, 0
        %v988 = vand.u32 %v825, 2139095040
        %v989 = vshrl.u32 %v988, 23
        %v990 = vsub.s32 %v989, 127
        %v991 = vand.u32 2147483647, %v825
        %v992 = vand.u32 %v991, 8388607
        %v993 = vor.u32 %v992, 8388608
        %v994 = vsub.s32 0, %v993
        %v995 = vadd.s32 %v990, 1
        %vm996 = vcmp.gt.s32.totalorder %v995, 0
        %v997 = vsel %vm996, %v995, 0
        %v998 = vshrl.u32 %v997, 5
        %v999 = vand.u32 %v997, 31
        %v1000 = vsub.s32 32, %v999
        %v1001 = vshrl.u32 683565275, %v1000
        %v1002 = vshll.u32 683565275, %v999
        %v1003 = vshrl.u32 2475754826, %v1000
        %v1004 = vor.u32 %v1002, %v1003
        %v1005 = vshll.u32 2475754826, %v999
        %v1006 = vshrl.u32 2131351028, %v1000
        %v1007 = vor.u32 %v1005, %v1006
        %v1008 = vshll.u32 2131351028, %v999
        %v1009 = vshrl.u32 2102212464, %v1000
        %v1010 = vor.u32 %v1008, %v1009
        %v1011 = vshll.u32 2102212464, %v999
        %v1012 = vshrl.u32 920167782, %v1000
        %v1013 = vor.u32 %v1011, %v1012
        %v1014 = vshll.u32 920167782, %v999
        %v1015 = vshrl.u32 1326507024, %v1000
        %v1016 = vor.u32 %v1014, %v1015
        %vm1017 = vcmp.lt.s32.totalorder %v998, 1
        %vm1018 = vcmp.lt.s32.totalorder %v998, 2
        %vm1019 = vcmp.lt.s32.totalorder %v998, 3
        %vm1020 = vcmp.lt.s32.totalorder %v998, 4
        %v1021 = vsel %vm1017, %v1001, %v1004
        %v1022 = vsel %vm1020, %v1010, 2102212464
        %v1023 = vsel %vm1019, %v1007, %v1022
        %v1024 = vsel %vm1018, %v1021, %v1023
        %v1025 = vsel %vm1017, %v1004, %v1007
        %v1026 = vsel %vm1020, %v1013, 920167782
        %v1027 = vsel %vm1019, %v1010, %v1026
        %v1028 = vsel %vm1018, %v1025, %v1027
        %v1029 = vsel %vm1017, %v1007, %v1010
        %v1030 = vsel %vm1020, %v1016, 1326507024
        %v1031 = vsel %vm1019, %v1013, %v1030
        %v1032 = vsel %vm1018, %v1029, %v1031
        %v1033 = vshll.u32 %v993, 8
        %v1034 = vand.u32 %v1033, 65535
        %v1035 = vshrl.u32 %v1033, 16
        %v1036 = vand.u32 %v1032, 65535
        %v1037 = vshrl.u32 %v1032, 16
        %v1038 = vmul.u32 %v1034, %v1036
        %v1039 = vmul.u32 %v1034, %v1037
        %v1040 = vmul.u32 %v1035, %v1036
        %v1041 = vmul.u32 %v1035, %v1037
        %v1042 = vshll.u32 %v1039, 16
        %v1043 = vshrl.u32 %v1039, 16
        %v1044 = vshll.u32 %v1040, 16
        %v1045 = vshrl.u32 %v1040, 16
        %vm1046 = vc.u32 %v1038, %v1042
        %v1047 = vsel %vm1046, 1, 0
        %v1048 = vadd.s32 %v1038, %v1042
        %v1049 = vadd.s32 %v1041, %v1047
        %vm1050 = vc.u32 %v1048, %v1044
        %v1051 = vsel %vm1050, 1, 0
        %v1052 = vadd.s32 %v1048, %v1044
        %v1053 = vadd.s32 %v1049, %v1051
        %v1054 = vadd.s32 %v1053, %v1043
        %v1055 = vadd.s32 %v1054, %v1045
        %v1056 = vand.u32 %v1033, 65535
        %v1057 = vshrl.u32 %v1033, 16
        %v1058 = vand.u32 %v1028, 65535
        %v1059 = vshrl.u32 %v1028, 16
        %v1060 = vmul.u32 %v1056, %v1058
        %v1061 = vmul.u32 %v1056, %v1059
        %v1062 = vmul.u32 %v1057, %v1058
        %v1063 = vmul.u32 %v1057, %v1059
        %v1064 = vshll.u32 %v1061, 16
        %v1065 = vshrl.u32 %v1061, 16
        %v1066 = vshll.u32 %v1062, 16
        %v1067 = vshrl.u32 %v1062, 16
        %vm1068 = vc.u32 %v1060, %v1064
        %v1069 = vsel %vm1068, 1, 0
        %v1070 = vadd.s32 %v1060, %v1064
        %v1071 = vadd.s32 %v1063, %v1069
        %vm1072 = vc.u32 %v1070, %v1066
        %v1073 = vsel %vm1072, 1, 0
        %v1074 = vadd.s32 %v1070, %v1066
        %v1075 = vadd.s32 %v1071, %v1073
        %v1076 = vadd.s32 %v1075, %v1065
        %v1077 = vadd.s32 %v1076, %v1067
        %v1078 = vmul.u32 %v1033, %v1024
        %v1079 = vadd.s32 %v1055, %v1074
        %vm1080 = vc.u32 %v1055, %v1074
        %v1081 = vadd.s32 %v1077, 1
        %v1082 = vsel %vm1080, %v1081, %v1077
        %v1083 = vadd.s32 %v1078, %v1082
        %v1084 = vadd.s32 %v1083, 536870912
        %v1085 = vshrl.u32 %v1084, 30
        %v1086 = vshll.u32 %v1085, 30
        %v1087 = vsub.s32 %v1083, %v1086
        %vm1088 = vcmp.lt.s32.totalorder %v1087, 0
        %v1089 = vsub.s32 0, %v1087
        %v1090 = vsel %vm1088, %v1089, %v1087
        %v1091 = vclz %v1090
        %v1092 = vsub.s32 %v1091, 2
        %vm1093 = vcmp.gt.s32.totalorder 0, %v1092
        %v1094 = vsel %vm1093, 0, %v1092
        %v1095 = vsub.s32 32, %v1094
        %v1096 = vshll.u32 %v1087, %v1094
        %v1097 = vshrl.u32 %v1079, %v1095
        %v1098 = vor.u32 %v1096, %v1097
        %v1099 = vsub.s32 4294967266, %v1094
        %v1100 = vadd.s32 %v1099, 127
        %v1101 = vshll.u32 %v1100, 23
        %v1102 = vor.u32 4788187, %v1101
        %v1103 = vand.u32 2147483647, %v1102
        %v1105 = vcvt.s32.f32 %v1098
        %v1106 = vmul.f32 %v1105, %v1103
        %v1107 = vxor.u32 %v1106, 2147483648
        %v1108 = vsel %vm987, %v1107, %v1106
        %v1109 = vsub.s32 4, %v1085
        %v1110 = vsel %vm987, %v1109, %v1085
        %v1111 = vsel %vm986, %v825, %v1108
        %v1112 = vsel %vm986, 0, %v1110
        %v1113 = vmul.f32 %v1111, %v1111
        %v1114 = vmul.f32 %v1113, -0.001358992
        %v1115 = vadd.f32 %v1114, 0.041655596
        %v1116 = vmul.f32 %v1113, %v1115
        %v1117 = vadd.f32 %v1116, -0.4999988
        %v1118 = vmul.f32 %v1113, %v1117
        %v1119 = vadd.f32 1.0, %v1118
        %v1120 = vmul.f32 %v1111, %v1111
        %v1121 = vmul.f32 %v1120, -0.00019511016
        %v1122 = vadd.f32 %v1121, 0.008332121
        %v1123 = vmul.f32 %v1120, %v1122
        %v1124 = vadd.f32 %v1123, -0.16666654
        %v1125 = vmul.f32 %v1120, %v1124
        %v1126 = vadd.f32 %v1125, 1.0
        %v1127 = vmul.f32 %v1126, %v1111
        %vm1128 = vweird.f32 %v825
        %v1129 = vadd.s32 %v1112, 3
        %v1130 = vand.u32 %v1129, 3
        %vm1131 = vcmp.lt.s32.totalorder %v1130, 2
        %vm1132 = vcmp.eq.s32.totalorder %v1130, 0
        %v1133 = vxor.u32 %v1127, 2147483648
        %v1134 = vsel %vm1132, %v1119, %v1133
        %vm1135 = vcmp.eq.s32.totalorder %v1130, 2
        %v1136 = vxor.u32 %v1119, 2147483648
        %v1137 = vsel %vm1135, %v1136, %v1127
        %v1138 = vsel %vm1131, %v1134, %v1137
        %v1139 = vsel %vm1128, nan, %v1138
        %v1140 = vand.u32 2147483647, %v826
        %vm1141 = vcmp.le.f32.partialorder %v1140, 0.7853982
        %vm1142 = vcmp.lt.s32.totalorder %v826, 0
        %v1143 = vand.u32 %v826, 2139095040
        %v1144 = vshrl.u32 %v1143, 23
        %v1145 = vsub.s32 %v1144, 127
        %v1146 = vand.u32 2147483647, %v826
        %v1147 = vand.u32 %v1146, 8388607
        %v1148 = vor.u32 %v1147, 8388608
        %v1149 = vsub.s32 0, %v1148
        %v1150 = vadd.s32 %v1145, 1
        %vm1151 = vcmp.gt.s32.totalorder %v1150, 0
        %v1152 = vsel %vm1151, %v1150, 0
        %v1153 = vshrl.u32 %v1152, 5
        %v1154 = vand.u32 %v1152, 31
        %v1155 = vsub.s32 32, %v1154
        %v1156 = vshrl.u32 683565275, %v1155
        %v1157 = vshll.u32 683565275, %v1154
        %v1158 = vshrl.u32 2475754826, %v1155
        %v1159 = vor.u32 %v1157, %v1158
        %v1160 = vshll.u32 2475754826, %v1154
        %v1161 = vshrl.u32 2131351028, %v1155
        %v1162 = vor.u32 %v1160, %v1161
        %v1163 = vshll.u32 2131351028, %v1154
        %v1164 = vshrl.u32 2102212464, %v1155
        %v1165 = vor.u32 %v1163, %v1164
        %v1166 = vshll.u32 2102212464, %v1154
        %v1167 = vshrl.u32 920167782, %v1155
        %v1168 = vor.u32 %v1166, %v1167
        %v1169 = vshll.u32 920167782, %v1154
        %v1170 = vshrl.u32 1326507024, %v1155
        %v1171 = vor.u32 %v1169, %v1170
        %vm1172 = vcmp.lt.s32.totalorder %v1153, 1
        %vm1173 = vcmp.lt.s32.totalorder %v1153, 2
        %vm1174 = vcmp.lt.s32.totalorder %v1153, 3
        %vm1175 = vcmp.lt.s32.totalorder %v1153, 4
        %v1176 = vsel %vm1172, %v1156, %v1159
        %v1177 = vsel %vm1175, %v1165, 2102212464
        %v1178 = vsel %vm1174, %v1162, %v1177
        %v1179 = vsel %vm1173, %v1176, %v1178
        %v1180 = vsel %vm1172, %v1159, %v1162
        %v1181 = vsel %vm1175, %v1168, 920167782
        %v1182 = vsel %vm1174, %v1165, %v1181
        %v1183 = vsel %vm1173, %v1180, %v1182
        %v1184 = vsel %vm1172, %v1162, %v1165
        %v1185 = vsel %vm1175, %v1171, 1326507024
        %v1186 = vsel %vm1174, %v1168, %v1185
        %v1187 = vsel %vm1173, %v1184, %v1186
        %v1188 = vshll.u32 %v1148, 8
        %v1189 = vand.u32 %v1188, 65535
        %v1190 = vshrl.u32 %v1188, 16
        %v1191 = vand.u32 %v1187, 65535
        %v1192 = vshrl.u32 %v1187, 16
        %v1193 = vmul.u32 %v1189, %v1191
        %v1194 = vmul.u32 %v1189, %v1192
        %v1195 = vmul.u32 %v1190, %v1191
        %v1196 = vmul.u32 %v1190, %v1192
        %v1197 = vshll.u32 %v1194, 16
        %v1198 = vshrl.u32 %v1194, 16
        %v1199 = vshll.u32 %v1195, 16
        %v1200 = vshrl.u32 %v1195, 16
        %vm1201 = vc.u32 %v1193, %v1197
        %v1202 = vsel %vm1201, 1, 0
        %v1203 = vadd.s32 %v1193, %v1197
        %v1204 = vadd.s32 %v1196, %v1202
        %vm1205 = vc.u32 %v1203, %v1199
        %v1206 = vsel %vm1205, 1, 0
        %v1207 = vadd.s32 %v1203, %v1199
        %v1208 = vadd.s32 %v1204, %v1206
        %v1209 = vadd.s32 %v1208, %v1198
        %v1210 = vadd.s32 %v1209, %v1200
        %v1211 = vand.u32 %v1188, 65535
        %v1212 = vshrl.u32 %v1188, 16
        %v1213 = vand.u32 %v1183, 65535
        %v1214 = vshrl.u32 %v1183, 16
        %v1215 = vmul.u32 %v1211, %v1213
        %v1216 = vmul.u32 %v1211, %v1214
        %v1217 = vmul.u32 %v1212, %v1213
        %v1218 = vmul.u32 %v1212, %v1214
        %v1219 = vshll.u32 %v1216, 16
        %v1220 = vshrl.u32 %v1216, 16
        %v1221 = vshll.u32 %v1217, 16
        %v1222 = vshrl.u32 %v1217, 16
        %vm1223 = vc.u32 %v1215, %v1219
        %v1224 = vsel %vm1223, 1, 0
        %v1225 = vadd.s32 %v1215, %v1219
        %v1226 = vadd.s32 %v1218, %v1224
        %vm1227 = vc.u32 %v1225, %v1221
        %v1228 = vsel %vm1227, 1, 0
        %v1229 = vadd.s32 %v1225, %v1221
        %v1230 = vadd.s32 %v1226, %v1228
        %v1231 = vadd.s32 %v1230, %v1220
        %v1232 = vadd.s32 %v1231, %v1222
        %v1233 = vmul.u32 %v1188, %v1179
        %v1234 = vadd.s32 %v1210, %v1229
        %vm1235 = vc.u32 %v1210, %v1229
        %v1236 = vadd.s32 %v1232, 1
        %v1237 = vsel %vm1235, %v1236, %v1232
        %v1238 = vadd.s32 %v1233, %v1237
        %v1239 = vadd.s32 %v1238, 536870912
        %v1240 = vshrl.u32 %v1239, 30
        %v1241 = vshll.u32 %v1240, 30
        %v1242 = vsub.s32 %v1238, %v1241
        %vm1243 = vcmp.lt.s32.totalorder %v1242, 0
        %v1244 = vsub.s32 0, %v1242
        %v1245 = vsel %vm1243, %v1244, %v1242
        %v1246 = vclz %v1245
        %v1247 = vsub.s32 %v1246, 2
        %vm1248 = vcmp.gt.s32.totalorder 0, %v1247
        %v1249 = vsel %vm1248, 0, %v1247
        %v1250 = vsub.s32 32, %v1249
        %v1251 = vshll.u32 %v1242, %v1249
        %v1252 = vshrl.u32 %v1234, %v1250
        %v1253 = vor.u32 %v1251, %v1252
        %v1254 = vsub.s32 4294967266, %v1249
        %v1255 = vadd.s32 %v1254, 127
        %v1256 = vshll.u32 %v1255, 23
        %v1257 = vor.u32 4788187, %v1256
        %v1258 = vand.u32 2147483647, %v1257
        %v1260 = vcvt.s32.f32 %v1253
        %v1261 = vmul.f32 %v1260, %v1258
        %v1262 = vxor.u32 %v1261, 2147483648
        %v1263 = vsel %vm1142, %v1262, %v1261
        %v1264 = vsub.s32 4, %v1240
        %v1265 = vsel %vm1142, %v1264, %v1240
        %v1266 = vsel %vm1141, %v826, %v1263
        %v1267 = vsel %vm1141, 0, %v1265
        %v1268 = vmul.f32 %v1266, %v1266
        %v1269 = vmul.f32 %v1268, -0.001358992
        %v1270 = vadd.f32 %v1269, 0.041655596
        %v1271 = vmul.f32 %v1268, %v1270
        %v1272 = vadd.f32 %v1271, -0.4999988
        %v1273 = vmul.f32 %v1268, %v1272
        %v1274 = vadd.f32 1.0, %v1273
        %v1275 = vmul.f32 %v1266, %v1266
        %v1276 = vmul.f32 %v1275, -0.00019511016
        %v1277 = vadd.f32 %v1276, 0.008332121
        %v1278 = vmul.f32 %v1275, %v1277
        %v1279 = vadd.f32 %v1278, -0.16666654
        %v1280 = vmul.f32 %v1275, %v1279
        %v1281 = vadd.f32 %v1280, 1.0
        %v1282 = vmul.f32 %v1281, %v1266
        %vm1283 = vweird.f32 %v826
        %v1284 = vadd.s32 %v1267, 3
        %v1285 = vand.u32 %v1284, 3
        %vm1286 = vcmp.lt.s32.totalorder %v1285, 2
        %vm1287 = vcmp.eq.s32.totalorder %v1285, 0
        %v1288 = vxor.u32 %v1282, 2147483648
        %v1289 = vsel %vm1287, %v1274, %v1288
        %vm1290 = vcmp.eq.s32.totalorder %v1285, 2
        %v1291 = vxor.u32 %v1274, 2147483648
        %v1292 = vsel %vm1290, %v1291, %v1282
        %v1293 = vsel %vm1286, %v1289, %v1292
        %v1294 = vsel %vm1283, nan, %v1293
        %v1295 = vand.u32 2147483647, %v827
        %vm1296 = vcmp.le.f32.partialorder %v1295, 0.7853982
        %vm1297 = vcmp.lt.s32.totalorder %v827, 0
        %v1298 = vand.u32 %v827, 2139095040
        %v1299 = vshrl.u32 %v1298, 23
        %v1300 = vsub.s32 %v1299, 127
        %v1301 = vand.u32 2147483647, %v827
        %v1302 = vand.u32 %v1301, 8388607
        %v1303 = vor.u32 %v1302, 8388608
        %v1304 = vsub.s32 0, %v1303
        %v1305 = vadd.s32 %v1300, 1
        %vm1306 = vcmp.gt.s32.totalorder %v1305, 0
        %v1307 = vsel %vm1306, %v1305, 0
        %v1308 = vshrl.u32 %v1307, 5
        %v1309 = vand.u32 %v1307, 31
        %v1310 = vsub.s32 32, %v1309
        %v1311 = vshrl.u32 683565275, %v1310
        %v1312 = vshll.u32 683565275, %v1309
        %v1313 = vshrl.u32 2475754826, %v1310
        %v1314 = vor.u32 %v1312, %v1313
        %v1315 = vshll.u32 2475754826, %v1309
        %v1316 = vshrl.u32 2131351028, %v1310
        %v1317 = vor.u32 %v1315, %v1316
        %v1318 = vshll.u32 2131351028, %v1309
        %v1319 = vshrl.u32 2102212464, %v1310
        %v1320 = vor.u32 %v1318, %v1319
        %v1321 = vshll.u32 2102212464, %v1309
        %v1322 = vshrl.u32 920167782, %v1310
        %v1323 = vor.u32 %v1321, %v1322
        %v1324 = vshll.u32 920167782, %v1309
        %v1325 = vshrl.u32 1326507024, %v1310
        %v1326 = vor.u32 %v1324, %v1325
        %vm1327 = vcmp.lt.s32.totalorder %v1308, 1
        %vm1328 = vcmp.lt.s32.totalorder %v1308, 2
        %vm1329 = vcmp.lt.s32.totalorder %v1308, 3
        %vm1330 = vcmp.lt.s32.totalorder %v1308, 4
        %v1331 = vsel %vm1327, %v1311, %v1314
        %v1332 = vsel %vm1330, %v1320, 2102212464
        %v1333 = vsel %vm1329, %v1317, %v1332
        %v1334 = vsel %vm1328, %v1331, %v1333
        %v1335 = vsel %vm1327, %v1314, %v1317
        %v1336 = vsel %vm1330, %v1323, 920167782
        %v1337 = vsel %vm1329, %v1320, %v1336
        %v1338 = vsel %vm1328, %v1335, %v1337
        %v1339 = vsel %vm1327, %v1317, %v1320
        %v1340 = vsel %vm1330, %v1326, 1326507024
        %v1341 = vsel %vm1329, %v1323, %v1340
        %v1342 = vsel %vm1328, %v1339, %v1341
        %v1343 = vshll.u32 %v1303, 8
        %v1344 = vand.u32 %v1343, 65535
        %v1345 = vshrl.u32 %v1343, 16
        %v1346 = vand.u32 %v1342, 65535
        %v1347 = vshrl.u32 %v1342, 16
        %v1348 = vmul.u32 %v1344, %v1346
        %v1349 = vmul.u32 %v1344, %v1347
        %v1350 = vmul.u32 %v1345, %v1346
        %v1351 = vmul.u32 %v1345, %v1347
        %v1352 = vshll.u32 %v1349, 16
        %v1353 = vshrl.u32 %v1349, 16
        %v1354 = vshll.u32 %v1350, 16
        %v1355 = vshrl.u32 %v1350, 16
        %vm1356 = vc.u32 %v1348, %v1352
        %v1357 = vsel %vm1356, 1, 0
        %v1358 = vadd.s32 %v1348, %v1352
        %v1359 = vadd.s32 %v1351, %v1357
        %vm1360 = vc.u32 %v1358, %v1354
        %v1361 = vsel %vm1360, 1, 0
        %v1362 = vadd.s32 %v1358, %v1354
        %v1363 = vadd.s32 %v1359, %v1361
        %v1364 = vadd.s32 %v1363, %v1353
        %v1365 = vadd.s32 %v1364, %v1355
        %v1366 = vand.u32 %v1343, 65535
        %v1367 = vshrl.u32 %v1343, 16
        %v1368 = vand.u32 %v1338, 65535
        %v1369 = vshrl.u32 %v1338, 16
        %v1370 = vmul.u32 %v1366, %v1368
        %v1371 = vmul.u32 %v1366, %v1369
        %v1372 = vmul.u32 %v1367, %v1368
        %v1373 = vmul.u32 %v1367, %v1369
        %v1374 = vshll.u32 %v1371, 16
        %v1375 = vshrl.u32 %v1371, 16
        %v1376 = vshll.u32 %v1372, 16
        %v1377 = vshrl.u32 %v1372, 16
        %vm1378 = vc.u32 %v1370, %v1374
        %v1379 = vsel %vm1378, 1, 0
        %v1380 = vadd.s32 %v1370, %v1374
        %v1381 = vadd.s32 %v1373, %v1379
        %vm1382 = vc.u32 %v1380, %v1376
        %v1383 = vsel %vm1382, 1, 0
        %v1384 = vadd.s32 %v1380, %v1376
        %v1385 = vadd.s32 %v1381, %v1383
        %v1386 = vadd.s32 %v1385, %v1375
        %v1387 = vadd.s32 %v1386, %v1377
        %v1388 = vmul.u32 %v1343, %v1334
        %v1389 = vadd.s32 %v1365, %v1384
        %vm1390 = vc.u32 %v1365, %v1384
        %v1391 = vadd.s32 %v1387, 1
        %v1392 = vsel %vm1390, %v1391, %v1387
        %v1393 = vadd.s32 %v1388, %v1392
        %v1394 = vadd.s32 %v1393, 536870912
        %v1395 = vshrl.u32 %v1394, 30
        %v1396 = vshll.u32 %v1395, 30
        %v1397 = vsub.s32 %v1393, %v1396
        %vm1398 = vcmp.lt.s32.totalorder %v1397, 0
        %v1399 = vsub.s32 0, %v1397
        %v1400 = vsel %vm1398, %v1399, %v1397
        %v1401 = vclz %v1400
        %v1402 = vsub.s32 %v1401, 2
        %vm1403 = vcmp.gt.s32.totalorder 0, %v1402
        %v1404 = vsel %vm1403, 0, %v1402
        %v1405 = vsub.s32 32, %v1404
        %v1406 = vshll.u32 %v1397, %v1404
        %v1407 = vshrl.u32 %v1389, %v1405
        %v1408 = vor.u32 %v1406, %v1407
        %v1409 = vsub.s32 4294967266, %v1404
        %v1410 = vadd.s32 %v1409, 127
        %v1411 = vshll.u32 %v1410, 23
        %v1412 = vor.u32 4788187, %v1411
        %v1413 = vand.u32 2147483647, %v1412
        %v1415 = vcvt.s32.f32 %v1408
        %v1416 = vmul.f32 %v1415, %v1413
        %v1417 = vxor.u32 %v1416, 2147483648
        %v1418 = vsel %vm1297, %v1417, %v1416
        %v1419 = vsub.s32 4, %v1395
        %v1420 = vsel %vm1297, %v1419, %v1395
        %v1421 = vsel %vm1296, %v827, %v1418
        %v1422 = vsel %vm1296, 0, %v1420
        %v1423 = vmul.f32 %v1421, %v1421
        %v1424 = vmul.f32 %v1423, -0.001358992
        %v1425 = vadd.f32 %v1424, 0.041655596
        %v1426 = vmul.f32 %v1423, %v1425
        %v1427 = vadd.f32 %v1426, -0.4999988
        %v1428 = vmul.f32 %v1423, %v1427
        %v1429 = vadd.f32 1.0, %v1428
        %v1430 = vmul.f32 %v1421, %v1421
        %v1431 = vmul.f32 %v1430, -0.00019511016
        %v1432 = vadd.f32 %v1431, 0.008332121
        %v1433 = vmul.f32 %v1430, %v1432
        %v1434 = vadd.f32 %v1433, -0.16666654
        %v1435 = vmul.f32 %v1430, %v1434
        %v1436 = vadd.f32 %v1435, 1.0
        %v1437 = vmul.f32 %v1436, %v1421
        %vm1438 = vweird.f32 %v827
        %v1439 = vadd.s32 %v1422, 3
        %v1440 = vand.u32 %v1439, 3
        %vm1441 = vcmp.lt.s32.totalorder %v1440, 2
        %vm1442 = vcmp.eq.s32.totalorder %v1440, 0
        %v1443 = vxor.u32 %v1437, 2147483648
        %v1444 = vsel %vm1442, %v1429, %v1443
        %vm1445 = vcmp.eq.s32.totalorder %v1440, 2
        %v1446 = vxor.u32 %v1429, 2147483648
        %v1447 = vsel %vm1445, %v1446, %v1437
        %v1448 = vsel %vm1441, %v1444, %v1447
        %v1449 = vsel %vm1438, nan, %v1448
        %v1450 = vand.u32 2147483647, %v828
        %vm1451 = vcmp.le.f32.partialorder %v1450, 0.7853982
        %vm1452 = vcmp.lt.s32.totalorder %v828, 0
        %v1453 = vand.u32 %v828, 2139095040
        %v1454 = vshrl.u32 %v1453, 23
        %v1455 = vsub.s32 %v1454, 127
        %v1456 = vand.u32 2147483647, %v828
        %v1457 = vand.u32 %v1456, 8388607
        %v1458 = vor.u32 %v1457, 8388608
        %v1459 = vsub.s32 0, %v1458
        %v1460 = vadd.s32 %v1455, 1
        %vm1461 = vcmp.gt.s32.totalorder %v1460, 0
        %v1462 = vsel %vm1461, %v1460, 0
        %v1463 = vshrl.u32 %v1462, 5
        %v1464 = vand.u32 %v1462, 31
        %v1465 = vsub.s32 32, %v1464
        %v1466 = vshrl.u32 683565275, %v1465
        %v1467 = vshll.u32 683565275, %v1464
        %v1468 = vshrl.u32 2475754826, %v1465
        %v1469 = vor.u32 %v1467, %v1468
        %v1470 = vshll.u32 2475754826, %v1464
        %v1471 = vshrl.u32 2131351028, %v1465
        %v1472 = vor.u32 %v1470, %v1471
        %v1473 = vshll.u32 2131351028, %v1464
        %v1474 = vshrl.u32 2102212464, %v1465
        %v1475 = vor.u32 %v1473, %v1474
        %v1476 = vshll.u32 2102212464, %v1464
        %v1477 = vshrl.u32 920167782, %v1465
        %v1478 = vor.u32 %v1476, %v1477
        %v1479 = vshll.u32 920167782, %v1464
        %v1480 = vshrl.u32 1326507024, %v1465
        %v1481 = vor.u32 %v1479, %v1480
        %vm1482 = vcmp.lt.s32.totalorder %v1463, 1
        %vm1483 = vcmp.lt.s32.totalorder %v1463, 2
        %vm1484 = vcmp.lt.s32.totalorder %v1463, 3
        %vm1485 = vcmp.lt.s32.totalorder %v1463, 4
        %v1486 = vsel %vm1482, %v1466, %v1469
        %v1487 = vsel %vm1485, %v1475, 2102212464
        %v1488 = vsel %vm1484, %v1472, %v1487
        %v1489 = vsel %vm1483, %v1486, %v1488
        %v1490 = vsel %vm1482, %v1469, %v1472
        %v1491 = vsel %vm1485, %v1478, 920167782
        %v1492 = vsel %vm1484, %v1475, %v1491
        %v1493 = vsel %vm1483, %v1490, %v1492
        %v1494 = vsel %vm1482, %v1472, %v1475
        %v1495 = vsel %vm1485, %v1481, 1326507024
        %v1496 = vsel %vm1484, %v1478, %v1495
        %v1497 = vsel %vm1483, %v1494, %v1496
        %v1498 = vshll.u32 %v1458, 8
        %v1499 = vand.u32 %v1498, 65535
        %v1500 = vshrl.u32 %v1498, 16
        %v1501 = vand.u32 %v1497, 65535
        %v1502 = vshrl.u32 %v1497, 16
        %v1503 = vmul.u32 %v1499, %v1501
        %v1504 = vmul.u32 %v1499, %v1502
        %v1505 = vmul.u32 %v1500, %v1501
        %v1506 = vmul.u32 %v1500, %v1502
        %v1507 = vshll.u32 %v1504, 16
        %v1508 = vshrl.u32 %v1504, 16
        %v1509 = vshll.u32 %v1505, 16
        %v1510 = vshrl.u32 %v1505, 16
        %vm1511 = vc.u32 %v1503, %v1507
        %v1512 = vsel %vm1511, 1, 0
        %v1513 = vadd.s32 %v1503, %v1507
        %v1514 = vadd.s32 %v1506, %v1512
        %vm1515 = vc.u32 %v1513, %v1509
        %v1516 = vsel %vm1515, 1, 0
        %v1517 = vadd.s32 %v1513, %v1509
        %v1518 = vadd.s32 %v1514, %v1516
        %v1519 = vadd.s32 %v1518, %v1508
        %v1520 = vadd.s32 %v1519, %v1510
        %v1521 = vand.u32 %v1498, 65535
        %v1522 = vshrl.u32 %v1498, 16
        %v1523 = vand.u32 %v1493, 65535
        %v1524 = vshrl.u32 %v1493, 16
        %v1525 = vmul.u32 %v1521, %v1523
        %v1526 = vmul.u32 %v1521, %v1524
        %v1527 = vmul.u32 %v1522, %v1523
        %v1528 = vmul.u32 %v1522, %v1524
        %v1529 = vshll.u32 %v1526, 16
        %v1530 = vshrl.u32 %v1526, 16
        %v1531 = vshll.u32 %v1527, 16
        %v1532 = vshrl.u32 %v1527, 16
        %vm1533 = vc.u32 %v1525, %v1529
        %v1534 = vsel %vm1533, 1, 0
        %v1535 = vadd.s32 %v1525, %v1529
        %v1536 = vadd.s32 %v1528, %v1534
        %vm1537 = vc.u32 %v1535, %v1531
        %v1538 = vsel %vm1537, 1, 0
        %v1539 = vadd.s32 %v1535, %v1531
        %v1540 = vadd.s32 %v1536, %v1538
        %v1541 = vadd.s32 %v1540, %v1530
        %v1542 = vadd.s32 %v1541, %v1532
        %v1543 = vmul.u32 %v1498, %v1489
        %v1544 = vadd.s32 %v1520, %v1539
        %vm1545 = vc.u32 %v1520, %v1539
        %v1546 = vadd.s32 %v1542, 1
        %v1547 = vsel %vm1545, %v1546, %v1542
        %v1548 = vadd.s32 %v1543, %v1547
        %v1549 = vadd.s32 %v1548, 536870912
        %v1550 = vshrl.u32 %v1549, 30
        %v1551 = vshll.u32 %v1550, 30
        %v1552 = vsub.s32 %v1548, %v1551
        %vm1553 = vcmp.lt.s32.totalorder %v1552, 0
        %v1554 = vsub.s32 0, %v1552
        %v1555 = vsel %vm1553, %v1554, %v1552
        %v1556 = vclz %v1555
        %v1557 = vsub.s32 %v1556, 2
        %vm1558 = vcmp.gt.s32.totalorder 0, %v1557
        %v1559 = vsel %vm1558, 0, %v1557
        %v1560 = vsub.s32 32, %v1559
        %v1561 = vshll.u32 %v1552, %v1559
        %v1562 = vshrl.u32 %v1544, %v1560
        %v1563 = vor.u32 %v1561, %v1562
        %v1564 = vsub.s32 4294967266, %v1559
        %v1565 = vadd.s32 %v1564, 127
        %v1566 = vshll.u32 %v1565, 23
        %v1567 = vor.u32 4788187, %v1566
        %v1568 = vand.u32 2147483647, %v1567
        %v1570 = vcvt.s32.f32 %v1563
        %v1571 = vmul.f32 %v1570, %v1568
        %v1572 = vxor.u32 %v1571, 2147483648
        %v1573 = vsel %vm1452, %v1572, %v1571
        %v1574 = vsub.s32 4, %v1550
        %v1575 = vsel %vm1452, %v1574, %v1550
        %v1576 = vsel %vm1451, %v828, %v1573
        %v1577 = vsel %vm1451, 0, %v1575
        %v1578 = vmul.f32 %v1576, %v1576
        %v1579 = vmul.f32 %v1578, -0.001358992
        %v1580 = vadd.f32 %v1579, 0.041655596
        %v1581 = vmul.f32 %v1578, %v1580
        %v1582 = vadd.f32 %v1581, -0.4999988
        %v1583 = vmul.f32 %v1578, %v1582
        %v1584 = vadd.f32 1.0, %v1583
        %v1585 = vmul.f32 %v1576, %v1576
        %v1586 = vmul.f32 %v1585, -0.00019511016
        %v1587 = vadd.f32 %v1586, 0.008332121
        %v1588 = vmul.f32 %v1585, %v1587
        %v1589 = vadd.f32 %v1588, -0.16666654
        %v1590 = vmul.f32 %v1585, %v1589
        %v1591 = vadd.f32 %v1590, 1.0
        %v1592 = vmul.f32 %v1591, %v1576
        %vm1593 = vweird.f32 %v828
        %v1594 = vadd.s32 %v1577, 3
        %v1595 = vand.u32 %v1594, 3
        %vm1596 = vcmp.lt.s32.totalorder %v1595, 2
        %vm1597 = vcmp.eq.s32.totalorder %v1595, 0
        %v1598 = vxor.u32 %v1592, 2147483648
        %v1599 = vsel %vm1597, %v1584, %v1598
        %vm1600 = vcmp.eq.s32.totalorder %v1595, 2
        %v1601 = vxor.u32 %v1584, 2147483648
        %v1602 = vsel %vm1600, %v1601, %v1592
        %v1603 = vsel %vm1596, %v1599, %v1602
        %v1604 = vsel %vm1593, nan, %v1603
        %v1605 = vand.u32 2147483647, %v829
        %vm1606 = vcmp.le.f32.partialorder %v1605, 0.7853982
        %vm1607 = vcmp.lt.s32.totalorder %v829, 0
        %v1608 = vand.u32 %v829, 2139095040
        %v1609 = vshrl.u32 %v1608, 23
        %v1610 = vsub.s32 %v1609, 127
        %v1611 = vand.u32 2147483647, %v829
        %v1612 = vand.u32 %v1611, 8388607
        %v1613 = vor.u32 %v1612, 8388608
        %v1614 = vsub.s32 0, %v1613
        %v1615 = vadd.s32 %v1610, 1
        %vm1616 = vcmp.gt.s32.totalorder %v1615, 0
        %v1617 = vsel %vm1616, %v1615, 0
        %v1618 = vshrl.u32 %v1617, 5
        %v1619 = vand.u32 %v1617, 31
        %v1620 = vsub.s32 32, %v1619
        %v1621 = vshrl.u32 683565275, %v1620
        %v1622 = vshll.u32 683565275, %v1619
        %v1623 = vshrl.u32 2475754826, %v1620
        %v1624 = vor.u32 %v1622, %v1623
        %v1625 = vshll.u32 2475754826, %v1619
        %v1626 = vshrl.u32 2131351028, %v1620
        %v1627 = vor.u32 %v1625, %v1626
        %v1628 = vshll.u32 2131351028, %v1619
        %v1629 = vshrl.u32 2102212464, %v1620
        %v1630 = vor.u32 %v1628, %v1629
        %v1631 = vshll.u32 2102212464, %v1619
        %v1632 = vshrl.u32 920167782, %v1620
        %v1633 = vor.u32 %v1631, %v1632
        %v1634 = vshll.u32 920167782, %v1619
        %v1635 = vshrl.u32 1326507024, %v1620
        %v1636 = vor.u32 %v1634, %v1635
        %vm1637 = vcmp.lt.s32.totalorder %v1618, 1
        %vm1638 = vcmp.lt.s32.totalorder %v1618, 2
        %vm1639 = vcmp.lt.s32.totalorder %v1618, 3
        %vm1640 = vcmp.lt.s32.totalorder %v1618, 4
        %v1641 = vsel %vm1637, %v1621, %v1624
        %v1642 = vsel %vm1640, %v1630, 2102212464
        %v1643 = vsel %vm1639, %v1627, %v1642
        %v1644 = vsel %vm1638, %v1641, %v1643
        %v1645 = vsel %vm1637, %v1624, %v1627
        %v1646 = vsel %vm1640, %v1633, 920167782
        %v1647 = vsel %vm1639, %v1630, %v1646
        %v1648 = vsel %vm1638, %v1645, %v1647
        %v1649 = vsel %vm1637, %v1627, %v1630
        %v1650 = vsel %vm1640, %v1636, 1326507024
        %v1651 = vsel %vm1639, %v1633, %v1650
        %v1652 = vsel %vm1638, %v1649, %v1651
        %v1653 = vshll.u32 %v1613, 8
        %v1654 = vand.u32 %v1653, 65535
        %v1655 = vshrl.u32 %v1653, 16
        %v1656 = vand.u32 %v1652, 65535
        %v1657 = vshrl.u32 %v1652, 16
        %v1658 = vmul.u32 %v1654, %v1656
        %v1659 = vmul.u32 %v1654, %v1657
        %v1660 = vmul.u32 %v1655, %v1656
        %v1661 = vmul.u32 %v1655, %v1657
        %v1662 = vshll.u32 %v1659, 16
        %v1663 = vshrl.u32 %v1659, 16
        %v1664 = vshll.u32 %v1660, 16
        %v1665 = vshrl.u32 %v1660, 16
        %vm1666 = vc.u32 %v1658, %v1662
        %v1667 = vsel %vm1666, 1, 0
        %v1668 = vadd.s32 %v1658, %v1662
        %v1669 = vadd.s32 %v1661, %v1667
        %vm1670 = vc.u32 %v1668, %v1664
        %v1671 = vsel %vm1670, 1, 0
        %v1672 = vadd.s32 %v1668, %v1664
        %v1673 = vadd.s32 %v1669, %v1671
        %v1674 = vadd.s32 %v1673, %v1663
        %v1675 = vadd.s32 %v1674, %v1665
        %v1676 = vand.u32 %v1653, 65535
        %v1677 = vshrl.u32 %v1653, 16
        %v1678 = vand.u32 %v1648, 65535
        %v1679 = vshrl.u32 %v1648, 16
        %v1680 = vmul.u32 %v1676, %v1678
        %v1681 = vmul.u32 %v1676, %v1679
        %v1682 = vmul.u32 %v1677, %v1678
        %v1683 = vmul.u32 %v1677, %v1679
        %v1684 = vshll.u32 %v1681, 16
        %v1685 = vshrl.u32 %v1681, 16
        %v1686 = vshll.u32 %v1682, 16
        %v1687 = vshrl.u32 %v1682, 16
        %vm1688 = vc.u32 %v1680, %v1684
        %v1689 = vsel %vm1688, 1, 0
        %v1690 = vadd.s32 %v1680, %v1684
        %v1691 = vadd.s32 %v1683, %v1689
        %vm1692 = vc.u32 %v1690, %v1686
        %v1693 = vsel %vm1692, 1, 0
        %v1694 = vadd.s32 %v1690, %v1686
        %v1695 = vadd.s32 %v1691, %v1693
        %v1696 = vadd.s32 %v1695, %v1685
        %v1697 = vadd.s32 %v1696, %v1687
        %v1698 = vmul.u32 %v1653, %v1644
        %v1699 = vadd.s32 %v1675, %v1694
        %vm1700 = vc.u32 %v1675, %v1694
        %v1701 = vadd.s32 %v1697, 1
        %v1702 = vsel %vm1700, %v1701, %v1697
        %v1703 = vadd.s32 %v1698, %v1702
        %v1704 = vadd.s32 %v1703, 536870912
        %v1705 = vshrl.u32 %v1704, 30
        %v1706 = vshll.u32 %v1705, 30
        %v1707 = vsub.s32 %v1703, %v1706
        %vm1708 = vcmp.lt.s32.totalorder %v1707, 0
        %v1709 = vsub.s32 0, %v1707
        %v1710 = vsel %vm1708, %v1709, %v1707
        %v1711 = vclz %v1710
        %v1712 = vsub.s32 %v1711, 2
        %vm1713 = vcmp.gt.s32.totalorder 0, %v1712
        %v1714 = vsel %vm1713, 0, %v1712
        %v1715 = vsub.s32 32, %v1714
        %v1716 = vshll.u32 %v1707, %v1714
        %v1717 = vshrl.u32 %v1699, %v1715
        %v1718 = vor.u32 %v1716, %v1717
        %v1719 = vsub.s32 4294967266, %v1714
        %v1720 = vadd.s32 %v1719, 127
        %v1721 = vshll.u32 %v1720, 23
        %v1722 = vor.u32 4788187, %v1721
        %v1723 = vand.u32 2147483647, %v1722
        %v1725 = vcvt.s32.f32 %v1718
        %v1726 = vmul.f32 %v1725, %v1723
        %v1727 = vxor.u32 %v1726, 2147483648
        %v1728 = vsel %vm1607, %v1727, %v1726
        %v1729 = vsub.s32 4, %v1705
        %v1730 = vsel %vm1607, %v1729, %v1705
        %v1731 = vsel %vm1606, %v829, %v1728
        %v1732 = vsel %vm1606, 0, %v1730
        %v1733 = vmul.f32 %v1731, %v1731
        %v1734 = vmul.f32 %v1733, -0.001358992
        %v1735 = vadd.f32 %v1734, 0.041655596
        %v1736 = vmul.f32 %v1733, %v1735
        %v1737 = vadd.f32 %v1736, -0.4999988
        %v1738 = vmul.f32 %v1733, %v1737
        %v1739 = vadd.f32 1.0, %v1738
        %v1740 = vmul.f32 %v1731, %v1731
        %v1741 = vmul.f32 %v1740, -0.00019511016
        %v1742 = vadd.f32 %v1741, 0.008332121
        %v1743 = vmul.f32 %v1740, %v1742
        %v1744 = vadd.f32 %v1743, -0.16666654
        %v1745 = vmul.f32 %v1740, %v1744
        %v1746 = vadd.f32 %v1745, 1.0
        %v1747 = vmul.f32 %v1746, %v1731
        %vm1748 = vweird.f32 %v829
        %v1749 = vadd.s32 %v1732, 3
        %v1750 = vand.u32 %v1749, 3
        %vm1751 = vcmp.lt.s32.totalorder %v1750, 2
        %vm1752 = vcmp.eq.s32.totalorder %v1750, 0
        %v1753 = vxor.u32 %v1747, 2147483648
        %v1754 = vsel %vm1752, %v1739, %v1753
        %vm1755 = vcmp.eq.s32.totalorder %v1750, 2
        %v1756 = vxor.u32 %v1739, 2147483648
        %v1757 = vsel %vm1755, %v1756, %v1747
        %v1758 = vsel %vm1751, %v1754, %v1757
        %v1759 = vsel %vm1748, nan, %v1758
        %v1760 = vmul.f32 %v984, %v984
        %v1761 = vmul.f32 %v1139, %v1139
        %v1762 = vmul.f32 %v1294, %v1294
        %v1763 = vmul.f32 %v1449, %v1449
        %v1764 = vmul.f32 %v1604, %v1604
        %v1765 = vmul.f32 %v1759, %v1759
        %1767 = vset.pattern.permute.xlu0 0
        %1768 = vperm.xlu0 %1767, %v423
        %v1769 = vpop.permute.xlu0 %1768
        %1772 = vset.pattern.permute.xlu0 0
        %1773 = vperm.xlu0 %1772, %v438
        %v1774 = vpop.permute.xlu0 %1773
        %v1776 = vmul.f32 %v1769, %v1760
        %v1777 = vmul.f32 %v1769, %v1761
        %v1778 = vmul.f32 %v1769, %v1762
        %v1779 = vmul.f32 %v1774, %v1763
        %v1780 = vmul.f32 %v1774, %v1764
        %v1781 = vmul.f32 %v1774, %v1765
        %v1782 = vadd.f32 %v774, %v1776
        %v1783 = vadd.f32 %v775, %v1777
        %v1784 = vadd.f32 %v776, %v1778
        %v1785 = vadd.f32 %v777, %v1779
        %v1786 = vadd.f32 %v778, %v1780
        %v1787 = vadd.f32 %v779, %v1781
        %v1788 = vmul.f32 %v1782, 0.009389464
        %v1789 = vmul.f32 %v1783, 0.009389464
        %v1790 = vmul.f32 %v1784, 0.009389464
        %v1791 = vmul.f32 %v1785, 0.009389464
        %v1792 = vmul.f32 %v1786, 0.009389464
        %v1793 = vmul.f32 %v1787, 0.009389464
        %v1794 = vadd.f32 %v1788, 0.0
        %v1795 = vadd.f32 %v1789, 0.0
        %v1796 = vadd.f32 %v1790, 0.0
        %v1797 = vadd.f32 %v1791, 0.0
        %v1798 = vadd.f32 %v1792, 0.0
        %v1799 = vadd.f32 %v1793, 0.0
        %v1800 = vmul.f32 %v1782, -0.057657376
        %v1801 = vmul.f32 %v1783, -0.057657376
        %v1802 = vmul.f32 %v1784, -0.057657376
        %v1803 = vmul.f32 %v1785, -0.057657376
        %v1804 = vmul.f32 %v1786, -0.057657376
        %v1805 = vmul.f32 %v1787, -0.057657376
        %1812 = vrot.lane.b32.xlu0 %v1800, 127
        %v1813 = vpop.permute.xlu0 %1812
        %1814 = vrot.lane.b32.xlu0 %v1801, 127
        %v1815 = vpop.permute.xlu0 %1814
        %1816 = vrot.lane.b32.xlu0 %v1802, 127
        %v1817 = vpop.permute.xlu0 %1816
        %1818 = vrot.lane.b32.xlu0 %v1803, 127
        %v1819 = vpop.permute.xlu0 %1818
        %1820 = vrot.lane.b32.xlu0 %v1804, 127
        %v1821 = vpop.permute.xlu0 %1820
        %1822 = vrot.lane.b32.xlu0 %v1805, 127
        %v1823 = vpop.permute.xlu0 %1822
        %vm1824 = vcmask 1039360
        %v1825 = vsel %vm1824, %v1813, %v1815
        %v1826 = vsel %vm1824, %v1815, %v1817
        %v1827 = vsel %vm1824, %v1819, %v1821
        %v1828 = vsel %vm1824, %v1821, %v1823
        %v1835 = vadd.f32 %v1794, %v1825
        %v1836 = vadd.f32 %v1795, %v1826
        %v1837 = vadd.f32 %v1796, %v1817
        %v1838 = vadd.f32 %v1797, %v1827
        %v1839 = vadd.f32 %v1798, %v1828
        %v1840 = vadd.f32 %v1799, %v1823
        %v1841 = vmul.f32 %v1782, 0.4432098
        %v1842 = vmul.f32 %v1783, 0.4432098
        %v1843 = vmul.f32 %v1784, 0.4432098
        %v1844 = vmul.f32 %v1785, 0.4432098
        %v1845 = vmul.f32 %v1786, 0.4432098
        %v1846 = vmul.f32 %v1787, 0.4432098
        %1853 = vrot.lane.b32.xlu0 %v1841, 126
        %v1854 = vpop.permute.xlu0 %1853
        %1855 = vrot.lane.b32.xlu0 %v1842, 126
        %v1856 = vpop.permute.xlu0 %1855
        %1857 = vrot.lane.b32.xlu0 %v1843, 126
        %v1858 = vpop.permute.xlu0 %1857
        %1859 = vrot.lane.b32.xlu0 %v1844, 126
        %v1860 = vpop.permute.xlu0 %1859
        %1861 = vrot.lane.b32.xlu0 %v1845, 126
        %v1862 = vpop.permute.xlu0 %1861
        %1863 = vrot.lane.b32.xlu0 %v1846, 126
        %v1864 = vpop.permute.xlu0 %1863
        %vm1865 = vcmask 1031168
        %v1866 = vsel %vm1865, %v1854, %v1856
        %v1867 = vsel %vm1865, %v1856, %v1858
        %v1868 = vsel %vm1865, %v1860, %v1862
        %v1869 = vsel %vm1865, %v1862, %v1864
        %v1876 = vadd.f32 %v1835, %v1866
        %v1877 = vadd.f32 %v1836, %v1867
        %v1878 = vadd.f32 %v1837, %v1858
        %v1879 = vadd.f32 %v1838, %v1868
        %v1880 = vadd.f32 %v1839, %v1869
        %v1881 = vadd.f32 %v1840, %v1864
        %v1882 = vmul.f32 %v1782, 0.12857261
        %v1883 = vmul.f32 %v1783, 0.12857261
        %v1884 = vmul.f32 %v1784, 0.12857261
        %v1885 = vmul.f32 %v1785, 0.12857261
        %v1886 = vmul.f32 %v1786, 0.12857261
        %v1887 = vmul.f32 %v1787, 0.12857261
        %1894 = vrot.lane.b32.xlu0 %v1882, 125
        %v1895 = vpop.permute.xlu0 %1894
        %1896 = vrot.lane.b32.xlu0 %v1883, 125
        %v1897 = vpop.permute.xlu0 %1896
        %1898 = vrot.lane.b32.xlu0 %v1884, 125
        %v1899 = vpop.permute.xlu0 %1898
        %1900 = vrot.lane.b32.xlu0 %v1885, 125
        %v1901 = vpop.permute.xlu0 %1900
        %1902 = vrot.lane.b32.xlu0 %v1886, 125
        %v1903 = vpop.permute.xlu0 %1902
        %1904 = vrot.lane.b32.xlu0 %v1887, 125
        %v1905 = vpop.permute.xlu0 %1904
        %vm1906 = vcmask 1022976
        %v1907 = vsel %vm1906, %v1895, %v1897
        %v1908 = vsel %vm1906, %v1897, %v1899
        %v1909 = vsel %vm1906, %v1901, %v1903
        %v1910 = vsel %vm1906, %v1903, %v1905
        %v1917 = vadd.f32 %v1876, %v1907
        %v1918 = vadd.f32 %v1877, %v1908
        %v1919 = vadd.f32 %v1878, %v1899
        %v1920 = vadd.f32 %v1879, %v1909
        %v1921 = vadd.f32 %v1880, %v1910
        %v1922 = vadd.f32 %v1881, %v1905
        %v1923 = vmul.f32 %v1782, -0.025543464
        %v1924 = vmul.f32 %v1783, -0.025543464
        %v1925 = vmul.f32 %v1784, -0.025543464
        %v1926 = vmul.f32 %v1785, -0.025543464
        %v1927 = vmul.f32 %v1786, -0.025543464
        %v1928 = vmul.f32 %v1787, -0.025543464
        %1935 = vrot.lane.b32.xlu0 %v1923, 124
        %v1936 = vpop.permute.xlu0 %1935
        %1937 = vrot.lane.b32.xlu0 %v1924, 124
        %v1938 = vpop.permute.xlu0 %1937
        %1939 = vrot.lane.b32.xlu0 %v1925, 124
        %v1940 = vpop.permute.xlu0 %1939
        %1941 = vrot.lane.b32.xlu0 %v1926, 124
        %v1942 = vpop.permute.xlu0 %1941
        %1943 = vrot.lane.b32.xlu0 %v1927, 124
        %v1944 = vpop.permute.xlu0 %1943
        %1945 = vrot.lane.b32.xlu0 %v1928, 124
        %v1946 = vpop.permute.xlu0 %1945
        %vm1947 = vcmask 1014784
        %v1948 = vsel %vm1947, %v1936, %v1938
        %v1949 = vsel %vm1947, %v1938, %v1940
        %v1950 = vsel %vm1947, %v1942, %v1944
        %v1951 = vsel %vm1947, %v1944, %v1946
        %v1958 = vadd.f32 %v1917, %v1948
        %v1959 = vadd.f32 %v1918, %v1949
        %v1960 = vadd.f32 %v1919, %v1940
        %v1961 = vadd.f32 %v1920, %v1950
        %v1962 = vadd.f32 %v1921, %v1951
        %v1963 = vadd.f32 %v1922, %v1946
        %v1964 = vmul.f32 %v1783, 0.0020289666
        %v1965 = vmul.f32 %v1784, 0.0020289666
        %v1966 = vmul.f32 %v1786, 0.0020289666
        %v1967 = vmul.f32 %v1787, 0.0020289666
        %1972 = vrot.lane.b32.xlu0 %v1964, 123
        %v1973 = vpop.permute.xlu0 %1972
        %1974 = vrot.lane.b32.xlu0 %v1965, 123
        %v1975 = vpop.permute.xlu0 %1974
        %1976 = vrot.lane.b32.xlu0 %v1966, 123
        %v1977 = vpop.permute.xlu0 %1976
        %1978 = vrot.lane.b32.xlu0 %v1967, 123
        %v1979 = vpop.permute.xlu0 %1978
        %vm1980 = vcmask 1006592
        %v1981 = vsel %vm1980, %v1973, %v1975
        %v1982 = vsel %vm1980, %v1977, %v1979
        %v1989 = vadd.f32 %v1958, %v1973
        %v1990 = vadd.f32 %v1959, %v1981
        %v1991 = vadd.f32 %v1960, %v1975
        %v1992 = vadd.f32 %v1961, %v1977
        %v1993 = vadd.f32 %v1962, %v1982
        %v1994 = vadd.f32 %v1963, %v1979
        %v1995 = vmul.f32 %v808, %v817
        %v1996 = vmul.f32 %v809, %v817
        %v1997 = vmul.f32 %v810, %v817
        %v1998 = vmul.f32 %v811, %v822
        %v1999 = vmul.f32 %v812, %v822
        %v2000 = vmul.f32 %v813, %v822
        %v2001 = vand.u32 2147483647, %v1995
        %vm2002 = vcmp.le.f32.partialorder %v2001, 0.7853982
        %vm2003 = vcmp.lt.s32.totalorder %v1995, 0
        %v2004 = vand.u32 %v1995, 2139095040
        %v2005 = vshrl.u32 %v2004, 23
        %v2006 = vsub.s32 %v2005, 127
        %v2007 = vand.u32 2147483647, %v1995
        %v2008 = vand.u32 %v2007, 8388607
        %v2009 = vor.u32 %v2008, 8388608
        %v2010 = vsub.s32 0, %v2009
        %v2011 = vadd.s32 %v2006, 1
        %vm2012 = vcmp.gt.s32.totalorder %v2011, 0
        %v2013 = vsel %vm2012, %v2011, 0
        %v2014 = vshrl.u32 %v2013, 5
        %v2015 = vand.u32 %v2013, 31
        %v2016 = vsub.s32 32, %v2015
        %v2017 = vshrl.u32 683565275, %v2016
        %v2018 = vshll.u32 683565275, %v2015
        %v2019 = vshrl.u32 2475754826, %v2016
        %v2020 = vor.u32 %v2018, %v2019
        %v2021 = vshll.u32 2475754826, %v2015
        %v2022 = vshrl.u32 2131351028, %v2016
        %v2023 = vor.u32 %v2021, %v2022
        %v2024 = vshll.u32 2131351028, %v2015
        %v2025 = vshrl.u32 2102212464, %v2016
        %v2026 = vor.u32 %v2024, %v2025
        %v2027 = vshll.u32 2102212464, %v2015
        %v2028 = vshrl.u32 920167782, %v2016
        %v2029 = vor.u32 %v2027, %v2028
        %v2030 = vshll.u32 920167782, %v2015
        %v2031 = vshrl.u32 1326507024, %v2016
        %v2032 = vor.u32 %v2030, %v2031
        %vm2033 = vcmp.lt.s32.totalorder %v2014, 1
        %vm2034 = vcmp.lt.s32.totalorder %v2014, 2
        %vm2035 = vcmp.lt.s32.totalorder %v2014, 3
        %vm2036 = vcmp.lt.s32.totalorder %v2014, 4
        %v2037 = vsel %vm2033, %v2017, %v2020
        %v2038 = vsel %vm2036, %v2026, 2102212464
        %v2039 = vsel %vm2035, %v2023, %v2038
        %v2040 = vsel %vm2034, %v2037, %v2039
        %v2041 = vsel %vm2033, %v2020, %v2023
        %v2042 = vsel %vm2036, %v2029, 920167782
        %v2043 = vsel %vm2035, %v2026, %v2042
        %v2044 = vsel %vm2034, %v2041, %v2043
        %v2045 = vsel %vm2033, %v2023, %v2026
        %v2046 = vsel %vm2036, %v2032, 1326507024
        %v2047 = vsel %vm2035, %v2029, %v2046
        %v2048 = vsel %vm2034, %v2045, %v2047
        %v2049 = vshll.u32 %v2009, 8
        %v2050 = vand.u32 %v2049, 65535
        %v2051 = vshrl.u32 %v2049, 16
        %v2052 = vand.u32 %v2048, 65535
        %v2053 = vshrl.u32 %v2048, 16
        %v2054 = vmul.u32 %v2050, %v2052
        %v2055 = vmul.u32 %v2050, %v2053
        %v2056 = vmul.u32 %v2051, %v2052
        %v2057 = vmul.u32 %v2051, %v2053
        %v2058 = vshll.u32 %v2055, 16
        %v2059 = vshrl.u32 %v2055, 16
        %v2060 = vshll.u32 %v2056, 16
        %v2061 = vshrl.u32 %v2056, 16
        %vm2062 = vc.u32 %v2054, %v2058
        %v2063 = vsel %vm2062, 1, 0
        %v2064 = vadd.s32 %v2054, %v2058
        %v2065 = vadd.s32 %v2057, %v2063
        %vm2066 = vc.u32 %v2064, %v2060
        %v2067 = vsel %vm2066, 1, 0
        %v2068 = vadd.s32 %v2064, %v2060
        %v2069 = vadd.s32 %v2065, %v2067
        %v2070 = vadd.s32 %v2069, %v2059
        %v2071 = vadd.s32 %v2070, %v2061
        %v2072 = vand.u32 %v2049, 65535
        %v2073 = vshrl.u32 %v2049, 16
        %v2074 = vand.u32 %v2044, 65535
        %v2075 = vshrl.u32 %v2044, 16
        %v2076 = vmul.u32 %v2072, %v2074
        %v2077 = vmul.u32 %v2072, %v2075
        %v2078 = vmul.u32 %v2073, %v2074
        %v2079 = vmul.u32 %v2073, %v2075
        %v2080 = vshll.u32 %v2077, 16
        %v2081 = vshrl.u32 %v2077, 16
        %v2082 = vshll.u32 %v2078, 16
        %v2083 = vshrl.u32 %v2078, 16
        %vm2084 = vc.u32 %v2076, %v2080
        %v2085 = vsel %vm2084, 1, 0
        %v2086 = vadd.s32 %v2076, %v2080
        %v2087 = vadd.s32 %v2079, %v2085
        %vm2088 = vc.u32 %v2086, %v2082
        %v2089 = vsel %vm2088, 1, 0
        %v2090 = vadd.s32 %v2086, %v2082
        %v2091 = vadd.s32 %v2087, %v2089
        %v2092 = vadd.s32 %v2091, %v2081
        %v2093 = vadd.s32 %v2092, %v2083
        %v2094 = vmul.u32 %v2049, %v2040
        %v2095 = vadd.s32 %v2071, %v2090
        %vm2096 = vc.u32 %v2071, %v2090
        %v2097 = vadd.s32 %v2093, 1
        %v2098 = vsel %vm2096, %v2097, %v2093
        %v2099 = vadd.s32 %v2094, %v2098
        %v2100 = vadd.s32 %v2099, 536870912
        %v2101 = vshrl.u32 %v2100, 30
        %v2102 = vshll.u32 %v2101, 30
        %v2103 = vsub.s32 %v2099, %v2102
        %vm2104 = vcmp.lt.s32.totalorder %v2103, 0
        %v2105 = vsub.s32 0, %v2103
        %v2106 = vsel %vm2104, %v2105, %v2103
        %v2107 = vclz %v2106
        %v2108 = vsub.s32 %v2107, 2
        %vm2109 = vcmp.gt.s32.totalorder 0, %v2108
        %v2110 = vsel %vm2109, 0, %v2108
        %v2111 = vsub.s32 32, %v2110
        %v2112 = vshll.u32 %v2103, %v2110
        %v2113 = vshrl.u32 %v2095, %v2111
        %v2114 = vor.u32 %v2112, %v2113
        %v2115 = vsub.s32 4294967266, %v2110
        %v2116 = vadd.s32 %v2115, 127
        %v2117 = vshll.u32 %v2116, 23
        %v2118 = vor.u32 4788187, %v2117
        %v2119 = vand.u32 2147483647, %v2118
        %v2121 = vcvt.s32.f32 %v2114
        %v2122 = vmul.f32 %v2121, %v2119
        %v2123 = vxor.u32 %v2122, 2147483648
        %v2124 = vsel %vm2003, %v2123, %v2122
        %v2125 = vsub.s32 4, %v2101
        %v2126 = vsel %vm2003, %v2125, %v2101
        %v2127 = vsel %vm2002, %v1995, %v2124
        %v2128 = vsel %vm2002, 0, %v2126
        %v2129 = vmul.f32 %v2127, %v2127
        %v2130 = vmul.f32 %v2129, -0.001358992
        %v2131 = vadd.f32 %v2130, 0.041655596
        %v2132 = vmul.f32 %v2129, %v2131
        %v2133 = vadd.f32 %v2132, -0.4999988
        %v2134 = vmul.f32 %v2129, %v2133
        %v2135 = vadd.f32 1.0, %v2134
        %v2136 = vmul.f32 %v2127, %v2127
        %v2137 = vmul.f32 %v2136, -0.00019511016
        %v2138 = vadd.f32 %v2137, 0.008332121
        %v2139 = vmul.f32 %v2136, %v2138
        %v2140 = vadd.f32 %v2139, -0.16666654
        %v2141 = vmul.f32 %v2136, %v2140
        %v2142 = vadd.f32 %v2141, 1.0
        %v2143 = vmul.f32 %v2142, %v2127
        %vm2144 = vweird.f32 %v1995
        %v2145 = vadd.s32 %v2128, 3
        %v2146 = vand.u32 %v2145, 3
        %vm2147 = vcmp.lt.s32.totalorder %v2146, 2
        %vm2148 = vcmp.eq.s32.totalorder %v2146, 0
        %v2149 = vxor.u32 %v2143, 2147483648
        %v2150 = vsel %vm2148, %v2135, %v2149
        %vm2151 = vcmp.eq.s32.totalorder %v2146, 2
        %v2152 = vxor.u32 %v2135, 2147483648
        %v2153 = vsel %vm2151, %v2152, %v2143
        %v2154 = vsel %vm2147, %v2150, %v2153
        %v2155 = vsel %vm2144, nan, %v2154
        %v2156 = vand.u32 2147483647, %v1996
        %vm2157 = vcmp.le.f32.partialorder %v2156, 0.7853982
        %vm2158 = vcmp.lt.s32.totalorder %v1996, 0
        %v2159 = vand.u32 %v1996, 2139095040
        %v2160 = vshrl.u32 %v2159, 23
        %v2161 = vsub.s32 %v2160, 127
        %v2162 = vand.u32 2147483647, %v1996
        %v2163 = vand.u32 %v2162, 8388607
        %v2164 = vor.u32 %v2163, 8388608
        %v2165 = vsub.s32 0, %v2164
        %v2166 = vadd.s32 %v2161, 1
        %vm2167 = vcmp.gt.s32.totalorder %v2166, 0
        %v2168 = vsel %vm2167, %v2166, 0
        %v2169 = vshrl.u32 %v2168, 5
        %v2170 = vand.u32 %v2168, 31
        %v2171 = vsub.s32 32, %v2170
        %v2172 = vshrl.u32 683565275, %v2171
        %v2173 = vshll.u32 683565275, %v2170
        %v2174 = vshrl.u32 2475754826, %v2171
        %v2175 = vor.u32 %v2173, %v2174
        %v2176 = vshll.u32 2475754826, %v2170
        %v2177 = vshrl.u32 2131351028, %v2171
        %v2178 = vor.u32 %v2176, %v2177
        %v2179 = vshll.u32 2131351028, %v2170
        %v2180 = vshrl.u32 2102212464, %v2171
        %v2181 = vor.u32 %v2179, %v2180
        %v2182 = vshll.u32 2102212464, %v2170
        %v2183 = vshrl.u32 920167782, %v2171
        %v2184 = vor.u32 %v2182, %v2183
        %v2185 = vshll.u32 920167782, %v2170
        %v2186 = vshrl.u32 1326507024, %v2171
        %v2187 = vor.u32 %v2185, %v2186
        %vm2188 = vcmp.lt.s32.totalorder %v2169, 1
        %vm2189 = vcmp.lt.s32.totalorder %v2169, 2
        %vm2190 = vcmp.lt.s32.totalorder %v2169, 3
        %vm2191 = vcmp.lt.s32.totalorder %v2169, 4
        %v2192 = vsel %vm2188, %v2172, %v2175
        %v2193 = vsel %vm2191, %v2181, 2102212464
        %v2194 = vsel %vm2190, %v2178, %v2193
        %v2195 = vsel %vm2189, %v2192, %v2194
        %v2196 = vsel %vm2188, %v2175, %v2178
        %v2197 = vsel %vm2191, %v2184, 920167782
        %v2198 = vsel %vm2190, %v2181, %v2197
        %v2199 = vsel %vm2189, %v2196, %v2198
        %v2200 = vsel %vm2188, %v2178, %v2181
        %v2201 = vsel %vm2191, %v2187, 1326507024
        %v2202 = vsel %vm2190, %v2184, %v2201
        %v2203 = vsel %vm2189, %v2200, %v2202
        %v2204 = vshll.u32 %v2164, 8
        %v2205 = vand.u32 %v2204, 65535
        %v2206 = vshrl.u32 %v2204, 16
        %v2207 = vand.u32 %v2203, 65535
        %v2208 = vshrl.u32 %v2203, 16
        %v2209 = vmul.u32 %v2205, %v2207
        %v2210 = vmul.u32 %v2205, %v2208
        %v2211 = vmul.u32 %v2206, %v2207
        %v2212 = vmul.u32 %v2206, %v2208
        %v2213 = vshll.u32 %v2210, 16
        %v2214 = vshrl.u32 %v2210, 16
        %v2215 = vshll.u32 %v2211, 16
        %v2216 = vshrl.u32 %v2211, 16
        %vm2217 = vc.u32 %v2209, %v2213
        %v2218 = vsel %vm2217, 1, 0
        %v2219 = vadd.s32 %v2209, %v2213
        %v2220 = vadd.s32 %v2212, %v2218
        %vm2221 = vc.u32 %v2219, %v2215
        %v2222 = vsel %vm2221, 1, 0
        %v2223 = vadd.s32 %v2219, %v2215
        %v2224 = vadd.s32 %v2220, %v2222
        %v2225 = vadd.s32 %v2224, %v2214
        %v2226 = vadd.s32 %v2225, %v2216
        %v2227 = vand.u32 %v2204, 65535
        %v2228 = vshrl.u32 %v2204, 16
        %v2229 = vand.u32 %v2199, 65535
        %v2230 = vshrl.u32 %v2199, 16
        %v2231 = vmul.u32 %v2227, %v2229
        %v2232 = vmul.u32 %v2227, %v2230
        %v2233 = vmul.u32 %v2228, %v2229
        %v2234 = vmul.u32 %v2228, %v2230
        %v2235 = vshll.u32 %v2232, 16
        %v2236 = vshrl.u32 %v2232, 16
        %v2237 = vshll.u32 %v2233, 16
        %v2238 = vshrl.u32 %v2233, 16
        %vm2239 = vc.u32 %v2231, %v2235
        %v2240 = vsel %vm2239, 1, 0
        %v2241 = vadd.s32 %v2231, %v2235
        %v2242 = vadd.s32 %v2234, %v2240
        %vm2243 = vc.u32 %v2241, %v2237
        %v2244 = vsel %vm2243, 1, 0
        %v2245 = vadd.s32 %v2241, %v2237
        %v2246 = vadd.s32 %v2242, %v2244
        %v2247 = vadd.s32 %v2246, %v2236
        %v2248 = vadd.s32 %v2247, %v2238
        %v2249 = vmul.u32 %v2204, %v2195
        %v2250 = vadd.s32 %v2226, %v2245
        %vm2251 = vc.u32 %v2226, %v2245
        %v2252 = vadd.s32 %v2248, 1
        %v2253 = vsel %vm2251, %v2252, %v2248
        %v2254 = vadd.s32 %v2249, %v2253
        %v2255 = vadd.s32 %v2254, 536870912
        %v2256 = vshrl.u32 %v2255, 30
        %v2257 = vshll.u32 %v2256, 30
        %v2258 = vsub.s32 %v2254, %v2257
        %vm2259 = vcmp.lt.s32.totalorder %v2258, 0
        %v2260 = vsub.s32 0, %v2258
        %v2261 = vsel %vm2259, %v2260, %v2258
        %v2262 = vclz %v2261
        %v2263 = vsub.s32 %v2262, 2
        %vm2264 = vcmp.gt.s32.totalorder 0, %v2263
        %v2265 = vsel %vm2264, 0, %v2263
        %v2266 = vsub.s32 32, %v2265
        %v2267 = vshll.u32 %v2258, %v2265
        %v2268 = vshrl.u32 %v2250, %v2266
        %v2269 = vor.u32 %v2267, %v2268
        %v2270 = vsub.s32 4294967266, %v2265
        %v2271 = vadd.s32 %v2270, 127
        %v2272 = vshll.u32 %v2271, 23
        %v2273 = vor.u32 4788187, %v2272
        %v2274 = vand.u32 2147483647, %v2273
        %v2276 = vcvt.s32.f32 %v2269
        %v2277 = vmul.f32 %v2276, %v2274
        %v2278 = vxor.u32 %v2277, 2147483648
        %v2279 = vsel %vm2158, %v2278, %v2277
        %v2280 = vsub.s32 4, %v2256
        %v2281 = vsel %vm2158, %v2280, %v2256
        %v2282 = vsel %vm2157, %v1996, %v2279
        %v2283 = vsel %vm2157, 0, %v2281
        %v2284 = vmul.f32 %v2282, %v2282
        %v2285 = vmul.f32 %v2284, -0.001358992
        %v2286 = vadd.f32 %v2285, 0.041655596
        %v2287 = vmul.f32 %v2284, %v2286
        %v2288 = vadd.f32 %v2287, -0.4999988
        %v2289 = vmul.f32 %v2284, %v2288
        %v2290 = vadd.f32 1.0, %v2289
        %v2291 = vmul.f32 %v2282, %v2282
        %v2292 = vmul.f32 %v2291, -0.00019511016
        %v2293 = vadd.f32 %v2292, 0.008332121
        %v2294 = vmul.f32 %v2291, %v2293
        %v2295 = vadd.f32 %v2294, -0.16666654
        %v2296 = vmul.f32 %v2291, %v2295
        %v2297 = vadd.f32 %v2296, 1.0
        %v2298 = vmul.f32 %v2297, %v2282
        %vm2299 = vweird.f32 %v1996
        %v2300 = vadd.s32 %v2283, 3
        %v2301 = vand.u32 %v2300, 3
        %vm2302 = vcmp.lt.s32.totalorder %v2301, 2
        %vm2303 = vcmp.eq.s32.totalorder %v2301, 0
        %v2304 = vxor.u32 %v2298, 2147483648
        %v2305 = vsel %vm2303, %v2290, %v2304
        %vm2306 = vcmp.eq.s32.totalorder %v2301, 2
        %v2307 = vxor.u32 %v2290, 2147483648
        %v2308 = vsel %vm2306, %v2307, %v2298
        %v2309 = vsel %vm2302, %v2305, %v2308
        %v2310 = vsel %vm2299, nan, %v2309
        %v2311 = vand.u32 2147483647, %v1997
        %vm2312 = vcmp.le.f32.partialorder %v2311, 0.7853982
        %vm2313 = vcmp.lt.s32.totalorder %v1997, 0
        %v2314 = vand.u32 %v1997, 2139095040
        %v2315 = vshrl.u32 %v2314, 23
        %v2316 = vsub.s32 %v2315, 127
        %v2317 = vand.u32 2147483647, %v1997
        %v2318 = vand.u32 %v2317, 8388607
        %v2319 = vor.u32 %v2318, 8388608
        %v2320 = vsub.s32 0, %v2319
        %v2321 = vadd.s32 %v2316, 1
        %vm2322 = vcmp.gt.s32.totalorder %v2321, 0
        %v2323 = vsel %vm2322, %v2321, 0
        %v2324 = vshrl.u32 %v2323, 5
        %v2325 = vand.u32 %v2323, 31
        %v2326 = vsub.s32 32, %v2325
        %v2327 = vshrl.u32 683565275, %v2326
        %v2328 = vshll.u32 683565275, %v2325
        %v2329 = vshrl.u32 2475754826, %v2326
        %v2330 = vor.u32 %v2328, %v2329
        %v2331 = vshll.u32 2475754826, %v2325
        %v2332 = vshrl.u32 2131351028, %v2326
        %v2333 = vor.u32 %v2331, %v2332
        %v2334 = vshll.u32 2131351028, %v2325
        %v2335 = vshrl.u32 2102212464, %v2326
        %v2336 = vor.u32 %v2334, %v2335
        %v2337 = vshll.u32 2102212464, %v2325
        %v2338 = vshrl.u32 920167782, %v2326
        %v2339 = vor.u32 %v2337, %v2338
        %v2340 = vshll.u32 920167782, %v2325
        %v2341 = vshrl.u32 1326507024, %v2326
        %v2342 = vor.u32 %v2340, %v2341
        %vm2343 = vcmp.lt.s32.totalorder %v2324, 1
        %vm2344 = vcmp.lt.s32.totalorder %v2324, 2
        %vm2345 = vcmp.lt.s32.totalorder %v2324, 3
        %vm2346 = vcmp.lt.s32.totalorder %v2324, 4
        %v2347 = vsel %vm2343, %v2327, %v2330
        %v2348 = vsel %vm2346, %v2336, 2102212464
        %v2349 = vsel %vm2345, %v2333, %v2348
        %v2350 = vsel %vm2344, %v2347, %v2349
        %v2351 = vsel %vm2343, %v2330, %v2333
        %v2352 = vsel %vm2346, %v2339, 920167782
        %v2353 = vsel %vm2345, %v2336, %v2352
        %v2354 = vsel %vm2344, %v2351, %v2353
        %v2355 = vsel %vm2343, %v2333, %v2336
        %v2356 = vsel %vm2346, %v2342, 1326507024
        %v2357 = vsel %vm2345, %v2339, %v2356
        %v2358 = vsel %vm2344, %v2355, %v2357
        %v2359 = vshll.u32 %v2319, 8
        %v2360 = vand.u32 %v2359, 65535
        %v2361 = vshrl.u32 %v2359, 16
        %v2362 = vand.u32 %v2358, 65535
        %v2363 = vshrl.u32 %v2358, 16
        %v2364 = vmul.u32 %v2360, %v2362
        %v2365 = vmul.u32 %v2360, %v2363
        %v2366 = vmul.u32 %v2361, %v2362
        %v2367 = vmul.u32 %v2361, %v2363
        %v2368 = vshll.u32 %v2365, 16
        %v2369 = vshrl.u32 %v2365, 16
        %v2370 = vshll.u32 %v2366, 16
        %v2371 = vshrl.u32 %v2366, 16
        %vm2372 = vc.u32 %v2364, %v2368
        %v2373 = vsel %vm2372, 1, 0
        %v2374 = vadd.s32 %v2364, %v2368
        %v2375 = vadd.s32 %v2367, %v2373
        %vm2376 = vc.u32 %v2374, %v2370
        %v2377 = vsel %vm2376, 1, 0
        %v2378 = vadd.s32 %v2374, %v2370
        %v2379 = vadd.s32 %v2375, %v2377
        %v2380 = vadd.s32 %v2379, %v2369
        %v2381 = vadd.s32 %v2380, %v2371
        %v2382 = vand.u32 %v2359, 65535
        %v2383 = vshrl.u32 %v2359, 16
        %v2384 = vand.u32 %v2354, 65535
        %v2385 = vshrl.u32 %v2354, 16
        %v2386 = vmul.u32 %v2382, %v2384
        %v2387 = vmul.u32 %v2382, %v2385
        %v2388 = vmul.u32 %v2383, %v2384
        %v2389 = vmul.u32 %v2383, %v2385
        %v2390 = vshll.u32 %v2387, 16
        %v2391 = vshrl.u32 %v2387, 16
        %v2392 = vshll.u32 %v2388, 16
        %v2393 = vshrl.u32 %v2388, 16
        %vm2394 = vc.u32 %v2386, %v2390
        %v2395 = vsel %vm2394, 1, 0
        %v2396 = vadd.s32 %v2386, %v2390
        %v2397 = vadd.s32 %v2389, %v2395
        %vm2398 = vc.u32 %v2396, %v2392
        %v2399 = vsel %vm2398, 1, 0
        %v2400 = vadd.s32 %v2396, %v2392
        %v2401 = vadd.s32 %v2397, %v2399
        %v2402 = vadd.s32 %v2401, %v2391
        %v2403 = vadd.s32 %v2402, %v2393
        %v2404 = vmul.u32 %v2359, %v2350
        %v2405 = vadd.s32 %v2381, %v2400
        %vm2406 = vc.u32 %v2381, %v2400
        %v2407 = vadd.s32 %v2403, 1
        %v2408 = vsel %vm2406, %v2407, %v2403
        %v2409 = vadd.s32 %v2404, %v2408
        %v2410 = vadd.s32 %v2409, 536870912
        %v2411 = vshrl.u32 %v2410, 30
        %v2412 = vshll.u32 %v2411, 30
        %v2413 = vsub.s32 %v2409, %v2412
        %vm2414 = vcmp.lt.s32.totalorder %v2413, 0
        %v2415 = vsub.s32 0, %v2413
        %v2416 = vsel %vm2414, %v2415, %v2413
        %v2417 = vclz %v2416
        %v2418 = vsub.s32 %v2417, 2
        %vm2419 = vcmp.gt.s32.totalorder 0, %v2418
        %v2420 = vsel %vm2419, 0, %v2418
        %v2421 = vsub.s32 32, %v2420
        %v2422 = vshll.u32 %v2413, %v2420
        %v2423 = vshrl.u32 %v2405, %v2421
        %v2424 = vor.u32 %v2422, %v2423
        %v2425 = vsub.s32 4294967266, %v2420
        %v2426 = vadd.s32 %v2425, 127
        %v2427 = vshll.u32 %v2426, 23
        %v2428 = vor.u32 4788187, %v2427
        %v2429 = vand.u32 2147483647, %v2428
        %v2431 = vcvt.s32.f32 %v2424
        %v2432 = vmul.f32 %v2431, %v2429
        %v2433 = vxor.u32 %v2432, 2147483648
        %v2434 = vsel %vm2313, %v2433, %v2432
        %v2435 = vsub.s32 4, %v2411
        %v2436 = vsel %vm2313, %v2435, %v2411
        %v2437 = vsel %vm2312, %v1997, %v2434
        %v2438 = vsel %vm2312, 0, %v2436
        %v2439 = vmul.f32 %v2437, %v2437
        %v2440 = vmul.f32 %v2439, -0.001358992
        %v2441 = vadd.f32 %v2440, 0.041655596
        %v2442 = vmul.f32 %v2439, %v2441
        %v2443 = vadd.f32 %v2442, -0.4999988
        %v2444 = vmul.f32 %v2439, %v2443
        %v2445 = vadd.f32 1.0, %v2444
        %v2446 = vmul.f32 %v2437, %v2437
        %v2447 = vmul.f32 %v2446, -0.00019511016
        %v2448 = vadd.f32 %v2447, 0.008332121
        %v2449 = vmul.f32 %v2446, %v2448
        %v2450 = vadd.f32 %v2449, -0.16666654
        %v2451 = vmul.f32 %v2446, %v2450
        %v2452 = vadd.f32 %v2451, 1.0
        %v2453 = vmul.f32 %v2452, %v2437
        %vm2454 = vweird.f32 %v1997
        %v2455 = vadd.s32 %v2438, 3
        %v2456 = vand.u32 %v2455, 3
        %vm2457 = vcmp.lt.s32.totalorder %v2456, 2
        %vm2458 = vcmp.eq.s32.totalorder %v2456, 0
        %v2459 = vxor.u32 %v2453, 2147483648
        %v2460 = vsel %vm2458, %v2445, %v2459
        %vm2461 = vcmp.eq.s32.totalorder %v2456, 2
        %v2462 = vxor.u32 %v2445, 2147483648
        %v2463 = vsel %vm2461, %v2462, %v2453
        %v2464 = vsel %vm2457, %v2460, %v2463
        %v2465 = vsel %vm2454, nan, %v2464
        %v2466 = vand.u32 2147483647, %v1998
        %vm2467 = vcmp.le.f32.partialorder %v2466, 0.7853982
        %vm2468 = vcmp.lt.s32.totalorder %v1998, 0
        %v2469 = vand.u32 %v1998, 2139095040
        %v2470 = vshrl.u32 %v2469, 23
        %v2471 = vsub.s32 %v2470, 127
        %v2472 = vand.u32 2147483647, %v1998
        %v2473 = vand.u32 %v2472, 8388607
        %v2474 = vor.u32 %v2473, 8388608
        %v2475 = vsub.s32 0, %v2474
        %v2476 = vadd.s32 %v2471, 1
        %vm2477 = vcmp.gt.s32.totalorder %v2476, 0
        %v2478 = vsel %vm2477, %v2476, 0
        %v2479 = vshrl.u32 %v2478, 5
        %v2480 = vand.u32 %v2478, 31
        %v2481 = vsub.s32 32, %v2480
        %v2482 = vshrl.u32 683565275, %v2481
        %v2483 = vshll.u32 683565275, %v2480
        %v2484 = vshrl.u32 2475754826, %v2481
        %v2485 = vor.u32 %v2483, %v2484
        %v2486 = vshll.u32 2475754826, %v2480
        %v2487 = vshrl.u32 2131351028, %v2481
        %v2488 = vor.u32 %v2486, %v2487
        %v2489 = vshll.u32 2131351028, %v2480
        %v2490 = vshrl.u32 2102212464, %v2481
        %v2491 = vor.u32 %v2489, %v2490
        %v2492 = vshll.u32 2102212464, %v2480
        %v2493 = vshrl.u32 920167782, %v2481
        %v2494 = vor.u32 %v2492, %v2493
        %v2495 = vshll.u32 920167782, %v2480
        %v2496 = vshrl.u32 1326507024, %v2481
        %v2497 = vor.u32 %v2495, %v2496
        %vm2498 = vcmp.lt.s32.totalorder %v2479, 1
        %vm2499 = vcmp.lt.s32.totalorder %v2479, 2
        %vm2500 = vcmp.lt.s32.totalorder %v2479, 3
        %vm2501 = vcmp.lt.s32.totalorder %v2479, 4
        %v2502 = vsel %vm2498, %v2482, %v2485
        %v2503 = vsel %vm2501, %v2491, 2102212464
        %v2504 = vsel %vm2500, %v2488, %v2503
        %v2505 = vsel %vm2499, %v2502, %v2504
        %v2506 = vsel %vm2498, %v2485, %v2488
        %v2507 = vsel %vm2501, %v2494, 920167782
        %v2508 = vsel %vm2500, %v2491, %v2507
        %v2509 = vsel %vm2499, %v2506, %v2508
        %v2510 = vsel %vm2498, %v2488, %v2491
        %v2511 = vsel %vm2501, %v2497, 1326507024
        %v2512 = vsel %vm2500, %v2494, %v2511
        %v2513 = vsel %vm2499, %v2510, %v2512
        %v2514 = vshll.u32 %v2474, 8
        %v2515 = vand.u32 %v2514, 65535
        %v2516 = vshrl.u32 %v2514, 16
        %v2517 = vand.u32 %v2513, 65535
        %v2518 = vshrl.u32 %v2513, 16
        %v2519 = vmul.u32 %v2515, %v2517
        %v2520 = vmul.u32 %v2515, %v2518
        %v2521 = vmul.u32 %v2516, %v2517
        %v2522 = vmul.u32 %v2516, %v2518
        %v2523 = vshll.u32 %v2520, 16
        %v2524 = vshrl.u32 %v2520, 16
        %v2525 = vshll.u32 %v2521, 16
        %v2526 = vshrl.u32 %v2521, 16
        %vm2527 = vc.u32 %v2519, %v2523
        %v2528 = vsel %vm2527, 1, 0
        %v2529 = vadd.s32 %v2519, %v2523
        %v2530 = vadd.s32 %v2522, %v2528
        %vm2531 = vc.u32 %v2529, %v2525
        %v2532 = vsel %vm2531, 1, 0
        %v2533 = vadd.s32 %v2529, %v2525
        %v2534 = vadd.s32 %v2530, %v2532
        %v2535 = vadd.s32 %v2534, %v2524
        %v2536 = vadd.s32 %v2535, %v2526
        %v2537 = vand.u32 %v2514, 65535
        %v2538 = vshrl.u32 %v2514, 16
        %v2539 = vand.u32 %v2509, 65535
        %v2540 = vshrl.u32 %v2509, 16
        %v2541 = vmul.u32 %v2537, %v2539
        %v2542 = vmul.u32 %v2537, %v2540
        %v2543 = vmul.u32 %v2538, %v2539
        %v2544 = vmul.u32 %v2538, %v2540
        %v2545 = vshll.u32 %v2542, 16
        %v2546 = vshrl.u32 %v2542, 16
        %v2547 = vshll.u32 %v2543, 16
        %v2548 = vshrl.u32 %v2543, 16
        %vm2549 = vc.u32 %v2541, %v2545
        %v2550 = vsel %vm2549, 1, 0
        %v2551 = vadd.s32 %v2541, %v2545
        %v2552 = vadd.s32 %v2544, %v2550
        %vm2553 = vc.u32 %v2551, %v2547
        %v2554 = vsel %vm2553, 1, 0
        %v2555 = vadd.s32 %v2551, %v2547
        %v2556 = vadd.s32 %v2552, %v2554
        %v2557 = vadd.s32 %v2556, %v2546
        %v2558 = vadd.s32 %v2557, %v2548
        %v2559 = vmul.u32 %v2514, %v2505
        %v2560 = vadd.s32 %v2536, %v2555
        %vm2561 = vc.u32 %v2536, %v2555
        %v2562 = vadd.s32 %v2558, 1
        %v2563 = vsel %vm2561, %v2562, %v2558
        %v2564 = vadd.s32 %v2559, %v2563
        %v2565 = vadd.s32 %v2564, 536870912
        %v2566 = vshrl.u32 %v2565, 30
        %v2567 = vshll.u32 %v2566, 30
        %v2568 = vsub.s32 %v2564, %v2567
        %vm2569 = vcmp.lt.s32.totalorder %v2568, 0
        %v2570 = vsub.s32 0, %v2568
        %v2571 = vsel %vm2569, %v2570, %v2568
        %v2572 = vclz %v2571
        %v2573 = vsub.s32 %v2572, 2
        %vm2574 = vcmp.gt.s32.totalorder 0, %v2573
        %v2575 = vsel %vm2574, 0, %v2573
        %v2576 = vsub.s32 32, %v2575
        %v2577 = vshll.u32 %v2568, %v2575
        %v2578 = vshrl.u32 %v2560, %v2576
        %v2579 = vor.u32 %v2577, %v2578
        %v2580 = vsub.s32 4294967266, %v2575
        %v2581 = vadd.s32 %v2580, 127
        %v2582 = vshll.u32 %v2581, 23
        %v2583 = vor.u32 4788187, %v2582
        %v2584 = vand.u32 2147483647, %v2583
        %v2586 = vcvt.s32.f32 %v2579
        %v2587 = vmul.f32 %v2586, %v2584
        %v2588 = vxor.u32 %v2587, 2147483648
        %v2589 = vsel %vm2468, %v2588, %v2587
        %v2590 = vsub.s32 4, %v2566
        %v2591 = vsel %vm2468, %v2590, %v2566
        %v2592 = vsel %vm2467, %v1998, %v2589
        %v2593 = vsel %vm2467, 0, %v2591
        %v2594 = vmul.f32 %v2592, %v2592
        %v2595 = vmul.f32 %v2594, -0.001358992
        %v2596 = vadd.f32 %v2595, 0.041655596
        %v2597 = vmul.f32 %v2594, %v2596
        %v2598 = vadd.f32 %v2597, -0.4999988
        %v2599 = vmul.f32 %v2594, %v2598
        %v2600 = vadd.f32 1.0, %v2599
        %v2601 = vmul.f32 %v2592, %v2592
        %v2602 = vmul.f32 %v2601, -0.00019511016
        %v2603 = vadd.f32 %v2602, 0.008332121
        %v2604 = vmul.f32 %v2601, %v2603
        %v2605 = vadd.f32 %v2604, -0.16666654
        %v2606 = vmul.f32 %v2601, %v2605
        %v2607 = vadd.f32 %v2606, 1.0
        %v2608 = vmul.f32 %v2607, %v2592
        %vm2609 = vweird.f32 %v1998
        %v2610 = vadd.s32 %v2593, 3
        %v2611 = vand.u32 %v2610, 3
        %vm2612 = vcmp.lt.s32.totalorder %v2611, 2
        %vm2613 = vcmp.eq.s32.totalorder %v2611, 0
        %v2614 = vxor.u32 %v2608, 2147483648
        %v2615 = vsel %vm2613, %v2600, %v2614
        %vm2616 = vcmp.eq.s32.totalorder %v2611, 2
        %v2617 = vxor.u32 %v2600, 2147483648
        %v2618 = vsel %vm2616, %v2617, %v2608
        %v2619 = vsel %vm2612, %v2615, %v2618
        %v2620 = vsel %vm2609, nan, %v2619
        %v2621 = vand.u32 2147483647, %v1999
        %vm2622 = vcmp.le.f32.partialorder %v2621, 0.7853982
        %vm2623 = vcmp.lt.s32.totalorder %v1999, 0
        %v2624 = vand.u32 %v1999, 2139095040
        %v2625 = vshrl.u32 %v2624, 23
        %v2626 = vsub.s32 %v2625, 127
        %v2627 = vand.u32 2147483647, %v1999
        %v2628 = vand.u32 %v2627, 8388607
        %v2629 = vor.u32 %v2628, 8388608
        %v2630 = vsub.s32 0, %v2629
        %v2631 = vadd.s32 %v2626, 1
        %vm2632 = vcmp.gt.s32.totalorder %v2631, 0
        %v2633 = vsel %vm2632, %v2631, 0
        %v2634 = vshrl.u32 %v2633, 5
        %v2635 = vand.u32 %v2633, 31
        %v2636 = vsub.s32 32, %v2635
        %v2637 = vshrl.u32 683565275, %v2636
        %v2638 = vshll.u32 683565275, %v2635
        %v2639 = vshrl.u32 2475754826, %v2636
        %v2640 = vor.u32 %v2638, %v2639
        %v2641 = vshll.u32 2475754826, %v2635
        %v2642 = vshrl.u32 2131351028, %v2636
        %v2643 = vor.u32 %v2641, %v2642
        %v2644 = vshll.u32 2131351028, %v2635
        %v2645 = vshrl.u32 2102212464, %v2636
        %v2646 = vor.u32 %v2644, %v2645
        %v2647 = vshll.u32 2102212464, %v2635
        %v2648 = vshrl.u32 920167782, %v2636
        %v2649 = vor.u32 %v2647, %v2648
        %v2650 = vshll.u32 920167782, %v2635
        %v2651 = vshrl.u32 1326507024, %v2636
        %v2652 = vor.u32 %v2650, %v2651
        %vm2653 = vcmp.lt.s32.totalorder %v2634, 1
        %vm2654 = vcmp.lt.s32.totalorder %v2634, 2
        %vm2655 = vcmp.lt.s32.totalorder %v2634, 3
        %vm2656 = vcmp.lt.s32.totalorder %v2634, 4
        %v2657 = vsel %vm2653, %v2637, %v2640
        %v2658 = vsel %vm2656, %v2646, 2102212464
        %v2659 = vsel %vm2655, %v2643, %v2658
        %v2660 = vsel %vm2654, %v2657, %v2659
        %v2661 = vsel %vm2653, %v2640, %v2643
        %v2662 = vsel %vm2656, %v2649, 920167782
        %v2663 = vsel %vm2655, %v2646, %v2662
        %v2664 = vsel %vm2654, %v2661, %v2663
        %v2665 = vsel %vm2653, %v2643, %v2646
        %v2666 = vsel %vm2656, %v2652, 1326507024
        %v2667 = vsel %vm2655, %v2649, %v2666
        %v2668 = vsel %vm2654, %v2665, %v2667
        %v2669 = vshll.u32 %v2629, 8
        %v2670 = vand.u32 %v2669, 65535
        %v2671 = vshrl.u32 %v2669, 16
        %v2672 = vand.u32 %v2668, 65535
        %v2673 = vshrl.u32 %v2668, 16
        %v2674 = vmul.u32 %v2670, %v2672
        %v2675 = vmul.u32 %v2670, %v2673
        %v2676 = vmul.u32 %v2671, %v2672
        %v2677 = vmul.u32 %v2671, %v2673
        %v2678 = vshll.u32 %v2675, 16
        %v2679 = vshrl.u32 %v2675, 16
        %v2680 = vshll.u32 %v2676, 16
        %v2681 = vshrl.u32 %v2676, 16
        %vm2682 = vc.u32 %v2674, %v2678
        %v2683 = vsel %vm2682, 1, 0
        %v2684 = vadd.s32 %v2674, %v2678
        %v2685 = vadd.s32 %v2677, %v2683
        %vm2686 = vc.u32 %v2684, %v2680
        %v2687 = vsel %vm2686, 1, 0
        %v2688 = vadd.s32 %v2684, %v2680
        %v2689 = vadd.s32 %v2685, %v2687
        %v2690 = vadd.s32 %v2689, %v2679
        %v2691 = vadd.s32 %v2690, %v2681
        %v2692 = vand.u32 %v2669, 65535
        %v2693 = vshrl.u32 %v2669, 16
        %v2694 = vand.u32 %v2664, 65535
        %v2695 = vshrl.u32 %v2664, 16
        %v2696 = vmul.u32 %v2692, %v2694
        %v2697 = vmul.u32 %v2692, %v2695
        %v2698 = vmul.u32 %v2693, %v2694
        %v2699 = vmul.u32 %v2693, %v2695
        %v2700 = vshll.u32 %v2697, 16
        %v2701 = vshrl.u32 %v2697, 16
        %v2702 = vshll.u32 %v2698, 16
        %v2703 = vshrl.u32 %v2698, 16
        %vm2704 = vc.u32 %v2696, %v2700
        %v2705 = vsel %vm2704, 1, 0
        %v2706 = vadd.s32 %v2696, %v2700
        %v2707 = vadd.s32 %v2699, %v2705
        %vm2708 = vc.u32 %v2706, %v2702
        %v2709 = vsel %vm2708, 1, 0
        %v2710 = vadd.s32 %v2706, %v2702
        %v2711 = vadd.s32 %v2707, %v2709
        %v2712 = vadd.s32 %v2711, %v2701
        %v2713 = vadd.s32 %v2712, %v2703
        %v2714 = vmul.u32 %v2669, %v2660
        %v2715 = vadd.s32 %v2691, %v2710
        %vm2716 = vc.u32 %v2691, %v2710
        %v2717 = vadd.s32 %v2713, 1
        %v2718 = vsel %vm2716, %v2717, %v2713
        %v2719 = vadd.s32 %v2714, %v2718
        %v2720 = vadd.s32 %v2719, 536870912
        %v2721 = vshrl.u32 %v2720, 30
        %v2722 = vshll.u32 %v2721, 30
        %v2723 = vsub.s32 %v2719, %v2722
        %vm2724 = vcmp.lt.s32.totalorder %v2723, 0
        %v2725 = vsub.s32 0, %v2723
        %v2726 = vsel %vm2724, %v2725, %v2723
        %v2727 = vclz %v2726
        %v2728 = vsub.s32 %v2727, 2
        %vm2729 = vcmp.gt.s32.totalorder 0, %v2728
        %v2730 = vsel %vm2729, 0, %v2728
        %v2731 = vsub.s32 32, %v2730
        %v2732 = vshll.u32 %v2723, %v2730
        %v2733 = vshrl.u32 %v2715, %v2731
        %v2734 = vor.u32 %v2732, %v2733
        %v2735 = vsub.s32 4294967266, %v2730
        %v2736 = vadd.s32 %v2735, 127
        %v2737 = vshll.u32 %v2736, 23
        %v2738 = vor.u32 4788187, %v2737
        %v2739 = vand.u32 2147483647, %v2738
        %v2741 = vcvt.s32.f32 %v2734
        %v2742 = vmul.f32 %v2741, %v2739
        %v2743 = vxor.u32 %v2742, 2147483648
        %v2744 = vsel %vm2623, %v2743, %v2742
        %v2745 = vsub.s32 4, %v2721
        %v2746 = vsel %vm2623, %v2745, %v2721
        %v2747 = vsel %vm2622, %v1999, %v2744
        %v2748 = vsel %vm2622, 0, %v2746
        %v2749 = vmul.f32 %v2747, %v2747
        %v2750 = vmul.f32 %v2749, -0.001358992
        %v2751 = vadd.f32 %v2750, 0.041655596
        %v2752 = vmul.f32 %v2749, %v2751
        %v2753 = vadd.f32 %v2752, -0.4999988
        %v2754 = vmul.f32 %v2749, %v2753
        %v2755 = vadd.f32 1.0, %v2754
        %v2756 = vmul.f32 %v2747, %v2747
        %v2757 = vmul.f32 %v2756, -0.00019511016
        %v2758 = vadd.f32 %v2757, 0.008332121
        %v2759 = vmul.f32 %v2756, %v2758
        %v2760 = vadd.f32 %v2759, -0.16666654
        %v2761 = vmul.f32 %v2756, %v2760
        %v2762 = vadd.f32 %v2761, 1.0
        %v2763 = vmul.f32 %v2762, %v2747
        %vm2764 = vweird.f32 %v1999
        %v2765 = vadd.s32 %v2748, 3
        %v2766 = vand.u32 %v2765, 3
        %vm2767 = vcmp.lt.s32.totalorder %v2766, 2
        %vm2768 = vcmp.eq.s32.totalorder %v2766, 0
        %v2769 = vxor.u32 %v2763, 2147483648
        %v2770 = vsel %vm2768, %v2755, %v2769
        %vm2771 = vcmp.eq.s32.totalorder %v2766, 2
        %v2772 = vxor.u32 %v2755, 2147483648
        %v2773 = vsel %vm2771, %v2772, %v2763
        %v2774 = vsel %vm2767, %v2770, %v2773
        %v2775 = vsel %vm2764, nan, %v2774
        %v2776 = vand.u32 2147483647, %v2000
        %vm2777 = vcmp.le.f32.partialorder %v2776, 0.7853982
        %vm2778 = vcmp.lt.s32.totalorder %v2000, 0
        %v2779 = vand.u32 %v2000, 2139095040
        %v2780 = vshrl.u32 %v2779, 23
        %v2781 = vsub.s32 %v2780, 127
        %v2782 = vand.u32 2147483647, %v2000
        %v2783 = vand.u32 %v2782, 8388607
        %v2784 = vor.u32 %v2783, 8388608
        %v2785 = vsub.s32 0, %v2784
        %v2786 = vadd.s32 %v2781, 1
        %vm2787 = vcmp.gt.s32.totalorder %v2786, 0
        %v2788 = vsel %vm2787, %v2786, 0
        %v2789 = vshrl.u32 %v2788, 5
        %v2790 = vand.u32 %v2788, 31
        %v2791 = vsub.s32 32, %v2790
        %v2792 = vshrl.u32 683565275, %v2791
        %v2793 = vshll.u32 683565275, %v2790
        %v2794 = vshrl.u32 2475754826, %v2791
        %v2795 = vor.u32 %v2793, %v2794
        %v2796 = vshll.u32 2475754826, %v2790
        %v2797 = vshrl.u32 2131351028, %v2791
        %v2798 = vor.u32 %v2796, %v2797
        %v2799 = vshll.u32 2131351028, %v2790
        %v2800 = vshrl.u32 2102212464, %v2791
        %v2801 = vor.u32 %v2799, %v2800
        %v2802 = vshll.u32 2102212464, %v2790
        %v2803 = vshrl.u32 920167782, %v2791
        %v2804 = vor.u32 %v2802, %v2803
        %v2805 = vshll.u32 920167782, %v2790
        %v2806 = vshrl.u32 1326507024, %v2791
        %v2807 = vor.u32 %v2805, %v2806
        %vm2808 = vcmp.lt.s32.totalorder %v2789, 1
        %vm2809 = vcmp.lt.s32.totalorder %v2789, 2
        %vm2810 = vcmp.lt.s32.totalorder %v2789, 3
        %vm2811 = vcmp.lt.s32.totalorder %v2789, 4
        %v2812 = vsel %vm2808, %v2792, %v2795
        %v2813 = vsel %vm2811, %v2801, 2102212464
        %v2814 = vsel %vm2810, %v2798, %v2813
        %v2815 = vsel %vm2809, %v2812, %v2814
        %v2816 = vsel %vm2808, %v2795, %v2798
        %v2817 = vsel %vm2811, %v2804, 920167782
        %v2818 = vsel %vm2810, %v2801, %v2817
        %v2819 = vsel %vm2809, %v2816, %v2818
        %v2820 = vsel %vm2808, %v2798, %v2801
        %v2821 = vsel %vm2811, %v2807, 1326507024
        %v2822 = vsel %vm2810, %v2804, %v2821
        %v2823 = vsel %vm2809, %v2820, %v2822
        %v2824 = vshll.u32 %v2784, 8
        %v2825 = vand.u32 %v2824, 65535
        %v2826 = vshrl.u32 %v2824, 16
        %v2827 = vand.u32 %v2823, 65535
        %v2828 = vshrl.u32 %v2823, 16
        %v2829 = vmul.u32 %v2825, %v2827
        %v2830 = vmul.u32 %v2825, %v2828
        %v2831 = vmul.u32 %v2826, %v2827
        %v2832 = vmul.u32 %v2826, %v2828
        %v2833 = vshll.u32 %v2830, 16
        %v2834 = vshrl.u32 %v2830, 16
        %v2835 = vshll.u32 %v2831, 16
        %v2836 = vshrl.u32 %v2831, 16
        %vm2837 = vc.u32 %v2829, %v2833
        %v2838 = vsel %vm2837, 1, 0
        %v2839 = vadd.s32 %v2829, %v2833
        %v2840 = vadd.s32 %v2832, %v2838
        %vm2841 = vc.u32 %v2839, %v2835
        %v2842 = vsel %vm2841, 1, 0
        %v2843 = vadd.s32 %v2839, %v2835
        %v2844 = vadd.s32 %v2840, %v2842
        %v2845 = vadd.s32 %v2844, %v2834
        %v2846 = vadd.s32 %v2845, %v2836
        %v2847 = vand.u32 %v2824, 65535
        %v2848 = vshrl.u32 %v2824, 16
        %v2849 = vand.u32 %v2819, 65535
        %v2850 = vshrl.u32 %v2819, 16
        %v2851 = vmul.u32 %v2847, %v2849
        %v2852 = vmul.u32 %v2847, %v2850
        %v2853 = vmul.u32 %v2848, %v2849
        %v2854 = vmul.u32 %v2848, %v2850
        %v2855 = vshll.u32 %v2852, 16
        %v2856 = vshrl.u32 %v2852, 16
        %v2857 = vshll.u32 %v2853, 16
        %v2858 = vshrl.u32 %v2853, 16
        %vm2859 = vc.u32 %v2851, %v2855
        %v2860 = vsel %vm2859, 1, 0
        %v2861 = vadd.s32 %v2851, %v2855
        %v2862 = vadd.s32 %v2854, %v2860
        %vm2863 = vc.u32 %v2861, %v2857
        %v2864 = vsel %vm2863, 1, 0
        %v2865 = vadd.s32 %v2861, %v2857
        %v2866 = vadd.s32 %v2862, %v2864
        %v2867 = vadd.s32 %v2866, %v2856
        %v2868 = vadd.s32 %v2867, %v2858
        %v2869 = vmul.u32 %v2824, %v2815
        %v2870 = vadd.s32 %v2846, %v2865
        %vm2871 = vc.u32 %v2846, %v2865
        %v2872 = vadd.s32 %v2868, 1
        %v2873 = vsel %vm2871, %v2872, %v2868
        %v2874 = vadd.s32 %v2869, %v2873
        %v2875 = vadd.s32 %v2874, 536870912
        %v2876 = vshrl.u32 %v2875, 30
        %v2877 = vshll.u32 %v2876, 30
        %v2878 = vsub.s32 %v2874, %v2877
        %vm2879 = vcmp.lt.s32.totalorder %v2878, 0
        %v2880 = vsub.s32 0, %v2878
        %v2881 = vsel %vm2879, %v2880, %v2878
        %v2882 = vclz %v2881
        %v2883 = vsub.s32 %v2882, 2
        %vm2884 = vcmp.gt.s32.totalorder 0, %v2883
        %v2885 = vsel %vm2884, 0, %v2883
        %v2886 = vsub.s32 32, %v2885
        %v2887 = vshll.u32 %v2878, %v2885
        %v2888 = vshrl.u32 %v2870, %v2886
        %v2889 = vor.u32 %v2887, %v2888
        %v2890 = vsub.s32 4294967266, %v2885
        %v2891 = vadd.s32 %v2890, 127
        %v2892 = vshll.u32 %v2891, 23
        %v2893 = vor.u32 4788187, %v2892
        %v2894 = vand.u32 2147483647, %v2893
        %v2896 = vcvt.s32.f32 %v2889
        %v2897 = vmul.f32 %v2896, %v2894
        %v2898 = vxor.u32 %v2897, 2147483648
        %v2899 = vsel %vm2778, %v2898, %v2897
        %v2900 = vsub.s32 4, %v2876
        %v2901 = vsel %vm2778, %v2900, %v2876
        %v2902 = vsel %vm2777, %v2000, %v2899
        %v2903 = vsel %vm2777, 0, %v2901
        %v2904 = vmul.f32 %v2902, %v2902
        %v2905 = vmul.f32 %v2904, -0.001358992
        %v2906 = vadd.f32 %v2905, 0.041655596
        %v2907 = vmul.f32 %v2904, %v2906
        %v2908 = vadd.f32 %v2907, -0.4999988
        %v2909 = vmul.f32 %v2904, %v2908
        %v2910 = vadd.f32 1.0, %v2909
        %v2911 = vmul.f32 %v2902, %v2902
        %v2912 = vmul.f32 %v2911, -0.00019511016
        %v2913 = vadd.f32 %v2912, 0.008332121
        %v2914 = vmul.f32 %v2911, %v2913
        %v2915 = vadd.f32 %v2914, -0.16666654
        %v2916 = vmul.f32 %v2911, %v2915
        %v2917 = vadd.f32 %v2916, 1.0
        %v2918 = vmul.f32 %v2917, %v2902
        %vm2919 = vweird.f32 %v2000
        %v2920 = vadd.s32 %v2903, 3
        %v2921 = vand.u32 %v2920, 3
        %vm2922 = vcmp.lt.s32.totalorder %v2921, 2
        %vm2923 = vcmp.eq.s32.totalorder %v2921, 0
        %v2924 = vxor.u32 %v2918, 2147483648
        %v2925 = vsel %vm2923, %v2910, %v2924
        %vm2926 = vcmp.eq.s32.totalorder %v2921, 2
        %v2927 = vxor.u32 %v2910, 2147483648
        %v2928 = vsel %vm2926, %v2927, %v2918
        %v2929 = vsel %vm2922, %v2925, %v2928
        %v2930 = vsel %vm2919, nan, %v2929
        %v2931 = vmul.f32 %v2155, %v2155
        %v2932 = vmul.f32 %v2310, %v2310
        %v2933 = vmul.f32 %v2465, %v2465
        %v2934 = vmul.f32 %v2620, %v2620
        %v2935 = vmul.f32 %v2775, %v2775
        %v2936 = vmul.f32 %v2930, %v2930
        %v2937 = vmul.f32 %v1769, %v2931
        %v2938 = vmul.f32 %v1769, %v2932
        %v2939 = vmul.f32 %v1769, %v2933
        %v2940 = vmul.f32 %v1774, %v2934
        %v2941 = vmul.f32 %v1774, %v2935
        %v2942 = vmul.f32 %v1774, %v2936
        %v2943 = vadd.f32 %v808, %v2937
        %v2944 = vadd.f32 %v809, %v2938
        %v2945 = vadd.f32 %v810, %v2939
        %v2946 = vadd.f32 %v811, %v2940
        %v2947 = vadd.f32 %v812, %v2941
        %v2948 = vadd.f32 %v813, %v2942
        %v2949 = vmul.f32 %v2943, 0.0020289666
        %v2950 = vmul.f32 %v2944, 0.0020289666
        %v2951 = vmul.f32 %v2945, 0.0020289666
        %v2952 = vmul.f32 %v2946, 0.0020289666
        %v2953 = vmul.f32 %v2947, 0.0020289666
        %v2954 = vmul.f32 %v2948, 0.0020289666
        %v2955 = vadd.f32 %v1989, %v2949
        %v2956 = vadd.f32 %v1990, %v2950
        %v2957 = vadd.f32 %v1991, %v2951
        %v2958 = vadd.f32 %v1992, %v2952
        %v2959 = vadd.f32 %v1993, %v2953
        %v2960 = vadd.f32 %v1994, %v2954
        %v2961 = vmul.f32 %v2943, -0.025543464
        %v2962 = vmul.f32 %v2944, -0.025543464
        %v2963 = vmul.f32 %v2945, -0.025543464
        %v2964 = vmul.f32 %v2946, -0.025543464
        %v2965 = vmul.f32 %v2947, -0.025543464
        %v2966 = vmul.f32 %v2948, -0.025543464
        %2973 = vrot.lane.b32.xlu0 %v2961, 127
        %v2974 = vpop.permute.xlu0 %2973
        %2975 = vrot.lane.b32.xlu0 %v2962, 127
        %v2976 = vpop.permute.xlu0 %2975
        %2977 = vrot.lane.b32.xlu0 %v2963, 127
        %v2978 = vpop.permute.xlu0 %2977
        %2979 = vrot.lane.b32.xlu0 %v2964, 127
        %v2980 = vpop.permute.xlu0 %2979
        %2981 = vrot.lane.b32.xlu0 %v2965, 127
        %v2982 = vpop.permute.xlu0 %2981
        %2983 = vrot.lane.b32.xlu0 %v2966, 127
        %v2984 = vpop.permute.xlu0 %2983
        %v2985 = vsel %vm1824, %v2974, %v2976
        %v2986 = vsel %vm1824, %v2976, %v2978
        %v2987 = vsel %vm1824, %v2980, %v2982
        %v2988 = vsel %vm1824, %v2982, %v2984
        %v2995 = vadd.f32 %v2955, %v2985
        %v2996 = vadd.f32 %v2956, %v2986
        %v2997 = vadd.f32 %v2957, %v2978
        %v2998 = vadd.f32 %v2958, %v2987
        %v2999 = vadd.f32 %v2959, %v2988
        %v3000 = vadd.f32 %v2960, %v2984
        %v3001 = vmul.f32 %v2943, 0.12857261
        %v3002 = vmul.f32 %v2944, 0.12857261
        %v3003 = vmul.f32 %v2945, 0.12857261
        %v3004 = vmul.f32 %v2946, 0.12857261
        %v3005 = vmul.f32 %v2947, 0.12857261
        %v3006 = vmul.f32 %v2948, 0.12857261
        %3013 = vrot.lane.b32.xlu0 %v3001, 126
        %v3014 = vpop.permute.xlu0 %3013
        %3015 = vrot.lane.b32.xlu0 %v3002, 126
        %v3016 = vpop.permute.xlu0 %3015
        %3017 = vrot.lane.b32.xlu0 %v3003, 126
        %v3018 = vpop.permute.xlu0 %3017
        %3019 = vrot.lane.b32.xlu0 %v3004, 126
        %v3020 = vpop.permute.xlu0 %3019
        %3021 = vrot.lane.b32.xlu0 %v3005, 126
        %v3022 = vpop.permute.xlu0 %3021
        %3023 = vrot.lane.b32.xlu0 %v3006, 126
        %v3024 = vpop.permute.xlu0 %3023
        %v3025 = vsel %vm1865, %v3014, %v3016
        %v3026 = vsel %vm1865, %v3016, %v3018
        %v3027 = vsel %vm1865, %v3020, %v3022
        %v3028 = vsel %vm1865, %v3022, %v3024
        %v3035 = vadd.f32 %v2995, %v3025
        %v3036 = vadd.f32 %v2996, %v3026
        %v3037 = vadd.f32 %v2997, %v3018
        %v3038 = vadd.f32 %v2998, %v3027
        %v3039 = vadd.f32 %v2999, %v3028
        %v3040 = vadd.f32 %v3000, %v3024
        %v3041 = vmul.f32 %v2943, 0.4432098
        %v3042 = vmul.f32 %v2944, 0.4432098
        %v3043 = vmul.f32 %v2945, 0.4432098
        %v3044 = vmul.f32 %v2946, 0.4432098
        %v3045 = vmul.f32 %v2947, 0.4432098
        %v3046 = vmul.f32 %v2948, 0.4432098
        %3053 = vrot.lane.b32.xlu0 %v3041, 125
        %v3054 = vpop.permute.xlu0 %3053
        %3055 = vrot.lane.b32.xlu0 %v3042, 125
        %v3056 = vpop.permute.xlu0 %3055
        %3057 = vrot.lane.b32.xlu0 %v3043, 125
        %v3058 = vpop.permute.xlu0 %3057
        %3059 = vrot.lane.b32.xlu0 %v3044, 125
        %v3060 = vpop.permute.xlu0 %3059
        %3061 = vrot.lane.b32.xlu0 %v3045, 125
        %v3062 = vpop.permute.xlu0 %3061
        %3063 = vrot.lane.b32.xlu0 %v3046, 125
        %v3064 = vpop.permute.xlu0 %3063
        %v3065 = vsel %vm1906, %v3054, %v3056
        %v3066 = vsel %vm1906, %v3056, %v3058
        %v3067 = vsel %vm1906, %v3060, %v3062
        %v3068 = vsel %vm1906, %v3062, %v3064
        %v3075 = vadd.f32 %v3035, %v3065
        %v3076 = vadd.f32 %v3036, %v3066
        %v3077 = vadd.f32 %v3037, %v3058
        %v3078 = vadd.f32 %v3038, %v3067
        %v3079 = vadd.f32 %v3039, %v3068
        %v3080 = vadd.f32 %v3040, %v3064
        %v3081 = vmul.f32 %v2943, -0.057657376
        %v3082 = vmul.f32 %v2944, -0.057657376
        %v3083 = vmul.f32 %v2945, -0.057657376
        %v3084 = vmul.f32 %v2946, -0.057657376
        %v3085 = vmul.f32 %v2947, -0.057657376
        %v3086 = vmul.f32 %v2948, -0.057657376
        %3093 = vrot.lane.b32.xlu0 %v3081, 124
        %v3094 = vpop.permute.xlu0 %3093
        %3095 = vrot.lane.b32.xlu0 %v3082, 124
        %v3096 = vpop.permute.xlu0 %3095
        %3097 = vrot.lane.b32.xlu0 %v3083, 124
        %v3098 = vpop.permute.xlu0 %3097
        %3099 = vrot.lane.b32.xlu0 %v3084, 124
        %v3100 = vpop.permute.xlu0 %3099
        %3101 = vrot.lane.b32.xlu0 %v3085, 124
        %v3102 = vpop.permute.xlu0 %3101
        %3103 = vrot.lane.b32.xlu0 %v3086, 124
        %v3104 = vpop.permute.xlu0 %3103
        %v3105 = vsel %vm1947, %v3094, %v3096
        %v3106 = vsel %vm1947, %v3096, %v3098
        %v3107 = vsel %vm1947, %v3100, %v3102
        %v3108 = vsel %vm1947, %v3102, %v3104
        %v3115 = vadd.f32 %v3075, %v3105
        %v3116 = vadd.f32 %v3076, %v3106
        %v3117 = vadd.f32 %v3077, %v3098
        %v3118 = vadd.f32 %v3078, %v3107
        %v3119 = vadd.f32 %v3079, %v3108
        %v3120 = vadd.f32 %v3080, %v3104
        %v3121 = vmul.f32 %v2944, 0.009389464
        %v3122 = vmul.f32 %v2945, 0.009389464
        %v3123 = vmul.f32 %v2947, 0.009389464
        %v3124 = vmul.f32 %v2948, 0.009389464
        %3129 = vrot.lane.b32.xlu0 %v3121, 123
        %v3130 = vpop.permute.xlu0 %3129
        %3131 = vrot.lane.b32.xlu0 %v3122, 123
        %v3132 = vpop.permute.xlu0 %3131
        %3133 = vrot.lane.b32.xlu0 %v3123, 123
        %v3134 = vpop.permute.xlu0 %3133
        %3135 = vrot.lane.b32.xlu0 %v3124, 123
        %v3136 = vpop.permute.xlu0 %3135
        %v3137 = vsel %vm1980, %v3130, %v3132
        %v3138 = vsel %vm1980, %v3134, %v3136
        %v3145 = vadd.f32 %v3115, %v3130
        %v3146 = vadd.f32 %v3116, %v3137
        %v3147 = vadd.f32 %v3117, %v3132
        %v3148 = vadd.f32 %v3118, %v3134
        %v3149 = vadd.f32 %v3119, %v3138
        %v3150 = vadd.f32 %v3120, %v3136
        %3157 = vrot.lane.b32.xlu0 %v3145, 5
        %v3158 = vpop.permute.xlu0 %3157
        %3159 = vrot.lane.b32.xlu0 %v3146, 5
        %v3160 = vpop.permute.xlu0 %3159
        %3161 = vrot.lane.b32.xlu0 %v3147, 5
        %v3162 = vpop.permute.xlu0 %3161
        %3163 = vrot.lane.b32.xlu0 %v3148, 5
        %v3164 = vpop.permute.xlu0 %3163
        %3165 = vrot.lane.b32.xlu0 %v3149, 5
        %v3166 = vpop.permute.xlu0 %3165
        %3167 = vrot.lane.b32.xlu0 %v3150, 5
        %v3168 = vpop.permute.xlu0 %3167
        %v3169 = vsel %vm763, %v3158, %v3160
        %v3170 = vsel %vm763, %v3160, %v3162
        %v3171 = vsel %vm763, %v3164, %v3166
        %v3172 = vsel %vm763, %v3166, %v3168
        %3177 = vst [vmem:[%s351] sm:$0xff] %v3169
        %3178 = vst [vmem:[%s351 + $0x8] sm:$0xff] %v3170
        %3179 = vst [vmem:[%s351 + $0x10] sm:$0xff] %v3171
        %3180 = vst [vmem:[%s351 + $0x18] sm:$0xff] %v3172
        // Predicated region
        $region53: #{activation1d.1} parent=35 // pred_check
          %p3181 = pneg %p381
        $region54: #{activation1d.1} parent=35 // pred_check_branch
          %3183 = sbr.rel (%p3181) target = $region56
        $region55: #{activation1d.1} parent=35 // pred_region
          %v3184 = vld [vmem:[#allocation2 + $0x8] sm:$0xff]
          %v3185 = vld [vmem:[#allocation2 + $0x20] sm:$0xff]
          %v3186 = vmul.f32 %v3184, 0.004057933
          %v3187 = vmul.f32 %v3185, 0.004057933
          %v3188 = vmul.f32 %v3186, %v403
          %v3189 = vmul.f32 %v3187, %v404
          %v3190 = vand.u32 2147483647, %v3188
          %vm3191 = vcmp.le.f32.partialorder %v3190, 0.7853982
          %vm3192 = vcmp.lt.s32.totalorder %v3188, 0
          %v3193 = vand.u32 %v3188, 2139095040
          %v3194 = vshrl.u32 %v3193, 23
          %v3195 = vsub.s32 %v3194, 127
          %v3196 = vand.u32 2147483647, %v3188
          %v3197 = vand.u32 %v3196, 8388607
          %v3198 = vor.u32 %v3197, 8388608
          %v3199 = vsub.s32 0, %v3198
          %v3200 = vadd.s32 %v3195, 1
          %vm3201 = vcmp.gt.s32.totalorder %v3200, 0
          %v3202 = vsel %vm3201, %v3200, 0
          %v3203 = vshrl.u32 %v3202, 5
          %v3204 = vand.u32 %v3202, 31
          %v3205 = vsub.s32 32, %v3204
          %v3206 = vshrl.u32 683565275, %v3205
          %v3207 = vshll.u32 683565275, %v3204
          %v3208 = vshrl.u32 2475754826, %v3205
          %v3209 = vor.u32 %v3207, %v3208
          %v3210 = vshll.u32 2475754826, %v3204
          %v3211 = vshrl.u32 2131351028, %v3205
          %v3212 = vor.u32 %v3210, %v3211
          %v3213 = vshll.u32 2131351028, %v3204
          %v3214 = vshrl.u32 2102212464, %v3205
          %v3215 = vor.u32 %v3213, %v3214
          %v3216 = vshll.u32 2102212464, %v3204
          %v3217 = vshrl.u32 920167782, %v3205
          %v3218 = vor.u32 %v3216, %v3217
          %v3219 = vshll.u32 920167782, %v3204
          %v3220 = vshrl.u32 1326507024, %v3205
          %v3221 = vor.u32 %v3219, %v3220
          %vm3222 = vcmp.lt.s32.totalorder %v3203, 1
          %vm3223 = vcmp.lt.s32.totalorder %v3203, 2
          %vm3224 = vcmp.lt.s32.totalorder %v3203, 3
          %vm3225 = vcmp.lt.s32.totalorder %v3203, 4
          %v3226 = vsel %vm3222, %v3206, %v3209
          %v3227 = vsel %vm3225, %v3215, 2102212464
          %v3228 = vsel %vm3224, %v3212, %v3227
          %v3229 = vsel %vm3223, %v3226, %v3228
          %v3230 = vsel %vm3222, %v3209, %v3212
          %v3231 = vsel %vm3225, %v3218, 920167782
          %v3232 = vsel %vm3224, %v3215, %v3231
          %v3233 = vsel %vm3223, %v3230, %v3232
          %v3234 = vsel %vm3222, %v3212, %v3215
          %v3235 = vsel %vm3225, %v3221, 1326507024
          %v3236 = vsel %vm3224, %v3218, %v3235
          %v3237 = vsel %vm3223, %v3234, %v3236
          %v3238 = vshll.u32 %v3198, 8
          %v3239 = vand.u32 %v3238, 65535
          %v3240 = vshrl.u32 %v3238, 16
          %v3241 = vand.u32 %v3237, 65535
          %v3242 = vshrl.u32 %v3237, 16
          %v3243 = vmul.u32 %v3239, %v3241
          %v3244 = vmul.u32 %v3239, %v3242
          %v3245 = vmul.u32 %v3240, %v3241
          %v3246 = vmul.u32 %v3240, %v3242
          %v3247 = vshll.u32 %v3244, 16
          %v3248 = vshrl.u32 %v3244, 16
          %v3249 = vshll.u32 %v3245, 16
          %v3250 = vshrl.u32 %v3245, 16
          %vm3251 = vc.u32 %v3243, %v3247
          %v3252 = vsel %vm3251, 1, 0
          %v3253 = vadd.s32 %v3243, %v3247
          %v3254 = vadd.s32 %v3246, %v3252
          %vm3255 = vc.u32 %v3253, %v3249
          %v3256 = vsel %vm3255, 1, 0
          %v3257 = vadd.s32 %v3253, %v3249
          %v3258 = vadd.s32 %v3254, %v3256
          %v3259 = vadd.s32 %v3258, %v3248
          %v3260 = vadd.s32 %v3259, %v3250
          %v3261 = vand.u32 %v3238, 65535
          %v3262 = vshrl.u32 %v3238, 16
          %v3263 = vand.u32 %v3233, 65535
          %v3264 = vshrl.u32 %v3233, 16
          %v3265 = vmul.u32 %v3261, %v3263
          %v3266 = vmul.u32 %v3261, %v3264
          %v3267 = vmul.u32 %v3262, %v3263
          %v3268 = vmul.u32 %v3262, %v3264
          %v3269 = vshll.u32 %v3266, 16
          %v3270 = vshrl.u32 %v3266, 16
          %v3271 = vshll.u32 %v3267, 16
          %v3272 = vshrl.u32 %v3267, 16
          %vm3273 = vc.u32 %v3265, %v3269
          %v3274 = vsel %vm3273, 1, 0
          %v3275 = vadd.s32 %v3265, %v3269
          %v3276 = vadd.s32 %v3268, %v3274
          %vm3277 = vc.u32 %v3275, %v3271
          %v3278 = vsel %vm3277, 1, 0
          %v3279 = vadd.s32 %v3275, %v3271
          %v3280 = vadd.s32 %v3276, %v3278
          %v3281 = vadd.s32 %v3280, %v3270
          %v3282 = vadd.s32 %v3281, %v3272
          %v3283 = vmul.u32 %v3238, %v3229
          %v3284 = vadd.s32 %v3260, %v3279
          %vm3285 = vc.u32 %v3260, %v3279
          %v3286 = vadd.s32 %v3282, 1
          %v3287 = vsel %vm3285, %v3286, %v3282
          %v3288 = vadd.s32 %v3283, %v3287
          %v3289 = vadd.s32 %v3288, 536870912
          %v3290 = vshrl.u32 %v3289, 30
          %v3291 = vshll.u32 %v3290, 30
          %v3292 = vsub.s32 %v3288, %v3291
          %vm3293 = vcmp.lt.s32.totalorder %v3292, 0
          %v3294 = vsub.s32 0, %v3292
          %v3295 = vsel %vm3293, %v3294, %v3292
          %v3296 = vclz %v3295
          %v3297 = vsub.s32 %v3296, 2
          %vm3298 = vcmp.gt.s32.totalorder 0, %v3297
          %v3299 = vsel %vm3298, 0, %v3297
          %v3300 = vsub.s32 32, %v3299
          %v3301 = vshll.u32 %v3292, %v3299
          %v3302 = vshrl.u32 %v3284, %v3300
          %v3303 = vor.u32 %v3301, %v3302
          %v3304 = vsub.s32 4294967266, %v3299
          %v3305 = vadd.s32 %v3304, 127
          %v3306 = vshll.u32 %v3305, 23
          %v3307 = vor.u32 4788187, %v3306
          %v3308 = vand.u32 2147483647, %v3307
          %v3310 = vcvt.s32.f32 %v3303
          %v3311 = vmul.f32 %v3310, %v3308
          %v3312 = vxor.u32 %v3311, 2147483648
          %v3313 = vsel %vm3192, %v3312, %v3311
          %v3314 = vsub.s32 4, %v3290
          %v3315 = vsel %vm3192, %v3314, %v3290
          %v3316 = vsel %vm3191, %v3188, %v3313
          %v3317 = vsel %vm3191, 0, %v3315
          %v3318 = vmul.f32 %v3316, %v3316
          %v3319 = vmul.f32 %v3318, -0.001358992
          %v3320 = vadd.f32 %v3319, 0.041655596
          %v3321 = vmul.f32 %v3318, %v3320
          %v3322 = vadd.f32 %v3321, -0.4999988
          %v3323 = vmul.f32 %v3318, %v3322
          %v3324 = vadd.f32 1.0, %v3323
          %v3325 = vmul.f32 %v3316, %v3316
          %v3326 = vmul.f32 %v3325, -0.00019511016
          %v3327 = vadd.f32 %v3326, 0.008332121
          %v3328 = vmul.f32 %v3325, %v3327
          %v3329 = vadd.f32 %v3328, -0.16666654
          %v3330 = vmul.f32 %v3325, %v3329
          %v3331 = vadd.f32 %v3330, 1.0
          %v3332 = vmul.f32 %v3331, %v3316
          %vm3333 = vweird.f32 %v3188
          %v3334 = vadd.s32 %v3317, 3
          %v3335 = vand.u32 %v3334, 3
          %vm3336 = vcmp.lt.s32.totalorder %v3335, 2
          %vm3337 = vcmp.eq.s32.totalorder %v3335, 0
          %v3338 = vxor.u32 %v3332, 2147483648
          %v3339 = vsel %vm3337, %v3324, %v3338
          %vm3340 = vcmp.eq.s32.totalorder %v3335, 2
          %v3341 = vxor.u32 %v3324, 2147483648
          %v3342 = vsel %vm3340, %v3341, %v3332
          %v3343 = vsel %vm3336, %v3339, %v3342
          %v3344 = vsel %vm3333, nan, %v3343
          %v3345 = vand.u32 2147483647, %v3189
          %vm3346 = vcmp.le.f32.partialorder %v3345, 0.7853982
          %vm3347 = vcmp.lt.s32.totalorder %v3189, 0
          %v3348 = vand.u32 %v3189, 2139095040
          %v3349 = vshrl.u32 %v3348, 23
          %v3350 = vsub.s32 %v3349, 127
          %v3351 = vand.u32 2147483647, %v3189
          %v3352 = vand.u32 %v3351, 8388607
          %v3353 = vor.u32 %v3352, 8388608
          %v3354 = vsub.s32 0, %v3353
          %v3355 = vadd.s32 %v3350, 1
          %vm3356 = vcmp.gt.s32.totalorder %v3355, 0
          %v3357 = vsel %vm3356, %v3355, 0
          %v3358 = vshrl.u32 %v3357, 5
          %v3359 = vand.u32 %v3357, 31
          %v3360 = vsub.s32 32, %v3359
          %v3361 = vshrl.u32 683565275, %v3360
          %v3362 = vshll.u32 683565275, %v3359
          %v3363 = vshrl.u32 2475754826, %v3360
          %v3364 = vor.u32 %v3362, %v3363
          %v3365 = vshll.u32 2475754826, %v3359
          %v3366 = vshrl.u32 2131351028, %v3360
          %v3367 = vor.u32 %v3365, %v3366
          %v3368 = vshll.u32 2131351028, %v3359
          %v3369 = vshrl.u32 2102212464, %v3360
          %v3370 = vor.u32 %v3368, %v3369
          %v3371 = vshll.u32 2102212464, %v3359
          %v3372 = vshrl.u32 920167782, %v3360
          %v3373 = vor.u32 %v3371, %v3372
          %v3374 = vshll.u32 920167782, %v3359
          %v3375 = vshrl.u32 1326507024, %v3360
          %v3376 = vor.u32 %v3374, %v3375
          %vm3377 = vcmp.lt.s32.totalorder %v3358, 1
          %vm3378 = vcmp.lt.s32.totalorder %v3358, 2
          %vm3379 = vcmp.lt.s32.totalorder %v3358, 3
          %vm3380 = vcmp.lt.s32.totalorder %v3358, 4
          %v3381 = vsel %vm3377, %v3361, %v3364
          %v3382 = vsel %vm3380, %v3370, 2102212464
          %v3383 = vsel %vm3379, %v3367, %v3382
          %v3384 = vsel %vm3378, %v3381, %v3383
          %v3385 = vsel %vm3377, %v3364, %v3367
          %v3386 = vsel %vm3380, %v3373, 920167782
          %v3387 = vsel %vm3379, %v3370, %v3386
          %v3388 = vsel %vm3378, %v3385, %v3387
          %v3389 = vsel %vm3377, %v3367, %v3370
          %v3390 = vsel %vm3380, %v3376, 1326507024
          %v3391 = vsel %vm3379, %v3373, %v3390
          %v3392 = vsel %vm3378, %v3389, %v3391
          %v3393 = vshll.u32 %v3353, 8
          %v3394 = vand.u32 %v3393, 65535
          %v3395 = vshrl.u32 %v3393, 16
          %v3396 = vand.u32 %v3392, 65535
          %v3397 = vshrl.u32 %v3392, 16
          %v3398 = vmul.u32 %v3394, %v3396
          %v3399 = vmul.u32 %v3394, %v3397
          %v3400 = vmul.u32 %v3395, %v3396
          %v3401 = vmul.u32 %v3395, %v3397
          %v3402 = vshll.u32 %v3399, 16
          %v3403 = vshrl.u32 %v3399, 16
          %v3404 = vshll.u32 %v3400, 16
          %v3405 = vshrl.u32 %v3400, 16
          %vm3406 = vc.u32 %v3398, %v3402
          %v3407 = vsel %vm3406, 1, 0
          %v3408 = vadd.s32 %v3398, %v3402
          %v3409 = vadd.s32 %v3401, %v3407
          %vm3410 = vc.u32 %v3408, %v3404
          %v3411 = vsel %vm3410, 1, 0
          %v3412 = vadd.s32 %v3408, %v3404
          %v3413 = vadd.s32 %v3409, %v3411
          %v3414 = vadd.s32 %v3413, %v3403
          %v3415 = vadd.s32 %v3414, %v3405
          %v3416 = vand.u32 %v3393, 65535
          %v3417 = vshrl.u32 %v3393, 16
          %v3418 = vand.u32 %v3388, 65535
          %v3419 = vshrl.u32 %v3388, 16
          %v3420 = vmul.u32 %v3416, %v3418
          %v3421 = vmul.u32 %v3416, %v3419
          %v3422 = vmul.u32 %v3417, %v3418
          %v3423 = vmul.u32 %v3417, %v3419
          %v3424 = vshll.u32 %v3421, 16
          %v3425 = vshrl.u32 %v3421, 16
          %v3426 = vshll.u32 %v3422, 16
          %v3427 = vshrl.u32 %v3422, 16
          %vm3428 = vc.u32 %v3420, %v3424
          %v3429 = vsel %vm3428, 1, 0
          %v3430 = vadd.s32 %v3420, %v3424
          %v3431 = vadd.s32 %v3423, %v3429
          %vm3432 = vc.u32 %v3430, %v3426
          %v3433 = vsel %vm3432, 1, 0
          %v3434 = vadd.s32 %v3430, %v3426
          %v3435 = vadd.s32 %v3431, %v3433
          %v3436 = vadd.s32 %v3435, %v3425
          %v3437 = vadd.s32 %v3436, %v3427
          %v3438 = vmul.u32 %v3393, %v3384
          %v3439 = vadd.s32 %v3415, %v3434
          %vm3440 = vc.u32 %v3415, %v3434
          %v3441 = vadd.s32 %v3437, 1
          %v3442 = vsel %vm3440, %v3441, %v3437
          %v3443 = vadd.s32 %v3438, %v3442
          %v3444 = vadd.s32 %v3443, 536870912
          %v3445 = vshrl.u32 %v3444, 30
          %v3446 = vshll.u32 %v3445, 30
          %v3447 = vsub.s32 %v3443, %v3446
          %vm3448 = vcmp.lt.s32.totalorder %v3447, 0
          %v3449 = vsub.s32 0, %v3447
          %v3450 = vsel %vm3448, %v3449, %v3447
          %v3451 = vclz %v3450
          %v3452 = vsub.s32 %v3451, 2
          %vm3453 = vcmp.gt.s32.totalorder 0, %v3452
          %v3454 = vsel %vm3453, 0, %v3452
          %v3455 = vsub.s32 32, %v3454
          %v3456 = vshll.u32 %v3447, %v3454
          %v3457 = vshrl.u32 %v3439, %v3455
          %v3458 = vor.u32 %v3456, %v3457
          %v3459 = vsub.s32 4294967266, %v3454
          %v3460 = vadd.s32 %v3459, 127
          %v3461 = vshll.u32 %v3460, 23
          %v3462 = vor.u32 4788187, %v3461
          %v3463 = vand.u32 2147483647, %v3462
          %v3465 = vcvt.s32.f32 %v3458
          %v3466 = vmul.f32 %v3465, %v3463
          %v3467 = vxor.u32 %v3466, 2147483648
          %v3468 = vsel %vm3347, %v3467, %v3466
          %v3469 = vsub.s32 4, %v3445
          %v3470 = vsel %vm3347, %v3469, %v3445
          %v3471 = vsel %vm3346, %v3189, %v3468
          %v3472 = vsel %vm3346, 0, %v3470
          %v3473 = vmul.f32 %v3471, %v3471
          %v3474 = vmul.f32 %v3473, -0.001358992
          %v3475 = vadd.f32 %v3474, 0.041655596
          %v3476 = vmul.f32 %v3473, %v3475
          %v3477 = vadd.f32 %v3476, -0.4999988
          %v3478 = vmul.f32 %v3473, %v3477
          %v3479 = vadd.f32 1.0, %v3478
          %v3480 = vmul.f32 %v3471, %v3471
          %v3481 = vmul.f32 %v3480, -0.00019511016
          %v3482 = vadd.f32 %v3481, 0.008332121
          %v3483 = vmul.f32 %v3480, %v3482
          %v3484 = vadd.f32 %v3483, -0.16666654
          %v3485 = vmul.f32 %v3480, %v3484
          %v3486 = vadd.f32 %v3485, 1.0
          %v3487 = vmul.f32 %v3486, %v3471
          %vm3488 = vweird.f32 %v3189
          %v3489 = vadd.s32 %v3472, 3
          %v3490 = vand.u32 %v3489, 3
          %vm3491 = vcmp.lt.s32.totalorder %v3490, 2
          %vm3492 = vcmp.eq.s32.totalorder %v3490, 0
          %v3493 = vxor.u32 %v3487, 2147483648
          %v3494 = vsel %vm3492, %v3479, %v3493
          %vm3495 = vcmp.eq.s32.totalorder %v3490, 2
          %v3496 = vxor.u32 %v3479, 2147483648
          %v3497 = vsel %vm3495, %v3496, %v3487
          %v3498 = vsel %vm3491, %v3494, %v3497
          %v3499 = vsel %vm3488, nan, %v3498
          %v3500 = vmul.f32 %v3344, %v3344
          %v3501 = vmul.f32 %v3499, %v3499
          %v3502 = vmul.f32 %v423, %v3500
          %v3503 = vmul.f32 %v438, %v3501
          %v3504 = vadd.f32 %v3186, %v3502
          %v3505 = vadd.f32 %v3187, %v3503
          %v3506 = vld [vmem:[%s351] sm:$0xff]
          %v3507 = vld [vmem:[%s351 + $0x10] sm:$0xff]
          %v3508 = vmul.f32 %v3504, 0.009389464
          %v3509 = vmul.f32 %v3505, 0.009389464
          %v3510 = vsub.f32 %v3506, %v3508
          %v3511 = vsub.f32 %v3507, %v3509
          %3512 = vst.msk [vmem:[%s351] sm:$0xff] %vm493, %v3510
          %3513 = vst.msk [vmem:[%s351 + $0x10] sm:$0xff] %vm493, %v3511
          %v3514 = vld [vmem:[%s351] sm:$0xff]
          %v3515 = vld [vmem:[%s351 + $0x10] sm:$0xff]
          %v3516 = vmul.f32 %v3504, -0.057657376
          %v3517 = vmul.f32 %v3505, -0.057657376
          %3520 = vrot.lane.b32.xlu0 %v3516, 1
          %v3521 = vpop.permute.xlu0 %3520
          %3522 = vrot.lane.b32.xlu0 %v3517, 1
          %v3523 = vpop.permute.xlu0 %3522
          %v3526 = vsub.f32 %v3514, %v3521
          %v3527 = vsub.f32 %v3515, %v3523
          %vm3528 = vcmask 15368
          %3529 = vst.msk [vmem:[%s351] sm:$0xff] %vm3528, %v3526
          %3530 = vst.msk [vmem:[%s351 + $0x10] sm:$0xff] %vm3528, %v3527
          %v3531 = vld [vmem:[%s351] sm:$0xff]
          %v3532 = vld [vmem:[%s351 + $0x10] sm:$0xff]
          %v3533 = vmul.f32 %v3504, 0.4432098
          %v3534 = vmul.f32 %v3505, 0.4432098
          %3537 = vrot.lane.b32.xlu0 %v3533, 2
          %v3538 = vpop.permute.xlu0 %3537
          %3539 = vrot.lane.b32.xlu0 %v3534, 2
          %v3540 = vpop.permute.xlu0 %3539
          %v3543 = vsub.f32 %v3531, %v3538
          %v3544 = vsub.f32 %v3532, %v3540
          %vm3545 = vcmask 23568
          %3546 = vst.msk [vmem:[%s351] sm:$0xff] %vm3545, %v3543
          %3547 = vst.msk [vmem:[%s351 + $0x10] sm:$0xff] %vm3545, %v3544
          %v3548 = vld [vmem:[%s351] sm:$0xff]
          %v3549 = vld [vmem:[%s351 + $0x10] sm:$0xff]
          %v3550 = vmul.f32 %v3504, 0.12857261
          %v3551 = vmul.f32 %v3505, 0.12857261
          %3554 = vrot.lane.b32.xlu0 %v3550, 3
          %v3555 = vpop.permute.xlu0 %3554
          %3556 = vrot.lane.b32.xlu0 %v3551, 3
          %v3557 = vpop.permute.xlu0 %3556
          %v3560 = vsub.f32 %v3548, %v3555
          %v3561 = vsub.f32 %v3549, %v3557
          %vm3562 = vcmask 31768
          %3563 = vst.msk [vmem:[%s351] sm:$0xff] %vm3562, %v3560
          %3564 = vst.msk [vmem:[%s351 + $0x10] sm:$0xff] %vm3562, %v3561
          %v3565 = vld [vmem:[%s351] sm:$0xff]
          %v3566 = vld [vmem:[%s351 + $0x10] sm:$0xff]
          %v3567 = vmul.f32 %v3504, -0.025543464
          %v3568 = vmul.f32 %v3505, -0.025543464
          %3571 = vrot.lane.b32.xlu0 %v3567, 4
          %v3572 = vpop.permute.xlu0 %3571
          %3573 = vrot.lane.b32.xlu0 %v3568, 4
          %v3574 = vpop.permute.xlu0 %3573
          %v3577 = vsub.f32 %v3565, %v3572
          %v3578 = vsub.f32 %v3566, %v3574
          %vm3579 = vcmask 39968
          %3580 = vst.msk [vmem:[%s351] sm:$0xff] %vm3579, %v3577
          %3581 = vst.msk [vmem:[%s351 + $0x10] sm:$0xff] %vm3579, %v3578
          %v3582 = vld [vmem:[%s351] sm:$0xff]
          %v3583 = vld [vmem:[%s351 + $0x10] sm:$0xff]
          %v3584 = vmul.f32 %v3504, 0.0020289666
          %v3585 = vmul.f32 %v3505, 0.0020289666
          %3588 = vrot.lane.b32.xlu0 %v3584, 5
          %v3589 = vpop.permute.xlu0 %3588
          %3590 = vrot.lane.b32.xlu0 %v3585, 5
          %v3591 = vpop.permute.xlu0 %3590
          %v3594 = vsub.f32 %v3582, %v3589
          %v3595 = vsub.f32 %v3583, %v3591
          %vm3596 = vcmask 48168
          %3597 = vst.msk [vmem:[%s351] sm:$0xff] %vm3596, %v3594
          %3598 = vst.msk [vmem:[%s351 + $0x10] sm:$0xff] %vm3596, %v3595
        $region56: #{activation1d.1} parent=35 // pred_fallthru
          _
        %s3599 = sand.u32 %s175, 1
        %s3600 = scalar_lea.sflag [#allocation5], %s3599
        %s3601 = sand.u32 %s175, 1
        %s3602 = smul.addr %s3601, 32
        %s3603 = scalar_lea.vmem [#allocation8], %s3602
        // Predicated region
        $region57: #{activation1d.1} parent=35 // pred_check
          %p3604 = pneg %p185
        $region58: #{activation1d.1} parent=35 // pred_check_branch
          %3606 = sbr.rel (%p3604) target = $region60
        $region59: #{activation1d.1} parent=35 // pred_region
          %s3607 = smul.u32 2, %s30
          %s3608 = smul.u32 2, %s31
          %s3609 = ssub.s32 3, %s3608
          %p3610 = scmp.lt.s32.totalorder %s3609, 2
          %s3611 = scalar_select %p3610, %s3609, 2
          %s3612 = smul.u32 16, %s3611
          %s3613 = ssub.s32 32, %s3612
          %s3614 = sshll.u32 %s3613, 4
          %3615 = vsyncadd %s3600, %s3614
          %p3616 = scmp.ne.s32.totalorder 0, %s3612
          %s3617 = smul.addr %s3607, 3
          %s3618 = sadd.s32 %s3608, %s3617
          %s3619 = smul.addr %s29, 6
          %s3620 = sadd.s32 %s3618, %s3619
          %s3621 = smul.addr %s3620, 8
          %s3622 = scalar_lea.hbm %s4, %s3621
          %s3623 = smul.u32 %s3611, 8
          %s3624 = smul.u32 %s3623, 2
          %s3625 = sshll.u32 %s3603, 4
          %s3626 = int_to_ptr.vmem [resolvable:$true] %s3625
          %s3627 = sshll.u32 %s3622, 4
          %s3628 = int_to_ptr.hbm [resolvable:$true] %s3627
          %s3629 = sshll.u32 %s3624, 4
          %3633 = dma.vmem_to_hbm [thread:$0]  (%p3616), %s3626, %s3629, %s3628, %s3600, 256, 384, %s3623
        $region60: #{activation1d.1} parent=35 // pred_fallthru
          _
      $region36: #{activation1d.1} parent=5 // pred_fallthru
        _
      %p3634 = scmp.le.s32.totalorder 2, %s19
      // Predicated region
      $region61: #{activation1d.1} parent=5 // pred_check
        %p3635 = pneg %p3634
      $region62: #{activation1d.1} parent=5 // pred_check_branch
        %3637 = sbr.rel (%p3635) target = $region64
      $region63: #{activation1d.1} parent=5 // pred_region
        %s3638 = ssub.s32 %s19, 2
        // Predicated region
        $region65: #{activation1d.1} parent=63 // pred_check
          %p3639 = pneg %p191
        $region66: #{activation1d.1} parent=63 // pred_check_branch
          %3641 = sbr.rel (%p3639) target = $region68
        $region67: #{activation1d.1} parent=63 // pred_region
          %s3642 = sand.u32 %s176, 1
          %s3643 = scalar_lea.sflag [#allocation5], %s3642
          %s3644 = sand.u32 %s176, 1
          %s3645 = smul.addr %s3644, 32
          %s3646 = scalar_lea.vmem [#allocation8], %s3645
          %3648 = dma.done %s3643, 512
        $region68: #{activation1d.1} parent=63 // pred_fallthru
          _
      $region64: #{activation1d.1} parent=5 // pred_fallthru
        _
    $region6: #{activation1d.1} parent=1 // loop_footer
      %s23 = sadd.s32 1, %s19
    $region7: #{activation1d.1} parent=1 // loop_footer_branch
      %18 = sbr.rel target = $region3
    $region8: #{activation1d.1} parent=1 // loop_exit
      _
    %3649 = vsyncpa [#allocation4], 1
    %s3650 = scalar_lea.sflag [#allocation4], 1
    %3651 = vsyncpa %s3650, 1
    %3652 = vsyncpa [#allocation7], 1
    %s3653 = scalar_lea.sflag [#allocation7], 1
    %3654 = vsyncpa %s3653, 1
    %3655 = vsyncpa [#allocation5], 1
    %s3656 = scalar_lea.sflag [#allocation5], 1
    %3657 = vsyncpa %s3656, 1

</llo_original>
